<compile_context>
chip_gen: v7x
topology: tpu7x:2x2x1
jax: 0.10.0
libtpu: 0.0.40
codegen_flags: <defaults>
</compile_context>

<pallas_src>
import jax
import jax.numpy as jnp
from jax.experimental import pallas as pl
from jax.experimental.pallas import tpu as pltpu


# ----------------------------- Pallas kernel ------------------------------ #

def pitg_kernel(enc_x_ref, enc_w_ref, enc_b_ref, enc_whh_ref,
                h0_ref, c0_ref,
                dec_x_ref, dec_w_ref, dec_b_ref, dec_whh_ref,
                wout_ref, bout_ref,
                out_ref):
    S, BT, _ = enc_x_ref.shape                 # encoder length, batch tile
    T = dec_x_ref.shape[0]                     # decoder (maxlen) length
    H = h0_ref.shape[1]                        # hidden size
    Vp = wout_ref.shape[1]                     # padded vocab (lane-dense)

    # Hoist all weights out of the loops (a handful of vregs, stay resident).
    # TODO(synk): at production sizes, drive the recurrent matmul with
    # pltpu.matmul_push_rhs / matmul_acc_lhs / matmul_pop so whh stays staged in
    # the MXU across the serial chain (verify in the bundle dump either way).
    enc_w = enc_w_ref[...]                     # (E, 4H)   input_fc folded in
    dec_w = dec_w_ref[...]
    enc_whh = enc_whh_ref[...]                 # (H, 4H)
    dec_whh = dec_whh_ref[...]
    wout = wout_ref[...]                       # (H, Vp)
    # Broadcast biases once (JAX does not CSE broadcast_in_dim inside loops).
    enc_b = jnp.broadcast_to(enc_b_ref[...], (BT, 4 * H))
    dec_b = jnp.broadcast_to(dec_b_ref[...], (BT, 4 * H))
    bout = jnp.broadcast_to(bout_ref[...], (BT, Vp))

    def lstm_step(x_t, w_in, b, whh, h, c):
        # Per-step gate pre-activation: the x_t matmul has no dependence on the
        # previous step, so it overlaps with step t-1's pointwise chain.
        gates = (jnp.dot(x_t, w_in, preferred_element_type=jnp.float32)
                 + jnp.dot(h, whh, preferred_element_type=jnp.float32)
                 + b)
        # One sigmoid + one tanh over the full gates vreg, then slice
        # (PyTorch gate ordering: i, f, g, o).
        sg = jax.nn.sigmoid(gates)
        tg = jnp.tanh(gates)
        i = sg[:, 0 * H:1 * H]
        f = sg[:, 1 * H:2 * H]
        o = sg[:, 3 * H:4 * H]
        g = tg[:, 2 * H:3 * H]
        c_new = f * c + i * g
        h_new = o * jnp.tanh(c_new)
        return h_new, c_new

    h = h0_ref[...].astype(jnp.float32)
    c = c0_ref[...].astype(jnp.float32)

    # TODO(synk): if S/T grow beyond the toy 8, switch these Python unrolls to
    # lax.fori_loop(..., unroll=2..4) to bound live ranges.
    for t in range(S):                                       # encoder recurrence
        h, c = lstm_step(enc_x_ref[t], enc_w, enc_b, enc_whh, h, c)

    for t in range(T):                                       # decoder (teacher forcing)
        h, c = lstm_step(dec_x_ref[t], dec_w, dec_b, dec_whh, h, c)
        # Per-step projection + log_softmax, lane-dense store each step.
        logits = (jnp.dot(h.astype(wout.dtype), wout,
                          preferred_element_type=jnp.float32) + bout)
        m = jnp.max(logits, axis=-1, keepdims=True)
        lse = m + jnp.log(jnp.sum(jnp.exp(logits - m), axis=-1, keepdims=True))
        out_ref[t] = (logits - lse).astype(out_ref.dtype)


def pallas_pitg(enc_x, w_enc, b_enc, enc_whh, h0, c0,
                dec_x, w_dec, b_dec, dec_whh, wout, bout, *, batch_tile=None):
    S, Bp, E = enc_x.shape
    T = dec_x.shape[0]
    H = h0.shape[1]
    Vp = wout.shape[1]

    if batch_tile is None:
        # >= 2 tiles when the padded batch allows it so v7x can shard the
        # "parallel" grid axis across its two TensorCores (neutral on v5e/v6e).
        batch_tile = Bp // 2 if Bp % 16 == 0 else Bp
    n_tiles = Bp // batch_tile

    def full_spec(arr):
        return pl.BlockSpec(arr.shape, lambda b: (0, 0))

    flops = (2 * (S + T) * Bp * E * 4 * H          # folded input matmuls
             + 2 * (S + T) * Bp * H * 4 * H        # recurrent matmuls
             + 2 * T * Bp * H * Vp)                # output projection
    transcendentals = (S + T) * Bp * 9 * H + T * Bp * (Vp + 1)
    bytes_accessed = 4 * (enc_x.size + dec_x.size + w_enc.size + w_dec.size
                          + enc_whh.size + dec_whh.size + wout.size
                          + h0.size + c0.size + b_enc.size + b_dec.size
                          + bout.size + T * Bp * Vp)

    return pl.pallas_call(
        pitg_kernel,
        out_shape=jax.ShapeDtypeStruct((T, Bp, Vp), jnp.float32),
        grid=(n_tiles,),
        in_specs=[
            pl.BlockSpec((S, batch_tile, E), lambda b: (0, b, 0)),   # enc_x
            full_spec(w_enc), full_spec(b_enc), full_spec(enc_whh),
            pl.BlockSpec((batch_tile, H), lambda b: (b, 0)),         # h0
            pl.BlockSpec((batch_tile, H), lambda b: (b, 0)),         # c0
            pl.BlockSpec((T, batch_tile, E), lambda b: (0, b, 0)),   # dec_x
            full_spec(w_dec), full_spec(b_dec), full_spec(dec_whh),
            full_spec(wout), full_spec(bout),
        ],
        out_specs=pl.BlockSpec((T, batch_tile, Vp), lambda b: (0, b, 0)),
        compiler_params=pltpu.CompilerParams(
            dimension_semantics=("parallel",),
            vmem_limit_bytes=32 * 1024 * 1024),
        cost_estimate=pl.CostEstimate(flops=flops,
                                      transcendentals=transcendentals,
                                      bytes_accessed=bytes_accessed),
    )(enc_x, w_enc, b_enc, enc_whh, h0, c0,
      dec_x, w_dec, b_dec, dec_whh, wout, bout)


# ------------------------------ parameters -------------------------------- #

def init_params(key, vocab_size, e1_vocab, e2_vocab, trans_size,
                hidden_size, embed_size, ratio=(1.0, 1.0)):
    total = ratio[0] + ratio[1]
    h1 = int(hidden_size * ratio[0] / total)
    h2 = hidden_size - h1
    ks = jax.random.split(key, 16)
    n = lambda k, s, sc=0.1: (sc * jax.random.normal(k, s)).astype(jnp.float32)
    return {
        # EntityEncoder seeds (num_layers = 1)
        "seed1_emb1": n(ks[0], (e1_vocab, h1)),
        "seed1_emb2": n(ks[1], (e1_vocab, h1)),
        "seed2_emb1": n(ks[2], (e2_vocab, h2)),
        "seed2_emb2": n(ks[3], (e2_vocab, h2)),
        # LSTMEncoder
        "enc_emb": n(ks[4], (vocab_size, embed_size)),
        "enc_wi":  n(ks[5], (embed_size, hidden_size)),
        "enc_bi":  n(ks[6], (1, hidden_size)),
        "enc_wih": n(ks[7], (hidden_size, 4 * hidden_size)),
        "enc_whh": n(ks[8], (hidden_size, 4 * hidden_size)),
        "enc_b":   n(ks[9], (1, 4 * hidden_size)),   # b_ih + b_hh folded
        # LSTMDecoder
        "dec_emb": n(ks[10], (trans_size, embed_size)),
        "dec_wi":  n(ks[11], (embed_size, hidden_size)),
        "dec_bi":  n(ks[12], (1, hidden_size)),
        "dec_wih": n(ks[13], (hidden_size, 4 * hidden_size)),
        "dec_whh": n(ks[14], (hidden_size, 4 * hidden_size)),
        "dec_b":   n(ks[15], (1, 4 * hidden_size)),
        "dec_wout": n(jax.random.fold_in(key, 100), (hidden_size, trans_size)),
        "dec_bout": n(jax.random.fold_in(key, 101), (1, trans_size)),
    }


# ------------------------------ glue wrapper ------------------------------ #

def _round_up(x, m):
    return ((x + m - 1) // m) * m


def pitg_forward_train(params, pwds, seed1, seed2, edits, start_token,
                       matmul_dtype=jnp.float32):
    """Matches PITGModel.forward_train (num_layers=1). Returns (B, maxlen, trans_size)."""
    B, S = pwds.shape
    T = edits.shape[1]
    V = params["dec_wout"].shape[1]
    Bp = _round_up(B, 8)          # full sublane tile
    Vp = _round_up(V, 128)        # full lane tile (lane-dense output store)

    # seed hidden state: (h0, c0), num_layers = 1
    h0 = jnp.concatenate([params["seed1_emb1"][seed1],
                          params["seed2_emb1"][seed2]], axis=-1)
    c0 = jnp.concatenate([params["seed1_emb2"][seed1],
                          params["seed2_emb2"][seed2]], axis=-1)

    # time-major embedding gathers (no batch-major gather + transpose pass)
    enc_x = params["enc_emb"][pwds.T]                                  # (S, B, E)
    dec_tokens = jnp.concatenate(
        [jnp.full((B, 1), start_token, dtype=edits.dtype), edits[:, :-1]], axis=1)
    dec_x = params["dec_emb"][dec_tokens.T]                            # (T, B, E)

    # pad batch to a full sublane tile; padded rows compute garbage, sliced off
    pad_b = Bp - B
    h0 = jnp.pad(h0, ((0, pad_b), (0, 0)))
    c0 = jnp.pad(c0, ((0, pad_b), (0, 0)))
    enc_x = jnp.pad(enc_x, ((0, 0), (0, pad_b), (0, 0)))
    dec_x = jnp.pad(dec_x, ((0, 0), (0, pad_b), (0, 0)))

    # fold input_fc into the LSTM input-gate weights (exact: linear -> linear;
    # num_layers=1 so nn.LSTM inter-layer dropout is inactive)
    w_enc = params["enc_wi"] @ params["enc_wih"]                       # (E, 4H)
    b_enc = params["enc_bi"] @ params["enc_wih"] + params["enc_b"]     # (1, 4H)
    w_dec = params["dec_wi"] @ params["dec_wih"]
    b_dec = params["dec_bi"] @ params["dec_wih"] + params["dec_b"]

    # pad vocab to a full lane tile; padded logits forced to -1e30 via the bias
    # so the log_softmax normalizer over real classes is unchanged
    wout = jnp.pad(params["dec_wout"], ((0, 0), (0, Vp - V)))
    bout = jnp.pad(params["dec_bout"], ((0, 0), (0, Vp - V)),
                   constant_values=-1e30)

    # optional bf16 MXU-operand path for v6e/v7x (state / biases / softmax stay f32)
    if matmul_dtype != jnp.float32:
        enc_x = enc_x.astype(matmul_dtype)
        dec_x = dec_x.astype(matmul_dtype)
        w_enc = w_enc.astype(matmul_dtype)
        w_dec = w_dec.astype(matmul_dtype)
        wout = wout.astype(matmul_dtype)

    out = pallas_pitg(enc_x, w_enc, b_enc, params["enc_whh"], h0, c0,
                      dec_x, w_dec, b_dec, params["dec_whh"],
                      wout, bout)                                      # (T, Bp, Vp)

    out = out[:, :B, :V]                                               # (T, B, V)
    return jnp.transpose(out, (1, 0, 2))                               # (B, T, V)


# --------------------------- pure-JAX reference ---------------------------- #

def _ref_lstm_step(x, h, c, wih, whh, b, hidden):
    gates = x @ wih + h @ whh + b
    i = jax.nn.sigmoid(gates[:, :hidden])
    f = jax.nn.sigmoid(gates[:, hidden:2 * hidden])
    g = jnp.tanh(gates[:, 2 * hidden:3 * hidden])
    o = jax.nn.sigmoid(gates[:, 3 * hidden:])
    c = f * c + i * g
    h = o * jnp.tanh(c)
    return h, c


def ref_forward_train(params, pwds, seed1, seed2, edits, start_token):
    B = pwds.shape[0]
    hidden = params["enc_wih"].shape[0]
    h = jnp.concatenate([params["seed1_emb1"][seed1],
                         params["seed2_emb1"][seed2]], axis=-1)
    c = jnp.concatenate([params["seed1_emb2"][seed1],
                         params["seed2_emb2"][seed2]], axis=-1)
    enc_x = params["enc_emb"][pwds]
    for t in range(enc_x.shape[1]):
        xt = enc_x[:, t] @ params["enc_wi"] + params["enc_bi"]
        h, c = _ref_lstm_step(xt, h, c, params["enc_wih"], params["enc_whh"],
                              params["enc_b"], hidden)
    dec_tokens = jnp.concatenate(
        [jnp.full((B, 1), start_token, dtype=edits.dtype), edits[:, :-1]], axis=1)
    dec_x = params["dec_emb"][dec_tokens]
    outs = []
    for t in range(dec_x.shape[1]):
        xt = dec_x[:, t] @ params["dec_wi"] + params["dec_bi"]
        h, c = _ref_lstm_step(xt, h, c, params["dec_wih"], params["dec_whh"],
                              params["dec_b"], hidden)
        logits = h @ params["dec_wout"] + params["dec_bout"]
        outs.append(jax.nn.log_softmax(logits, axis=-1))
    return jnp.stack(outs, axis=1)


# ---------------------------------- main ----------------------------------- #

if __name__ == "__main__":
    # small, forward-consistent shapes
    VOCAB, E1_VOCAB, E2_VOCAB, TRANS = 50, 12, 12, 16
    HIDDEN, EMBED = 32, 32
    BATCH, SEQ, MAXLEN = 2, 8, 8
    START_TOKEN, END_TOKEN, PAD_TOKEN = 0, 1, 2

    key = jax.random.PRNGKey(0)
    kp, k1, k2, k3, k4 = jax.random.split(key, 5)
    params = init_params(kp, VOCAB, E1_VOCAB, E2_VOCAB, TRANS, HIDDEN, EMBED)

    pwds = jax.random.randint(k1, (BATCH, SEQ), 0, VOCAB, dtype=jnp.int32)
    seed1 = jax.random.randint(k2, (BATCH,), 0, E1_VOCAB, dtype=jnp.int32)
    seed2 = jax.random.randint(k3, (BATCH,), 0, E2_VOCAB, dtype=jnp.int32)
    edits = jax.random.randint(k4, (BATCH, MAXLEN), 0, TRANS, dtype=jnp.int32)

    fwd = jax.jit(pitg_forward_train, static_argnames=("start_token",))
    out = fwd(params, pwds, seed1, seed2, edits, start_token=START_TOKEN)
    out = jax.block_until_ready(out)

    ref = ref_forward_train(params, pwds, seed1, seed2, edits, START_TOKEN)
    assert out.shape == (BATCH, MAXLEN, TRANS)
    assert jnp.allclose(out, ref, rtol=2e-3, atol=2e-3), "mismatch vs JAX reference"

    print("KERNEL_OK")
</pallas_src>

<mosaic_0001>
module attributes {stable_mosaic.version = 11 : i64} {
  func.func @pitg_kernel(%arg0: i32, %arg1: memref<8x8x32xf32, #tpu.memory_space<vmem>>, %arg2: memref<32x128xf32, #tpu.memory_space<vmem>>, %arg3: memref<1x128xf32, #tpu.memory_space<vmem>>, %arg4: memref<32x128xf32, #tpu.memory_space<vmem>>, %arg5: memref<8x32xf32, #tpu.memory_space<vmem>>, %arg6: memref<8x32xf32, #tpu.memory_space<vmem>>, %arg7: memref<8x8x32xf32, #tpu.memory_space<vmem>>, %arg8: memref<32x128xf32, #tpu.memory_space<vmem>>, %arg9: memref<1x128xf32, #tpu.memory_space<vmem>>, %arg10: memref<32x128xf32, #tpu.memory_space<vmem>>, %arg11: memref<32x128xf32, #tpu.memory_space<vmem>>, %arg12: memref<1x128xf32, #tpu.memory_space<vmem>>, %arg13: memref<8x8x128xf32, #tpu.memory_space<vmem>>) attributes {dimension_semantics = [#tpu.dimension_semantics<parallel>], iteration_bounds = array<i64: 1>, scalar_prefetch = 0 : i64, scratch_operands = 0 : i64, tpu.core_type = #tpu.core_type<tc>, window_params = [{transform_indices = @transform_0, window_bounds = array<i64: 8, 8, 32>}, {pipeline_mode = #tpu.pipeline_mode<synchronous>, transform_indices = @transform_1, window_bounds = array<i64: 32, 128>}, {pipeline_mode = #tpu.pipeline_mode<synchronous>, transform_indices = @transform_2, window_bounds = array<i64: 1, 128>}, {pipeline_mode = #tpu.pipeline_mode<synchronous>, transform_indices = @transform_3, window_bounds = array<i64: 32, 128>}, {transform_indices = @transform_4, window_bounds = array<i64: 8, 32>}, {transform_indices = @transform_5, window_bounds = array<i64: 8, 32>}, {transform_indices = @transform_6, window_bounds = array<i64: 8, 8, 32>}, {pipeline_mode = #tpu.pipeline_mode<synchronous>, transform_indices = @transform_7, window_bounds = array<i64: 32, 128>}, {pipeline_mode = #tpu.pipeline_mode<synchronous>, transform_indices = @transform_8, window_bounds = array<i64: 1, 128>}, {pipeline_mode = #tpu.pipeline_mode<synchronous>, transform_indices = @transform_9, window_bounds = array<i64: 32, 128>}, {pipeline_mode = #tpu.pipeline_mode<synchronous>, transform_indices = @transform_10, window_bounds = array<i64: 32, 128>}, {pipeline_mode = #tpu.pipeline_mode<synchronous>, transform_indices = @transform_11, window_bounds = array<i64: 1, 128>}, {transform_indices = @transform_12, window_bounds = array<i64: 8, 8, 128>}]} {
    %c0 = arith.constant 0 : index
    %c0_0 = arith.constant 0 : index
    %0 = vector.load %arg2[%c0, %c0_0] : memref<32x128xf32, #tpu.memory_space<vmem>>, vector<32x128xf32>
    %c0_1 = arith.constant 0 : index
    %c0_2 = arith.constant 0 : index
    %1 = vector.load %arg8[%c0_1, %c0_2] : memref<32x128xf32, #tpu.memory_space<vmem>>, vector<32x128xf32>
    %c0_3 = arith.constant 0 : index
    %c0_4 = arith.constant 0 : index
    %2 = vector.load %arg4[%c0_3, %c0_4] : memref<32x128xf32, #tpu.memory_space<vmem>>, vector<32x128xf32>
    %c0_5 = arith.constant 0 : index
    %c0_6 = arith.constant 0 : index
    %3 = vector.load %arg10[%c0_5, %c0_6] : memref<32x128xf32, #tpu.memory_space<vmem>>, vector<32x128xf32>
    %c0_7 = arith.constant 0 : index
    %c0_8 = arith.constant 0 : index
    %4 = vector.load %arg11[%c0_7, %c0_8] : memref<32x128xf32, #tpu.memory_space<vmem>>, vector<32x128xf32>
    %c0_9 = arith.constant 0 : index
    %c0_10 = arith.constant 0 : index
    %5 = vector.load %arg3[%c0_9, %c0_10] : memref<1x128xf32, #tpu.memory_space<vmem>>, vector<1x128xf32>
    %6 = vector.shape_cast %5 : vector<1x128xf32> to vector<1x128xf32>
    %7 = vector.broadcast %6 : vector<1x128xf32> to vector<8x128xf32>
    %c0_11 = arith.constant 0 : index
    %c0_12 = arith.constant 0 : index
    %8 = vector.load %arg9[%c0_11, %c0_12] : memref<1x128xf32, #tpu.memory_space<vmem>>, vector<1x128xf32>
    %9 = vector.shape_cast %8 : vector<1x128xf32> to vector<1x128xf32>
    %10 = vector.broadcast %9 : vector<1x128xf32> to vector<8x128xf32>
    %c0_13 = arith.constant 0 : index
    %c0_14 = arith.constant 0 : index
    %11 = vector.load %arg12[%c0_13, %c0_14] : memref<1x128xf32, #tpu.memory_space<vmem>>, vector<1x128xf32>
    %12 = vector.shape_cast %11 : vector<1x128xf32> to vector<1x128xf32>
    %13 = vector.broadcast %12 : vector<1x128xf32> to vector<8x128xf32>
    %c0_15 = arith.constant 0 : index
    %c0_16 = arith.constant 0 : index
    %14 = vector.load %arg5[%c0_15, %c0_16] : memref<8x32xf32, #tpu.memory_space<vmem>>, vector<8x32xf32>
    %c0_17 = arith.constant 0 : index
    %c0_18 = arith.constant 0 : index
    %15 = vector.load %arg6[%c0_17, %c0_18] : memref<8x32xf32, #tpu.memory_space<vmem>>, vector<8x32xf32>
    %c0_19 = arith.constant 0 : index
    %c0_20 = arith.constant 0 : index
    %c0_21 = arith.constant 0 : index
    %16 = vector.load %arg1[%c0_19, %c0_20, %c0_21] : memref<8x8x32xf32, #tpu.memory_space<vmem>>, vector<1x8x32xf32>
    %17 = vector.shape_cast %16 : vector<1x8x32xf32> to vector<8x32xf32>
    %cst = arith.constant dense<0.000000e+00> : vector<8x128xf32>
    %18 = tpu.matmul %17, %0, %cst {dimension_numbers = #tpu.dot_dimension_numbers<[1], [0], [0], [1], [0, 0, 1, 1], [], []>} : vector<8x32xf32>, vector<32x128xf32>, vector<8x128xf32> -> vector<8x128xf32>
    %cst_22 = arith.constant dense<0.000000e+00> : vector<8x128xf32>
    %19 = tpu.matmul %14, %2, %cst_22 {dimension_numbers = #tpu.dot_dimension_numbers<[1], [0], [0], [1], [0, 0, 1, 1], [], []>} : vector<8x32xf32>, vector<32x128xf32>, vector<8x128xf32> -> vector<8x128xf32>
    %20 = arith.addf %18, %19 : vector<8x128xf32>
    %21 = arith.addf %20, %7 : vector<8x128xf32>
    %22 = arith.negf %21 : vector<8x128xf32>
    %23 = math.exp %22 : vector<8x128xf32>
    %cst_23 = arith.constant 1.000000e+00 : f32
    %24 = vector.broadcast %cst_23 : f32 to vector<8x128xf32>
    %25 = arith.addf %24, %23 : vector<8x128xf32>
    %26 = arith.divf %24, %25 : vector<8x128xf32>
    %27 = math.tanh %21 : vector<8x128xf32>
    %28 = vector.extract_strided_slice %26 {offsets = [0, 0], sizes = [8, 32], strides = [1, 1]} : vector<8x128xf32> to vector<8x32xf32>
    %29 = vector.extract_strided_slice %26 {offsets = [0, 32], sizes = [8, 32], strides = [1, 1]} : vector<8x128xf32> to vector<8x32xf32>
    %30 = vector.extract_strided_slice %26 {offsets = [0, 96], sizes = [8, 32], strides = [1, 1]} : vector<8x128xf32> to vector<8x32xf32>
    %31 = vector.extract_strided_slice %27 {offsets = [0, 64], sizes = [8, 32], strides = [1, 1]} : vector<8x128xf32> to vector<8x32xf32>
    %32 = arith.mulf %29, %15 : vector<8x32xf32>
    %33 = arith.mulf %28, %31 : vector<8x32xf32>
    %34 = arith.addf %32, %33 : vector<8x32xf32>
    %35 = math.tanh %34 : vector<8x32xf32>
    %36 = arith.mulf %30, %35 : vector<8x32xf32>
    %c1 = arith.constant 1 : index
    %c0_24 = arith.constant 0 : index
    %c0_25 = arith.constant 0 : index
    %37 = vector.load %arg1[%c1, %c0_24, %c0_25] : memref<8x8x32xf32, #tpu.memory_space<vmem>>, vector<1x8x32xf32>
    %38 = vector.shape_cast %37 : vector<1x8x32xf32> to vector<8x32xf32>
    %cst_26 = arith.constant dense<0.000000e+00> : vector<8x128xf32>
    %39 = tpu.matmul %38, %0, %cst_26 {dimension_numbers = #tpu.dot_dimension_numbers<[1], [0], [0], [1], [0, 0, 1, 1], [], []>} : vector<8x32xf32>, vector<32x128xf32>, vector<8x128xf32> -> vector<8x128xf32>
    %cst_27 = arith.constant dense<0.000000e+00> : vector<8x128xf32>
    %40 = tpu.matmul %36, %2, %cst_27 {dimension_numbers = #tpu.dot_dimension_numbers<[1], [0], [0], [1], [0, 0, 1, 1], [], []>} : vector<8x32xf32>, vector<32x128xf32>, vector<8x128xf32> -> vector<8x128xf32>
    %41 = arith.addf %39, %40 : vector<8x128xf32>
    %42 = arith.addf %41, %7 : vector<8x128xf32>
    %43 = arith.negf %42 : vector<8x128xf32>
    %44 = math.exp %43 : vector<8x128xf32>
    %cst_28 = arith.constant 1.000000e+00 : f32
    %45 = vector.broadcast %cst_28 : f32 to vector<8x128xf32>
    %46 = arith.addf %45, %44 : vector<8x128xf32>
    %47 = arith.divf %45, %46 : vector<8x128xf32>
    %48 = math.tanh %42 : vector<8x128xf32>
    %49 = vector.extract_strided_slice %47 {offsets = [0, 0], sizes = [8, 32], strides = [1, 1]} : vector<8x128xf32> to vector<8x32xf32>
    %50 = vector.extract_strided_slice %47 {offsets = [0, 32], sizes = [8, 32], strides = [1, 1]} : vector<8x128xf32> to vector<8x32xf32>
    %51 = vector.extract_strided_slice %47 {offsets = [0, 96], sizes = [8, 32], strides = [1, 1]} : vector<8x128xf32> to vector<8x32xf32>
    %52 = vector.extract_strided_slice %48 {offsets = [0, 64], sizes = [8, 32], strides = [1, 1]} : vector<8x128xf32> to vector<8x32xf32>
    %53 = arith.mulf %50, %34 : vector<8x32xf32>
    %54 = arith.mulf %49, %52 : vector<8x32xf32>
    %55 = arith.addf %53, %54 : vector<8x32xf32>
    %56 = math.tanh %55 : vector<8x32xf32>
    %57 = arith.mulf %51, %56 : vector<8x32xf32>
    %c2 = arith.constant 2 : index
    %c0_29 = arith.constant 0 : index
    %c0_30 = arith.constant 0 : index
    %58 = vector.load %arg1[%c2, %c0_29, %c0_30] : memref<8x8x32xf32, #tpu.memory_space<vmem>>, vector<1x8x32xf32>
    %59 = vector.shape_cast %58 : vector<1x8x32xf32> to vector<8x32xf32>
    %cst_31 = arith.constant dense<0.000000e+00> : vector<8x128xf32>
    %60 = tpu.matmul %59, %0, %cst_31 {dimension_numbers = #tpu.dot_dimension_numbers<[1], [0], [0], [1], [0, 0, 1, 1], [], []>} : vector<8x32xf32>, vector<32x128xf32>, vector<8x128xf32> -> vector<8x128xf32>
    %cst_32 = arith.constant dense<0.000000e+00> : vector<8x128xf32>
    %61 = tpu.matmul %57, %2, %cst_32 {dimension_numbers = #tpu.dot_dimension_numbers<[1], [0], [0], [1], [0, 0, 1, 1], [], []>} : vector<8x32xf32>, vector<32x128xf32>, vector<8x128xf32> -> vector<8x128xf32>
    %62 = arith.addf %60, %61 : vector<8x128xf32>
    %63 = arith.addf %62, %7 : vector<8x128xf32>
    %64 = arith.negf %63 : vector<8x128xf32>
    %65 = math.exp %64 : vector<8x128xf32>
    %cst_33 = arith.constant 1.000000e+00 : f32
    %66 = vector.broadcast %cst_33 : f32 to vector<8x128xf32>
    %67 = arith.addf %66, %65 : vector<8x128xf32>
    %68 = arith.divf %66, %67 : vector<8x128xf32>
    %69 = math.tanh %63 : vector<8x128xf32>
    %70 = vector.extract_strided_slice %68 {offsets = [0, 0], sizes = [8, 32], strides = [1, 1]} : vector<8x128xf32> to vector<8x32xf32>
    %71 = vector.extract_strided_slice %68 {offsets = [0, 32], sizes = [8, 32], strides = [1, 1]} : vector<8x128xf32> to vector<8x32xf32>
    %72 = vector.extract_strided_slice %68 {offsets = [0, 96], sizes = [8, 32], strides = [1, 1]} : vector<8x128xf32> to vector<8x32xf32>
    %73 = vector.extract_strided_slice %69 {offsets = [0, 64], sizes = [8, 32], strides = [1, 1]} : vector<8x128xf32> to vector<8x32xf32>
    %74 = arith.mulf %71, %55 : vector<8x32xf32>
    %75 = arith.mulf %70, %73 : vector<8x32xf32>
    %76 = arith.addf %74, %75 : vector<8x32xf32>
    %77 = math.tanh %76 : vector<8x32xf32>
    %78 = arith.mulf %72, %77 : vector<8x32xf32>
    %c3 = arith.constant 3 : index
    %c0_34 = arith.constant 0 : index
    %c0_35 = arith.constant 0 : index
    %79 = vector.load %arg1[%c3, %c0_34, %c0_35] : memref<8x8x32xf32, #tpu.memory_space<vmem>>, vector<1x8x32xf32>
    %80 = vector.shape_cast %79 : vector<1x8x32xf32> to vector<8x32xf32>
    %cst_36 = arith.constant dense<0.000000e+00> : vector<8x128xf32>
    %81 = tpu.matmul %80, %0, %cst_36 {dimension_numbers = #tpu.dot_dimension_numbers<[1], [0], [0], [1], [0, 0, 1, 1], [], []>} : vector<8x32xf32>, vector<32x128xf32>, vector<8x128xf32> -> vector<8x128xf32>
    %cst_37 = arith.constant dense<0.000000e+00> : vector<8x128xf32>
    %82 = tpu.matmul %78, %2, %cst_37 {dimension_numbers = #tpu.dot_dimension_numbers<[1], [0], [0], [1], [0, 0, 1, 1], [], []>} : vector<8x32xf32>, vector<32x128xf32>, vector<8x128xf32> -> vector<8x128xf32>
    %83 = arith.addf %81, %82 : vector<8x128xf32>
    %84 = arith.addf %83, %7 : vector<8x128xf32>
    %85 = arith.negf %84 : vector<8x128xf32>
    %86 = math.exp %85 : vector<8x128xf32>
    %cst_38 = arith.constant 1.000000e+00 : f32
    %87 = vector.broadcast %cst_38 : f32 to vector<8x128xf32>
    %88 = arith.addf %87, %86 : vector<8x128xf32>
    %89 = arith.divf %87, %88 : vector<8x128xf32>
    %90 = math.tanh %84 : vector<8x128xf32>
    %91 = vector.extract_strided_slice %89 {offsets = [0, 0], sizes = [8, 32], strides = [1, 1]} : vector<8x128xf32> to vector<8x32xf32>
    %92 = vector.extract_strided_slice %89 {offsets = [0, 32], sizes = [8, 32], strides = [1, 1]} : vector<8x128xf32> to vector<8x32xf32>
    %93 = vector.extract_strided_slice %89 {offsets = [0, 96], sizes = [8, 32], strides = [1, 1]} : vector<8x128xf32> to vector<8x32xf32>
    %94 = vector.extract_strided_slice %90 {offsets = [0, 64], sizes = [8, 32], strides = [1, 1]} : vector<8x128xf32> to vector<8x32xf32>
    %95 = arith.mulf %92, %76 : vector<8x32xf32>
    %96 = arith.mulf %91, %94 : vector<8x32xf32>
    %97 = arith.addf %95, %96 : vector<8x32xf32>
    %98 = math.tanh %97 : vector<8x32xf32>
    %99 = arith.mulf %93, %98 : vector<8x32xf32>
    %c4 = arith.constant 4 : index
    %c0_39 = arith.constant 0 : index
    %c0_40 = arith.constant 0 : index
    %100 = vector.load %arg1[%c4, %c0_39, %c0_40] : memref<8x8x32xf32, #tpu.memory_space<vmem>>, vector<1x8x32xf32>
    %101 = vector.shape_cast %100 : vector<1x8x32xf32> to vector<8x32xf32>
    %cst_41 = arith.constant dense<0.000000e+00> : vector<8x128xf32>
    %102 = tpu.matmul %101, %0, %cst_41 {dimension_numbers = #tpu.dot_dimension_numbers<[1], [0], [0], [1], [0, 0, 1, 1], [], []>} : vector<8x32xf32>, vector<32x128xf32>, vector<8x128xf32> -> vector<8x128xf32>
    %cst_42 = arith.constant dense<0.000000e+00> : vector<8x128xf32>
    %103 = tpu.matmul %99, %2, %cst_42 {dimension_numbers = #tpu.dot_dimension_numbers<[1], [0], [0], [1], [0, 0, 1, 1], [], []>} : vector<8x32xf32>, vector<32x128xf32>, vector<8x128xf32> -> vector<8x128xf32>
    %104 = arith.addf %102, %103 : vector<8x128xf32>
    %105 = arith.addf %104, %7 : vector<8x128xf32>
    %106 = arith.negf %105 : vector<8x128xf32>
    %107 = math.exp %106 : vector<8x128xf32>
    %cst_43 = arith.constant 1.000000e+00 : f32
    %108 = vector.broadcast %cst_43 : f32 to vector<8x128xf32>
    %109 = arith.addf %108, %107 : vector<8x128xf32>
    %110 = arith.divf %108, %109 : vector<8x128xf32>
    %111 = math.tanh %105 : vector<8x128xf32>
    %112 = vector.extract_strided_slice %110 {offsets = [0, 0], sizes = [8, 32], strides = [1, 1]} : vector<8x128xf32> to vector<8x32xf32>
    %113 = vector.extract_strided_slice %110 {offsets = [0, 32], sizes = [8, 32], strides = [1, 1]} : vector<8x128xf32> to vector<8x32xf32>
    %114 = vector.extract_strided_slice %110 {offsets = [0, 96], sizes = [8, 32], strides = [1, 1]} : vector<8x128xf32> to vector<8x32xf32>
    %115 = vector.extract_strided_slice %111 {offsets = [0, 64], sizes = [8, 32], strides = [1, 1]} : vector<8x128xf32> to vector<8x32xf32>
    %116 = arith.mulf %113, %97 : vector<8x32xf32>
    %117 = arith.mulf %112, %115 : vector<8x32xf32>
    %118 = arith.addf %116, %117 : vector<8x32xf32>
    %119 = math.tanh %118 : vector<8x32xf32>
    %120 = arith.mulf %114, %119 : vector<8x32xf32>
    %c5 = arith.constant 5 : index
    %c0_44 = arith.constant 0 : index
    %c0_45 = arith.constant 0 : index
    %121 = vector.load %arg1[%c5, %c0_44, %c0_45] : memref<8x8x32xf32, #tpu.memory_space<vmem>>, vector<1x8x32xf32>
    %122 = vector.shape_cast %121 : vector<1x8x32xf32> to vector<8x32xf32>
    %cst_46 = arith.constant dense<0.000000e+00> : vector<8x128xf32>
    %123 = tpu.matmul %122, %0, %cst_46 {dimension_numbers = #tpu.dot_dimension_numbers<[1], [0], [0], [1], [0, 0, 1, 1], [], []>} : vector<8x32xf32>, vector<32x128xf32>, vector<8x128xf32> -> vector<8x128xf32>
    %cst_47 = arith.constant dense<0.000000e+00> : vector<8x128xf32>
    %124 = tpu.matmul %120, %2, %cst_47 {dimension_numbers = #tpu.dot_dimension_numbers<[1], [0], [0], [1], [0, 0, 1, 1], [], []>} : vector<8x32xf32>, vector<32x128xf32>, vector<8x128xf32> -> vector<8x128xf32>
    %125 = arith.addf %123, %124 : vector<8x128xf32>
    %126 = arith.addf %125, %7 : vector<8x128xf32>
    %127 = arith.negf %126 : vector<8x128xf32>
    %128 = math.exp %127 : vector<8x128xf32>
    %cst_48 = arith.constant 1.000000e+00 : f32
    %129 = vector.broadcast %cst_48 : f32 to vector<8x128xf32>
    %130 = arith.addf %129, %128 : vector<8x128xf32>
    %131 = arith.divf %129, %130 : vector<8x128xf32>
    %132 = math.tanh %126 : vector<8x128xf32>
    %133 = vector.extract_strided_slice %131 {offsets = [0, 0], sizes = [8, 32], strides = [1, 1]} : vector<8x128xf32> to vector<8x32xf32>
    %134 = vector.extract_strided_slice %131 {offsets = [0, 32], sizes = [8, 32], strides = [1, 1]} : vector<8x128xf32> to vector<8x32xf32>
    %135 = vector.extract_strided_slice %131 {offsets = [0, 96], sizes = [8, 32], strides = [1, 1]} : vector<8x128xf32> to vector<8x32xf32>
    %136 = vector.extract_strided_slice %132 {offsets = [0, 64], sizes = [8, 32], strides = [1, 1]} : vector<8x128xf32> to vector<8x32xf32>
    %137 = arith.mulf %134, %118 : vector<8x32xf32>
    %138 = arith.mulf %133, %136 : vector<8x32xf32>
    %139 = arith.addf %137, %138 : vector<8x32xf32>
    %140 = math.tanh %139 : vector<8x32xf32>
    %141 = arith.mulf %135, %140 : vector<8x32xf32>
    %c6 = arith.constant 6 : index
    %c0_49 = arith.constant 0 : index
    %c0_50 = arith.constant 0 : index
    %142 = vector.load %arg1[%c6, %c0_49, %c0_50] : memref<8x8x32xf32, #tpu.memory_space<vmem>>, vector<1x8x32xf32>
    %143 = vector.shape_cast %142 : vector<1x8x32xf32> to vector<8x32xf32>
    %cst_51 = arith.constant dense<0.000000e+00> : vector<8x128xf32>
    %144 = tpu.matmul %143, %0, %cst_51 {dimension_numbers = #tpu.dot_dimension_numbers<[1], [0], [0], [1], [0, 0, 1, 1], [], []>} : vector<8x32xf32>, vector<32x128xf32>, vector<8x128xf32> -> vector<8x128xf32>
    %cst_52 = arith.constant dense<0.000000e+00> : vector<8x128xf32>
    %145 = tpu.matmul %141, %2, %cst_52 {dimension_numbers = #tpu.dot_dimension_numbers<[1], [0], [0], [1], [0, 0, 1, 1], [], []>} : vector<8x32xf32>, vector<32x128xf32>, vector<8x128xf32> -> vector<8x128xf32>
    %146 = arith.addf %144, %145 : vector<8x128xf32>
    %147 = arith.addf %146, %7 : vector<8x128xf32>
    %148 = arith.negf %147 : vector<8x128xf32>
    %149 = math.exp %148 : vector<8x128xf32>
    %cst_53 = arith.constant 1.000000e+00 : f32
    %150 = vector.broadcast %cst_53 : f32 to vector<8x128xf32>
    %151 = arith.addf %150, %149 : vector<8x128xf32>
    %152 = arith.divf %150, %151 : vector<8x128xf32>
    %153 = math.tanh %147 : vector<8x128xf32>
    %154 = vector.extract_strided_slice %152 {offsets = [0, 0], sizes = [8, 32], strides = [1, 1]} : vector<8x128xf32> to vector<8x32xf32>
    %155 = vector.extract_strided_slice %152 {offsets = [0, 32], sizes = [8, 32], strides = [1, 1]} : vector<8x128xf32> to vector<8x32xf32>
    %156 = vector.extract_strided_slice %152 {offsets = [0, 96], sizes = [8, 32], strides = [1, 1]} : vector<8x128xf32> to vector<8x32xf32>
    %157 = vector.extract_strided_slice %153 {offsets = [0, 64], sizes = [8, 32], strides = [1, 1]} : vector<8x128xf32> to vector<8x32xf32>
    %158 = arith.mulf %155, %139 : vector<8x32xf32>
    %159 = arith.mulf %154, %157 : vector<8x32xf32>
    %160 = arith.addf %158, %159 : vector<8x32xf32>
    %161 = math.tanh %160 : vector<8x32xf32>
    %162 = arith.mulf %156, %161 : vector<8x32xf32>
    %c7 = arith.constant 7 : index
    %c0_54 = arith.constant 0 : index
    %c0_55 = arith.constant 0 : index
    %163 = vector.load %arg1[%c7, %c0_54, %c0_55] : memref<8x8x32xf32, #tpu.memory_space<vmem>>, vector<1x8x32xf32>
    %164 = vector.shape_cast %163 : vector<1x8x32xf32> to vector<8x32xf32>
    %cst_56 = arith.constant dense<0.000000e+00> : vector<8x128xf32>
    %165 = tpu.matmul %164, %0, %cst_56 {dimension_numbers = #tpu.dot_dimension_numbers<[1], [0], [0], [1], [0, 0, 1, 1], [], []>} : vector<8x32xf32>, vector<32x128xf32>, vector<8x128xf32> -> vector<8x128xf32>
    %cst_57 = arith.constant dense<0.000000e+00> : vector<8x128xf32>
    %166 = tpu.matmul %162, %2, %cst_57 {dimension_numbers = #tpu.dot_dimension_numbers<[1], [0], [0], [1], [0, 0, 1, 1], [], []>} : vector<8x32xf32>, vector<32x128xf32>, vector<8x128xf32> -> vector<8x128xf32>
    %167 = arith.addf %165, %166 : vector<8x128xf32>
    %168 = arith.addf %167, %7 : vector<8x128xf32>
    %169 = arith.negf %168 : vector<8x128xf32>
    %170 = math.exp %169 : vector<8x128xf32>
    %cst_58 = arith.constant 1.000000e+00 : f32
    %171 = vector.broadcast %cst_58 : f32 to vector<8x128xf32>
    %172 = arith.addf %171, %170 : vector<8x128xf32>
    %173 = arith.divf %171, %172 : vector<8x128xf32>
    %174 = math.tanh %168 : vector<8x128xf32>
    %175 = vector.extract_strided_slice %173 {offsets = [0, 0], sizes = [8, 32], strides = [1, 1]} : vector<8x128xf32> to vector<8x32xf32>
    %176 = vector.extract_strided_slice %173 {offsets = [0, 32], sizes = [8, 32], strides = [1, 1]} : vector<8x128xf32> to vector<8x32xf32>
    %177 = vector.extract_strided_slice %173 {offsets = [0, 96], sizes = [8, 32], strides = [1, 1]} : vector<8x128xf32> to vector<8x32xf32>
    %178 = vector.extract_strided_slice %174 {offsets = [0, 64], sizes = [8, 32], strides = [1, 1]} : vector<8x128xf32> to vector<8x32xf32>
    %179 = arith.mulf %176, %160 : vector<8x32xf32>
    %180 = arith.mulf %175, %178 : vector<8x32xf32>
    %181 = arith.addf %179, %180 : vector<8x32xf32>
    %182 = math.tanh %181 : vector<8x32xf32>
    %183 = arith.mulf %177, %182 : vector<8x32xf32>
    %c0_59 = arith.constant 0 : index
    %c0_60 = arith.constant 0 : index
    %c0_61 = arith.constant 0 : index
    %184 = vector.load %arg7[%c0_59, %c0_60, %c0_61] : memref<8x8x32xf32, #tpu.memory_space<vmem>>, vector<1x8x32xf32>
    %185 = vector.shape_cast %184 : vector<1x8x32xf32> to vector<8x32xf32>
    %cst_62 = arith.constant dense<0.000000e+00> : vector<8x128xf32>
    %186 = tpu.matmul %185, %1, %cst_62 {dimension_numbers = #tpu.dot_dimension_numbers<[1], [0], [0], [1], [0, 0, 1, 1], [], []>} : vector<8x32xf32>, vector<32x128xf32>, vector<8x128xf32> -> vector<8x128xf32>
    %cst_63 = arith.constant dense<0.000000e+00> : vector<8x128xf32>
    %187 = tpu.matmul %183, %3, %cst_63 {dimension_numbers = #tpu.dot_dimension_numbers<[1], [0], [0], [1], [0, 0, 1, 1], [], []>} : vector<8x32xf32>, vector<32x128xf32>, vector<8x128xf32> -> vector<8x128xf32>
    %188 = arith.addf %186, %187 : vector<8x128xf32>
    %189 = arith.addf %188, %10 : vector<8x128xf32>
    %190 = arith.negf %189 : vector<8x128xf32>
    %191 = math.exp %190 : vector<8x128xf32>
    %cst_64 = arith.constant 1.000000e+00 : f32
    %192 = vector.broadcast %cst_64 : f32 to vector<8x128xf32>
    %193 = arith.addf %192, %191 : vector<8x128xf32>
    %194 = arith.divf %192, %193 : vector<8x128xf32>
    %195 = math.tanh %189 : vector<8x128xf32>
    %196 = vector.extract_strided_slice %194 {offsets = [0, 0], sizes = [8, 32], strides = [1, 1]} : vector<8x128xf32> to vector<8x32xf32>
    %197 = vector.extract_strided_slice %194 {offsets = [0, 32], sizes = [8, 32], strides = [1, 1]} : vector<8x128xf32> to vector<8x32xf32>
    %198 = vector.extract_strided_slice %194 {offsets = [0, 96], sizes = [8, 32], strides = [1, 1]} : vector<8x128xf32> to vector<8x32xf32>
    %199 = vector.extract_strided_slice %195 {offsets = [0, 64], sizes = [8, 32], strides = [1, 1]} : vector<8x128xf32> to vector<8x32xf32>
    %200 = arith.mulf %197, %181 : vector<8x32xf32>
    %201 = arith.mulf %196, %199 : vector<8x32xf32>
    %202 = arith.addf %200, %201 : vector<8x32xf32>
    %203 = math.tanh %202 : vector<8x32xf32>
    %204 = arith.mulf %198, %203 : vector<8x32xf32>
    %cst_65 = arith.constant dense<0.000000e+00> : vector<8x128xf32>
    %205 = tpu.matmul %204, %4, %cst_65 {dimension_numbers = #tpu.dot_dimension_numbers<[1], [0], [0], [1], [0, 0, 1, 1], [], []>} : vector<8x32xf32>, vector<32x128xf32>, vector<8x128xf32> -> vector<8x128xf32>
    %206 = arith.addf %205, %13 : vector<8x128xf32>
    %cst_66 = arith.constant dense<0xFF800000> : vector<8xf32>
    %207 = vector.multi_reduction <maximumf>, %206, %cst_66 [1] : vector<8x128xf32> to vector<8xf32>
    %208 = vector.shape_cast %207 : vector<8xf32> to vector<8x1xf32>
    %209 = vector.broadcast %208 : vector<8x1xf32> to vector<8x128xf32>
    %210 = arith.subf %206, %209 : vector<8x128xf32>
    %211 = math.exp %210 : vector<8x128xf32>
    %cst_67 = arith.constant dense<0.000000e+00> : vector<8xf32>
    %212 = vector.multi_reduction <add>, %211, %cst_67 [1] : vector<8x128xf32> to vector<8xf32>
    %213 = vector.shape_cast %212 : vector<8xf32> to vector<8x1xf32>
    %214 = math.log %213 : vector<8x1xf32>
    %215 = arith.addf %208, %214 : vector<8x1xf32>
    %216 = vector.broadcast %215 : vector<8x1xf32> to vector<8x128xf32>
    %217 = arith.subf %206, %216 : vector<8x128xf32>
    %c0_68 = arith.constant 0 : index
    %c0_69 = arith.constant 0 : index
    %c0_70 = arith.constant 0 : index
    %218 = vector.load %arg13[%c0_68, %c0_69, %c0_70] : memref<8x8x128xf32, #tpu.memory_space<vmem>>, vector<1x8x128xf32>
    %219 = vector.shape_cast %218 : vector<1x8x128xf32> to vector<8x128xf32>
    %220 = vector.shape_cast %217 : vector<8x128xf32> to vector<1x8x128xf32>
    tpu.vector_store %arg13[%c0_68, %c0_69, %c0_70], %220 {strides = array<i32>} : memref<8x8x128xf32, #tpu.memory_space<vmem>>, vector<1x8x128xf32>,
    %c1_71 = arith.constant 1 : index
    %c0_72 = arith.constant 0 : index
    %c0_73 = arith.constant 0 : index
    %221 = vector.load %arg7[%c1_71, %c0_72, %c0_73] : memref<8x8x32xf32, #tpu.memory_space<vmem>>, vector<1x8x32xf32>
    %222 = vector.shape_cast %221 : vector<1x8x32xf32> to vector<8x32xf32>
    %cst_74 = arith.constant dense<0.000000e+00> : vector<8x128xf32>
    %223 = tpu.matmul %222, %1, %cst_74 {dimension_numbers = #tpu.dot_dimension_numbers<[1], [0], [0], [1], [0, 0, 1, 1], [], []>} : vector<8x32xf32>, vector<32x128xf32>, vector<8x128xf32> -> vector<8x128xf32>
    %cst_75 = arith.constant dense<0.000000e+00> : vector<8x128xf32>
    %224 = tpu.matmul %204, %3, %cst_75 {dimension_numbers = #tpu.dot_dimension_numbers<[1], [0], [0], [1], [0, 0, 1, 1], [], []>} : vector<8x32xf32>, vector<32x128xf32>, vector<8x128xf32> -> vector<8x128xf32>
    %225 = arith.addf %223, %224 : vector<8x128xf32>
    %226 = arith.addf %225, %10 : vector<8x128xf32>
    %227 = arith.negf %226 : vector<8x128xf32>
    %228 = math.exp %227 : vector<8x128xf32>
    %cst_76 = arith.constant 1.000000e+00 : f32
    %229 = vector.broadcast %cst_76 : f32 to vector<8x128xf32>
    %230 = arith.addf %229, %228 : vector<8x128xf32>
    %231 = arith.divf %229, %230 : vector<8x128xf32>
    %232 = math.tanh %226 : vector<8x128xf32>
    %233 = vector.extract_strided_slice %231 {offsets = [0, 0], sizes = [8, 32], strides = [1, 1]} : vector<8x128xf32> to vector<8x32xf32>
    %234 = vector.extract_strided_slice %231 {offsets = [0, 32], sizes = [8, 32], strides = [1, 1]} : vector<8x128xf32> to vector<8x32xf32>
    %235 = vector.extract_strided_slice %231 {offsets = [0, 96], sizes = [8, 32], strides = [1, 1]} : vector<8x128xf32> to vector<8x32xf32>
    %236 = vector.extract_strided_slice %232 {offsets = [0, 64], sizes = [8, 32], strides = [1, 1]} : vector<8x128xf32> to vector<8x32xf32>
    %237 = arith.mulf %234, %202 : vector<8x32xf32>
    %238 = arith.mulf %233, %236 : vector<8x32xf32>
    %239 = arith.addf %237, %238 : vector<8x32xf32>
    %240 = math.tanh %239 : vector<8x32xf32>
    %241 = arith.mulf %235, %240 : vector<8x32xf32>
    %cst_77 = arith.constant dense<0.000000e+00> : vector<8x128xf32>
    %242 = tpu.matmul %241, %4, %cst_77 {dimension_numbers = #tpu.dot_dimension_numbers<[1], [0], [0], [1], [0, 0, 1, 1], [], []>} : vector<8x32xf32>, vector<32x128xf32>, vector<8x128xf32> -> vector<8x128xf32>
    %243 = arith.addf %242, %13 : vector<8x128xf32>
    %cst_78 = arith.constant dense<0xFF800000> : vector<8xf32>
    %244 = vector.multi_reduction <maximumf>, %243, %cst_78 [1] : vector<8x128xf32> to vector<8xf32>
    %245 = vector.shape_cast %244 : vector<8xf32> to vector<8x1xf32>
    %246 = vector.broadcast %245 : vector<8x1xf32> to vector<8x128xf32>
    %247 = arith.subf %243, %246 : vector<8x128xf32>
    %248 = math.exp %247 : vector<8x128xf32>
    %cst_79 = arith.constant dense<0.000000e+00> : vector<8xf32>
    %249 = vector.multi_reduction <add>, %248, %cst_79 [1] : vector<8x128xf32> to vector<8xf32>
    %250 = vector.shape_cast %249 : vector<8xf32> to vector<8x1xf32>
    %251 = math.log %250 : vector<8x1xf32>
    %252 = arith.addf %245, %251 : vector<8x1xf32>
    %253 = vector.broadcast %252 : vector<8x1xf32> to vector<8x128xf32>
    %254 = arith.subf %243, %253 : vector<8x128xf32>
    %c1_80 = arith.constant 1 : index
    %c0_81 = arith.constant 0 : index
    %c0_82 = arith.constant 0 : index
    %255 = vector.load %arg13[%c1_80, %c0_81, %c0_82] : memref<8x8x128xf32, #tpu.memory_space<vmem>>, vector<1x8x128xf32>
    %256 = vector.shape_cast %255 : vector<1x8x128xf32> to vector<8x128xf32>
    %257 = vector.shape_cast %254 : vector<8x128xf32> to vector<1x8x128xf32>
    tpu.vector_store %arg13[%c1_80, %c0_81, %c0_82], %257 {strides = array<i32>} : memref<8x8x128xf32, #tpu.memory_space<vmem>>, vector<1x8x128xf32>,
    %c2_83 = arith.constant 2 : index
    %c0_84 = arith.constant 0 : index
    %c0_85 = arith.constant 0 : index
    %258 = vector.load %arg7[%c2_83, %c0_84, %c0_85] : memref<8x8x32xf32, #tpu.memory_space<vmem>>, vector<1x8x32xf32>
    %259 = vector.shape_cast %258 : vector<1x8x32xf32> to vector<8x32xf32>
    %cst_86 = arith.constant dense<0.000000e+00> : vector<8x128xf32>
    %260 = tpu.matmul %259, %1, %cst_86 {dimension_numbers = #tpu.dot_dimension_numbers<[1], [0], [0], [1], [0, 0, 1, 1], [], []>} : vector<8x32xf32>, vector<32x128xf32>, vector<8x128xf32> -> vector<8x128xf32>
    %cst_87 = arith.constant dense<0.000000e+00> : vector<8x128xf32>
    %261 = tpu.matmul %241, %3, %cst_87 {dimension_numbers = #tpu.dot_dimension_numbers<[1], [0], [0], [1], [0, 0, 1, 1], [], []>} : vector<8x32xf32>, vector<32x128xf32>, vector<8x128xf32> -> vector<8x128xf32>
    %262 = arith.addf %260, %261 : vector<8x128xf32>
    %263 = arith.addf %262, %10 : vector<8x128xf32>
    %264 = arith.negf %263 : vector<8x128xf32>
    %265 = math.exp %264 : vector<8x128xf32>
    %cst_88 = arith.constant 1.000000e+00 : f32
    %266 = vector.broadcast %cst_88 : f32 to vector<8x128xf32>
    %267 = arith.addf %266, %265 : vector<8x128xf32>
    %268 = arith.divf %266, %267 : vector<8x128xf32>
    %269 = math.tanh %263 : vector<8x128xf32>
    %270 = vector.extract_strided_slice %268 {offsets = [0, 0], sizes = [8, 32], strides = [1, 1]} : vector<8x128xf32> to vector<8x32xf32>
    %271 = vector.extract_strided_slice %268 {offsets = [0, 32], sizes = [8, 32], strides = [1, 1]} : vector<8x128xf32> to vector<8x32xf32>
    %272 = vector.extract_strided_slice %268 {offsets = [0, 96], sizes = [8, 32], strides = [1, 1]} : vector<8x128xf32> to vector<8x32xf32>
    %273 = vector.extract_strided_slice %269 {offsets = [0, 64], sizes = [8, 32], strides = [1, 1]} : vector<8x128xf32> to vector<8x32xf32>
    %274 = arith.mulf %271, %239 : vector<8x32xf32>
    %275 = arith.mulf %270, %273 : vector<8x32xf32>
    %276 = arith.addf %274, %275 : vector<8x32xf32>
    %277 = math.tanh %276 : vector<8x32xf32>
    %278 = arith.mulf %272, %277 : vector<8x32xf32>
    %cst_89 = arith.constant dense<0.000000e+00> : vector<8x128xf32>
    %279 = tpu.matmul %278, %4, %cst_89 {dimension_numbers = #tpu.dot_dimension_numbers<[1], [0], [0], [1], [0, 0, 1, 1], [], []>} : vector<8x32xf32>, vector<32x128xf32>, vector<8x128xf32> -> vector<8x128xf32>
    %280 = arith.addf %279, %13 : vector<8x128xf32>
    %cst_90 = arith.constant dense<0xFF800000> : vector<8xf32>
    %281 = vector.multi_reduction <maximumf>, %280, %cst_90 [1] : vector<8x128xf32> to vector<8xf32>
    %282 = vector.shape_cast %281 : vector<8xf32> to vector<8x1xf32>
    %283 = vector.broadcast %282 : vector<8x1xf32> to vector<8x128xf32>
    %284 = arith.subf %280, %283 : vector<8x128xf32>
    %285 = math.exp %284 : vector<8x128xf32>
    %cst_91 = arith.constant dense<0.000000e+00> : vector<8xf32>
    %286 = vector.multi_reduction <add>, %285, %cst_91 [1] : vector<8x128xf32> to vector<8xf32>
    %287 = vector.shape_cast %286 : vector<8xf32> to vector<8x1xf32>
    %288 = math.log %287 : vector<8x1xf32>
    %289 = arith.addf %282, %288 : vector<8x1xf32>
    %290 = vector.broadcast %289 : vector<8x1xf32> to vector<8x128xf32>
    %291 = arith.subf %280, %290 : vector<8x128xf32>
    %c2_92 = arith.constant 2 : index
    %c0_93 = arith.constant 0 : index
    %c0_94 = arith.constant 0 : index
    %292 = vector.load %arg13[%c2_92, %c0_93, %c0_94] : memref<8x8x128xf32, #tpu.memory_space<vmem>>, vector<1x8x128xf32>
    %293 = vector.shape_cast %292 : vector<1x8x128xf32> to vector<8x128xf32>
    %294 = vector.shape_cast %291 : vector<8x128xf32> to vector<1x8x128xf32>
    tpu.vector_store %arg13[%c2_92, %c0_93, %c0_94], %294 {strides = array<i32>} : memref<8x8x128xf32, #tpu.memory_space<vmem>>, vector<1x8x128xf32>,
    %c3_95 = arith.constant 3 : index
    %c0_96 = arith.constant 0 : index
    %c0_97 = arith.constant 0 : index
    %295 = vector.load %arg7[%c3_95, %c0_96, %c0_97] : memref<8x8x32xf32, #tpu.memory_space<vmem>>, vector<1x8x32xf32>
    %296 = vector.shape_cast %295 : vector<1x8x32xf32> to vector<8x32xf32>
    %cst_98 = arith.constant dense<0.000000e+00> : vector<8x128xf32>
    %297 = tpu.matmul %296, %1, %cst_98 {dimension_numbers = #tpu.dot_dimension_numbers<[1], [0], [0], [1], [0, 0, 1, 1], [], []>} : vector<8x32xf32>, vector<32x128xf32>, vector<8x128xf32> -> vector<8x128xf32>
    %cst_99 = arith.constant dense<0.000000e+00> : vector<8x128xf32>
    %298 = tpu.matmul %278, %3, %cst_99 {dimension_numbers = #tpu.dot_dimension_numbers<[1], [0], [0], [1], [0, 0, 1, 1], [], []>} : vector<8x32xf32>, vector<32x128xf32>, vector<8x128xf32> -> vector<8x128xf32>
    %299 = arith.addf %297, %298 : vector<8x128xf32>
    %300 = arith.addf %299, %10 : vector<8x128xf32>
    %301 = arith.negf %300 : vector<8x128xf32>
    %302 = math.exp %301 : vector<8x128xf32>
    %cst_100 = arith.constant 1.000000e+00 : f32
    %303 = vector.broadcast %cst_100 : f32 to vector<8x128xf32>
    %304 = arith.addf %303, %302 : vector<8x128xf32>
    %305 = arith.divf %303, %304 : vector<8x128xf32>
    %306 = math.tanh %300 : vector<8x128xf32>
    %307 = vector.extract_strided_slice %305 {offsets = [0, 0], sizes = [8, 32], strides = [1, 1]} : vector<8x128xf32> to vector<8x32xf32>
    %308 = vector.extract_strided_slice %305 {offsets = [0, 32], sizes = [8, 32], strides = [1, 1]} : vector<8x128xf32> to vector<8x32xf32>
    %309 = vector.extract_strided_slice %305 {offsets = [0, 96], sizes = [8, 32], strides = [1, 1]} : vector<8x128xf32> to vector<8x32xf32>
    %310 = vector.extract_strided_slice %306 {offsets = [0, 64], sizes = [8, 32], strides = [1, 1]} : vector<8x128xf32> to vector<8x32xf32>
    %311 = arith.mulf %308, %276 : vector<8x32xf32>
    %312 = arith.mulf %307, %310 : vector<8x32xf32>
    %313 = arith.addf %311, %312 : vector<8x32xf32>
    %314 = math.tanh %313 : vector<8x32xf32>
    %315 = arith.mulf %309, %314 : vector<8x32xf32>
    %cst_101 = arith.constant dense<0.000000e+00> : vector<8x128xf32>
    %316 = tpu.matmul %315, %4, %cst_101 {dimension_numbers = #tpu.dot_dimension_numbers<[1], [0], [0], [1], [0, 0, 1, 1], [], []>} : vector<8x32xf32>, vector<32x128xf32>, vector<8x128xf32> -> vector<8x128xf32>
    %317 = arith.addf %316, %13 : vector<8x128xf32>
    %cst_102 = arith.constant dense<0xFF800000> : vector<8xf32>
    %318 = vector.multi_reduction <maximumf>, %317, %cst_102 [1] : vector<8x128xf32> to vector<8xf32>
    %319 = vector.shape_cast %318 : vector<8xf32> to vector<8x1xf32>
    %320 = vector.broadcast %319 : vector<8x1xf32> to vector<8x128xf32>
    %321 = arith.subf %317, %320 : vector<8x128xf32>
    %322 = math.exp %321 : vector<8x128xf32>
    %cst_103 = arith.constant dense<0.000000e+00> : vector<8xf32>
    %323 = vector.multi_reduction <add>, %322, %cst_103 [1] : vector<8x128xf32> to vector<8xf32>
    %324 = vector.shape_cast %323 : vector<8xf32> to vector<8x1xf32>
    %325 = math.log %324 : vector<8x1xf32>
    %326 = arith.addf %319, %325 : vector<8x1xf32>
    %327 = vector.broadcast %326 : vector<8x1xf32> to vector<8x128xf32>
    %328 = arith.subf %317, %327 : vector<8x128xf32>
    %c3_104 = arith.constant 3 : index
    %c0_105 = arith.constant 0 : index
    %c0_106 = arith.constant 0 : index
    %329 = vector.load %arg13[%c3_104, %c0_105, %c0_106] : memref<8x8x128xf32, #tpu.memory_space<vmem>>, vector<1x8x128xf32>
    %330 = vector.shape_cast %329 : vector<1x8x128xf32> to vector<8x128xf32>
    %331 = vector.shape_cast %328 : vector<8x128xf32> to vector<1x8x128xf32>
    tpu.vector_store %arg13[%c3_104, %c0_105, %c0_106], %331 {strides = array<i32>} : memref<8x8x128xf32, #tpu.memory_space<vmem>>, vector<1x8x128xf32>,
    %c4_107 = arith.constant 4 : index
    %c0_108 = arith.constant 0 : index
    %c0_109 = arith.constant 0 : index
    %332 = vector.load %arg7[%c4_107, %c0_108, %c0_109] : memref<8x8x32xf32, #tpu.memory_space<vmem>>, vector<1x8x32xf32>
    %333 = vector.shape_cast %332 : vector<1x8x32xf32> to vector<8x32xf32>
    %cst_110 = arith.constant dense<0.000000e+00> : vector<8x128xf32>
    %334 = tpu.matmul %333, %1, %cst_110 {dimension_numbers = #tpu.dot_dimension_numbers<[1], [0], [0], [1], [0, 0, 1, 1], [], []>} : vector<8x32xf32>, vector<32x128xf32>, vector<8x128xf32> -> vector<8x128xf32>
    %cst_111 = arith.constant dense<0.000000e+00> : vector<8x128xf32>
    %335 = tpu.matmul %315, %3, %cst_111 {dimension_numbers = #tpu.dot_dimension_numbers<[1], [0], [0], [1], [0, 0, 1, 1], [], []>} : vector<8x32xf32>, vector<32x128xf32>, vector<8x128xf32> -> vector<8x128xf32>
    %336 = arith.addf %334, %335 : vector<8x128xf32>
    %337 = arith.addf %336, %10 : vector<8x128xf32>
    %338 = arith.negf %337 : vector<8x128xf32>
    %339 = math.exp %338 : vector<8x128xf32>
    %cst_112 = arith.constant 1.000000e+00 : f32
    %340 = vector.broadcast %cst_112 : f32 to vector<8x128xf32>
    %341 = arith.addf %340, %339 : vector<8x128xf32>
    %342 = arith.divf %340, %341 : vector<8x128xf32>
    %343 = math.tanh %337 : vector<8x128xf32>
    %344 = vector.extract_strided_slice %342 {offsets = [0, 0], sizes = [8, 32], strides = [1, 1]} : vector<8x128xf32> to vector<8x32xf32>
    %345 = vector.extract_strided_slice %342 {offsets = [0, 32], sizes = [8, 32], strides = [1, 1]} : vector<8x128xf32> to vector<8x32xf32>
    %346 = vector.extract_strided_slice %342 {offsets = [0, 96], sizes = [8, 32], strides = [1, 1]} : vector<8x128xf32> to vector<8x32xf32>
    %347 = vector.extract_strided_slice %343 {offsets = [0, 64], sizes = [8, 32], strides = [1, 1]} : vector<8x128xf32> to vector<8x32xf32>
    %348 = arith.mulf %345, %313 : vector<8x32xf32>
    %349 = arith.mulf %344, %347 : vector<8x32xf32>
    %350 = arith.addf %348, %349 : vector<8x32xf32>
    %351 = math.tanh %350 : vector<8x32xf32>
    %352 = arith.mulf %346, %351 : vector<8x32xf32>
    %cst_113 = arith.constant dense<0.000000e+00> : vector<8x128xf32>
    %353 = tpu.matmul %352, %4, %cst_113 {dimension_numbers = #tpu.dot_dimension_numbers<[1], [0], [0], [1], [0, 0, 1, 1], [], []>} : vector<8x32xf32>, vector<32x128xf32>, vector<8x128xf32> -> vector<8x128xf32>
    %354 = arith.addf %353, %13 : vector<8x128xf32>
    %cst_114 = arith.constant dense<0xFF800000> : vector<8xf32>
    %355 = vector.multi_reduction <maximumf>, %354, %cst_114 [1] : vector<8x128xf32> to vector<8xf32>
    %356 = vector.shape_cast %355 : vector<8xf32> to vector<8x1xf32>
    %357 = vector.broadcast %356 : vector<8x1xf32> to vector<8x128xf32>
    %358 = arith.subf %354, %357 : vector<8x128xf32>
    %359 = math.exp %358 : vector<8x128xf32>
    %cst_115 = arith.constant dense<0.000000e+00> : vector<8xf32>
    %360 = vector.multi_reduction <add>, %359, %cst_115 [1] : vector<8x128xf32> to vector<8xf32>
    %361 = vector.shape_cast %360 : vector<8xf32> to vector<8x1xf32>
    %362 = math.log %361 : vector<8x1xf32>
    %363 = arith.addf %356, %362 : vector<8x1xf32>
    %364 = vector.broadcast %363 : vector<8x1xf32> to vector<8x128xf32>
    %365 = arith.subf %354, %364 : vector<8x128xf32>
    %c4_116 = arith.constant 4 : index
    %c0_117 = arith.constant 0 : index
    %c0_118 = arith.constant 0 : index
    %366 = vector.load %arg13[%c4_116, %c0_117, %c0_118] : memref<8x8x128xf32, #tpu.memory_space<vmem>>, vector<1x8x128xf32>
    %367 = vector.shape_cast %366 : vector<1x8x128xf32> to vector<8x128xf32>
    %368 = vector.shape_cast %365 : vector<8x128xf32> to vector<1x8x128xf32>
    tpu.vector_store %arg13[%c4_116, %c0_117, %c0_118], %368 {strides = array<i32>} : memref<8x8x128xf32, #tpu.memory_space<vmem>>, vector<1x8x128xf32>,
    %c5_119 = arith.constant 5 : index
    %c0_120 = arith.constant 0 : index
    %c0_121 = arith.constant 0 : index
    %369 = vector.load %arg7[%c5_119, %c0_120, %c0_121] : memref<8x8x32xf32, #tpu.memory_space<vmem>>, vector<1x8x32xf32>
    %370 = vector.shape_cast %369 : vector<1x8x32xf32> to vector<8x32xf32>
    %cst_122 = arith.constant dense<0.000000e+00> : vector<8x128xf32>
    %371 = tpu.matmul %370, %1, %cst_122 {dimension_numbers = #tpu.dot_dimension_numbers<[1], [0], [0], [1], [0, 0, 1, 1], [], []>} : vector<8x32xf32>, vector<32x128xf32>, vector<8x128xf32> -> vector<8x128xf32>
    %cst_123 = arith.constant dense<0.000000e+00> : vector<8x128xf32>
    %372 = tpu.matmul %352, %3, %cst_123 {dimension_numbers = #tpu.dot_dimension_numbers<[1], [0], [0], [1], [0, 0, 1, 1], [], []>} : vector<8x32xf32>, vector<32x128xf32>, vector<8x128xf32> -> vector<8x128xf32>
    %373 = arith.addf %371, %372 : vector<8x128xf32>
    %374 = arith.addf %373, %10 : vector<8x128xf32>
    %375 = arith.negf %374 : vector<8x128xf32>
    %376 = math.exp %375 : vector<8x128xf32>
    %cst_124 = arith.constant 1.000000e+00 : f32
    %377 = vector.broadcast %cst_124 : f32 to vector<8x128xf32>
    %378 = arith.addf %377, %376 : vector<8x128xf32>
    %379 = arith.divf %377, %378 : vector<8x128xf32>
    %380 = math.tanh %374 : vector<8x128xf32>
    %381 = vector.extract_strided_slice %379 {offsets = [0, 0], sizes = [8, 32], strides = [1, 1]} : vector<8x128xf32> to vector<8x32xf32>
    %382 = vector.extract_strided_slice %379 {offsets = [0, 32], sizes = [8, 32], strides = [1, 1]} : vector<8x128xf32> to vector<8x32xf32>
    %383 = vector.extract_strided_slice %379 {offsets = [0, 96], sizes = [8, 32], strides = [1, 1]} : vector<8x128xf32> to vector<8x32xf32>
    %384 = vector.extract_strided_slice %380 {offsets = [0, 64], sizes = [8, 32], strides = [1, 1]} : vector<8x128xf32> to vector<8x32xf32>
    %385 = arith.mulf %382, %350 : vector<8x32xf32>
    %386 = arith.mulf %381, %384 : vector<8x32xf32>
    %387 = arith.addf %385, %386 : vector<8x32xf32>
    %388 = math.tanh %387 : vector<8x32xf32>
    %389 = arith.mulf %383, %388 : vector<8x32xf32>
    %cst_125 = arith.constant dense<0.000000e+00> : vector<8x128xf32>
    %390 = tpu.matmul %389, %4, %cst_125 {dimension_numbers = #tpu.dot_dimension_numbers<[1], [0], [0], [1], [0, 0, 1, 1], [], []>} : vector<8x32xf32>, vector<32x128xf32>, vector<8x128xf32> -> vector<8x128xf32>
    %391 = arith.addf %390, %13 : vector<8x128xf32>
    %cst_126 = arith.constant dense<0xFF800000> : vector<8xf32>
    %392 = vector.multi_reduction <maximumf>, %391, %cst_126 [1] : vector<8x128xf32> to vector<8xf32>
    %393 = vector.shape_cast %392 : vector<8xf32> to vector<8x1xf32>
    %394 = vector.broadcast %393 : vector<8x1xf32> to vector<8x128xf32>
    %395 = arith.subf %391, %394 : vector<8x128xf32>
    %396 = math.exp %395 : vector<8x128xf32>
    %cst_127 = arith.constant dense<0.000000e+00> : vector<8xf32>
    %397 = vector.multi_reduction <add>, %396, %cst_127 [1] : vector<8x128xf32> to vector<8xf32>
    %398 = vector.shape_cast %397 : vector<8xf32> to vector<8x1xf32>
    %399 = math.log %398 : vector<8x1xf32>
    %400 = arith.addf %393, %399 : vector<8x1xf32>
    %401 = vector.broadcast %400 : vector<8x1xf32> to vector<8x128xf32>
    %402 = arith.subf %391, %401 : vector<8x128xf32>
    %c5_128 = arith.constant 5 : index
    %c0_129 = arith.constant 0 : index
    %c0_130 = arith.constant 0 : index
    %403 = vector.load %arg13[%c5_128, %c0_129, %c0_130] : memref<8x8x128xf32, #tpu.memory_space<vmem>>, vector<1x8x128xf32>
    %404 = vector.shape_cast %403 : vector<1x8x128xf32> to vector<8x128xf32>
    %405 = vector.shape_cast %402 : vector<8x128xf32> to vector<1x8x128xf32>
    tpu.vector_store %arg13[%c5_128, %c0_129, %c0_130], %405 {strides = array<i32>} : memref<8x8x128xf32, #tpu.memory_space<vmem>>, vector<1x8x128xf32>,
    %c6_131 = arith.constant 6 : index
    %c0_132 = arith.constant 0 : index
    %c0_133 = arith.constant 0 : index
    %406 = vector.load %arg7[%c6_131, %c0_132, %c0_133] : memref<8x8x32xf32, #tpu.memory_space<vmem>>, vector<1x8x32xf32>
    %407 = vector.shape_cast %406 : vector<1x8x32xf32> to vector<8x32xf32>
    %cst_134 = arith.constant dense<0.000000e+00> : vector<8x128xf32>
    %408 = tpu.matmul %407, %1, %cst_134 {dimension_numbers = #tpu.dot_dimension_numbers<[1], [0], [0], [1], [0, 0, 1, 1], [], []>} : vector<8x32xf32>, vector<32x128xf32>, vector<8x128xf32> -> vector<8x128xf32>
    %cst_135 = arith.constant dense<0.000000e+00> : vector<8x128xf32>
    %409 = tpu.matmul %389, %3, %cst_135 {dimension_numbers = #tpu.dot_dimension_numbers<[1], [0], [0], [1], [0, 0, 1, 1], [], []>} : vector<8x32xf32>, vector<32x128xf32>, vector<8x128xf32> -> vector<8x128xf32>
    %410 = arith.addf %408, %409 : vector<8x128xf32>
    %411 = arith.addf %410, %10 : vector<8x128xf32>
    %412 = arith.negf %411 : vector<8x128xf32>
    %413 = math.exp %412 : vector<8x128xf32>
    %cst_136 = arith.constant 1.000000e+00 : f32
    %414 = vector.broadcast %cst_136 : f32 to vector<8x128xf32>
    %415 = arith.addf %414, %413 : vector<8x128xf32>
    %416 = arith.divf %414, %415 : vector<8x128xf32>
    %417 = math.tanh %411 : vector<8x128xf32>
    %418 = vector.extract_strided_slice %416 {offsets = [0, 0], sizes = [8, 32], strides = [1, 1]} : vector<8x128xf32> to vector<8x32xf32>
    %419 = vector.extract_strided_slice %416 {offsets = [0, 32], sizes = [8, 32], strides = [1, 1]} : vector<8x128xf32> to vector<8x32xf32>
    %420 = vector.extract_strided_slice %416 {offsets = [0, 96], sizes = [8, 32], strides = [1, 1]} : vector<8x128xf32> to vector<8x32xf32>
    %421 = vector.extract_strided_slice %417 {offsets = [0, 64], sizes = [8, 32], strides = [1, 1]} : vector<8x128xf32> to vector<8x32xf32>
    %422 = arith.mulf %419, %387 : vector<8x32xf32>
    %423 = arith.mulf %418, %421 : vector<8x32xf32>
    %424 = arith.addf %422, %423 : vector<8x32xf32>
    %425 = math.tanh %424 : vector<8x32xf32>
    %426 = arith.mulf %420, %425 : vector<8x32xf32>
    %cst_137 = arith.constant dense<0.000000e+00> : vector<8x128xf32>
    %427 = tpu.matmul %426, %4, %cst_137 {dimension_numbers = #tpu.dot_dimension_numbers<[1], [0], [0], [1], [0, 0, 1, 1], [], []>} : vector<8x32xf32>, vector<32x128xf32>, vector<8x128xf32> -> vector<8x128xf32>
    %428 = arith.addf %427, %13 : vector<8x128xf32>
    %cst_138 = arith.constant dense<0xFF800000> : vector<8xf32>
    %429 = vector.multi_reduction <maximumf>, %428, %cst_138 [1] : vector<8x128xf32> to vector<8xf32>
    %430 = vector.shape_cast %429 : vector<8xf32> to vector<8x1xf32>
    %431 = vector.broadcast %430 : vector<8x1xf32> to vector<8x128xf32>
    %432 = arith.subf %428, %431 : vector<8x128xf32>
    %433 = math.exp %432 : vector<8x128xf32>
    %cst_139 = arith.constant dense<0.000000e+00> : vector<8xf32>
    %434 = vector.multi_reduction <add>, %433, %cst_139 [1] : vector<8x128xf32> to vector<8xf32>
    %435 = vector.shape_cast %434 : vector<8xf32> to vector<8x1xf32>
    %436 = math.log %435 : vector<8x1xf32>
    %437 = arith.addf %430, %436 : vector<8x1xf32>
    %438 = vector.broadcast %437 : vector<8x1xf32> to vector<8x128xf32>
    %439 = arith.subf %428, %438 : vector<8x128xf32>
    %c6_140 = arith.constant 6 : index
    %c0_141 = arith.constant 0 : index
    %c0_142 = arith.constant 0 : index
    %440 = vector.load %arg13[%c6_140, %c0_141, %c0_142] : memref<8x8x128xf32, #tpu.memory_space<vmem>>, vector<1x8x128xf32>
    %441 = vector.shape_cast %440 : vector<1x8x128xf32> to vector<8x128xf32>
    %442 = vector.shape_cast %439 : vector<8x128xf32> to vector<1x8x128xf32>
    tpu.vector_store %arg13[%c6_140, %c0_141, %c0_142], %442 {strides = array<i32>} : memref<8x8x128xf32, #tpu.memory_space<vmem>>, vector<1x8x128xf32>,
    %c7_143 = arith.constant 7 : index
    %c0_144 = arith.constant 0 : index
    %c0_145 = arith.constant 0 : index
    %443 = vector.load %arg7[%c7_143, %c0_144, %c0_145] : memref<8x8x32xf32, #tpu.memory_space<vmem>>, vector<1x8x32xf32>
    %444 = vector.shape_cast %443 : vector<1x8x32xf32> to vector<8x32xf32>
    %cst_146 = arith.constant dense<0.000000e+00> : vector<8x128xf32>
    %445 = tpu.matmul %444, %1, %cst_146 {dimension_numbers = #tpu.dot_dimension_numbers<[1], [0], [0], [1], [0, 0, 1, 1], [], []>} : vector<8x32xf32>, vector<32x128xf32>, vector<8x128xf32> -> vector<8x128xf32>
    %cst_147 = arith.constant dense<0.000000e+00> : vector<8x128xf32>
    %446 = tpu.matmul %426, %3, %cst_147 {dimension_numbers = #tpu.dot_dimension_numbers<[1], [0], [0], [1], [0, 0, 1, 1], [], []>} : vector<8x32xf32>, vector<32x128xf32>, vector<8x128xf32> -> vector<8x128xf32>
    %447 = arith.addf %445, %446 : vector<8x128xf32>
    %448 = arith.addf %447, %10 : vector<8x128xf32>
    %449 = arith.negf %448 : vector<8x128xf32>
    %450 = math.exp %449 : vector<8x128xf32>
    %cst_148 = arith.constant 1.000000e+00 : f32
    %451 = vector.broadcast %cst_148 : f32 to vector<8x128xf32>
    %452 = arith.addf %451, %450 : vector<8x128xf32>
    %453 = arith.divf %451, %452 : vector<8x128xf32>
    %454 = math.tanh %448 : vector<8x128xf32>
    %455 = vector.extract_strided_slice %453 {offsets = [0, 0], sizes = [8, 32], strides = [1, 1]} : vector<8x128xf32> to vector<8x32xf32>
    %456 = vector.extract_strided_slice %453 {offsets = [0, 32], sizes = [8, 32], strides = [1, 1]} : vector<8x128xf32> to vector<8x32xf32>
    %457 = vector.extract_strided_slice %453 {offsets = [0, 96], sizes = [8, 32], strides = [1, 1]} : vector<8x128xf32> to vector<8x32xf32>
    %458 = vector.extract_strided_slice %454 {offsets = [0, 64], sizes = [8, 32], strides = [1, 1]} : vector<8x128xf32> to vector<8x32xf32>
    %459 = arith.mulf %456, %424 : vector<8x32xf32>
    %460 = arith.mulf %455, %458 : vector<8x32xf32>
    %461 = arith.addf %459, %460 : vector<8x32xf32>
    %462 = math.tanh %461 : vector<8x32xf32>
    %463 = arith.mulf %457, %462 : vector<8x32xf32>
    %cst_149 = arith.constant dense<0.000000e+00> : vector<8x128xf32>
    %464 = tpu.matmul %463, %4, %cst_149 {dimension_numbers = #tpu.dot_dimension_numbers<[1], [0], [0], [1], [0, 0, 1, 1], [], []>} : vector<8x32xf32>, vector<32x128xf32>, vector<8x128xf32> -> vector<8x128xf32>
    %465 = arith.addf %464, %13 : vector<8x128xf32>
    %cst_150 = arith.constant dense<0xFF800000> : vector<8xf32>
    %466 = vector.multi_reduction <maximumf>, %465, %cst_150 [1] : vector<8x128xf32> to vector<8xf32>
    %467 = vector.shape_cast %466 : vector<8xf32> to vector<8x1xf32>
    %468 = vector.broadcast %467 : vector<8x1xf32> to vector<8x128xf32>
    %469 = arith.subf %465, %468 : vector<8x128xf32>
    %470 = math.exp %469 : vector<8x128xf32>
    %cst_151 = arith.constant dense<0.000000e+00> : vector<8xf32>
    %471 = vector.multi_reduction <add>, %470, %cst_151 [1] : vector<8x128xf32> to vector<8xf32>
    %472 = vector.shape_cast %471 : vector<8xf32> to vector<8x1xf32>
    %473 = math.log %472 : vector<8x1xf32>
    %474 = arith.addf %467, %473 : vector<8x1xf32>
    %475 = vector.broadcast %474 : vector<8x1xf32> to vector<8x128xf32>
    %476 = arith.subf %465, %475 : vector<8x128xf32>
    %c7_152 = arith.constant 7 : index
    %c0_153 = arith.constant 0 : index
    %c0_154 = arith.constant 0 : index
    %477 = vector.load %arg13[%c7_152, %c0_153, %c0_154] : memref<8x8x128xf32, #tpu.memory_space<vmem>>, vector<1x8x128xf32>
    %478 = vector.shape_cast %477 : vector<1x8x128xf32> to vector<8x128xf32>
    %479 = vector.shape_cast %476 : vector<8x128xf32> to vector<1x8x128xf32>
    tpu.vector_store %arg13[%c7_152, %c0_153, %c0_154], %479 {strides = array<i32>} : memref<8x8x128xf32, #tpu.memory_space<vmem>>, vector<1x8x128xf32>,
    return
  }
  func.func @transform_0(%arg0: i32) -> (i32, i32, i32) {
    %c0_i32 = arith.constant 0 : i32
    %c0_i32_0 = arith.constant 0 : i32
    %c0_i32_1 = arith.constant 0 : i32
    return %c0_i32, %arg0, %c0_i32_0 : i32, i32, i32
  }
  func.func @transform_1(%arg0: i32) -> (i32, i32) {
    %c0_i32 = arith.constant 0 : i32
    %c0_i32_0 = arith.constant 0 : i32
    %c0_i32_1 = arith.constant 0 : i32
    return %c0_i32, %c0_i32_0 : i32, i32
  }
  func.func @transform_2(%arg0: i32) -> (i32, i32) {
    %c0_i32 = arith.constant 0 : i32
    %c0_i32_0 = arith.constant 0 : i32
    %c0_i32_1 = arith.constant 0 : i32
    return %c0_i32, %c0_i32_0 : i32, i32
  }
  func.func @transform_3(%arg0: i32) -> (i32, i32) {
    %c0_i32 = arith.constant 0 : i32
    %c0_i32_0 = arith.constant 0 : i32
    %c0_i32_1 = arith.constant 0 : i32
    return %c0_i32, %c0_i32_0 : i32, i32
  }
  func.func @transform_4(%arg0: i32) -> (i32, i32) {
    %c0_i32 = arith.constant 0 : i32
    %c0_i32_0 = arith.constant 0 : i32
    return %arg0, %c0_i32 : i32, i32
  }
  func.func @transform_5(%arg0: i32) -> (i32, i32) {
    %c0_i32 = arith.constant 0 : i32
    %c0_i32_0 = arith.constant 0 : i32
    return %arg0, %c0_i32 : i32, i32
  }
  func.func @transform_6(%arg0: i32) -> (i32, i32, i32) {
    %c0_i32 = arith.constant 0 : i32
    %c0_i32_0 = arith.constant 0 : i32
    %c0_i32_1 = arith.constant 0 : i32
    return %c0_i32, %arg0, %c0_i32_0 : i32, i32, i32
  }
  func.func @transform_7(%arg0: i32) -> (i32, i32) {
    %c0_i32 = arith.constant 0 : i32
    %c0_i32_0 = arith.constant 0 : i32
    %c0_i32_1 = arith.constant 0 : i32
    return %c0_i32, %c0_i32_0 : i32, i32
  }
  func.func @transform_8(%arg0: i32) -> (i32, i32) {
    %c0_i32 = arith.constant 0 : i32
    %c0_i32_0 = arith.constant 0 : i32
    %c0_i32_1 = arith.constant 0 : i32
    return %c0_i32, %c0_i32_0 : i32, i32
  }
  func.func @transform_9(%arg0: i32) -> (i32, i32) {
    %c0_i32 = arith.constant 0 : i32
    %c0_i32_0 = arith.constant 0 : i32
    %c0_i32_1 = arith.constant 0 : i32
    return %c0_i32, %c0_i32_0 : i32, i32
  }
  func.func @transform_10(%arg0: i32) -> (i32, i32) {
    %c0_i32 = arith.constant 0 : i32
    %c0_i32_0 = arith.constant 0 : i32
    %c0_i32_1 = arith.constant 0 : i32
    return %c0_i32, %c0_i32_0 : i32, i32
  }
  func.func @transform_11(%arg0: i32) -> (i32, i32) {
    %c0_i32 = arith.constant 0 : i32
    %c0_i32_0 = arith.constant 0 : i32
    %c0_i32_1 = arith.constant 0 : i32
    return %c0_i32, %c0_i32_0 : i32, i32
  }
  func.func @transform_12(%arg0: i32) -> (i32, i32, i32) {
    %c0_i32 = arith.constant 0 : i32
    %c0_i32_0 = arith.constant 0 : i32
    %c0_i32_1 = arith.constant 0 : i32
    return %c0_i32, %arg0, %c0_i32_0 : i32, i32, i32
  }
}

</mosaic_0001>

<llo_original>
// kernel: pitg_forward_train.1
$region0: #{pitg_forward_train.1}
  #allocation0 [shape = 'u32[]', space=smem, size = 0x4, offset = 0x4, fixed_abs, tag = 'smem constant byte address 0x4 - core index']
  #allocation1 [shape = 'u32[144,128]{1,0:T(1,128)}', space=vmem, size = 0x12000, scoped, tag = 'internal scratch']
  %s0 = inlined_call_operand.vmem [shape: f32[8,8,32], index: 0, kind: input, shape index: {}]
  %s1 = inlined_call_operand.vmem [shape: f32[32,128], index: 1, kind: input, shape index: {}]
  %s2 = inlined_call_operand.vmem [shape: f32[1,128], index: 2, kind: input, shape index: {}]
  %s3 = inlined_call_operand.vmem [shape: f32[32,128], index: 3, kind: input, shape index: {}]
  %s4 = inlined_call_operand.vmem [shape: f32[8,32], index: 4, kind: input, shape index: {}]
  %s5 = inlined_call_operand.vmem [shape: f32[8,32], index: 5, kind: input, shape index: {}]
  %s6 = inlined_call_operand.vmem [shape: f32[8,8,32], index: 6, kind: input, shape index: {}]
  %s7 = inlined_call_operand.vmem [shape: f32[32,128], index: 7, kind: input, shape index: {}]
  %s8 = inlined_call_operand.vmem [shape: f32[1,128], index: 8, kind: input, shape index: {}]
  %s9 = inlined_call_operand.vmem [shape: f32[32,128], index: 9, kind: input, shape index: {}]
  %s10 = inlined_call_operand.vmem [shape: f32[32,128], index: 10, kind: input, shape index: {}]
  %s11 = inlined_call_operand.vmem [shape: f32[1,128], index: 11, kind: input, shape index: {}]
  %s12 = inlined_call_operand.vmem [shape: f32[8,8,128], index: 12, kind: output, shape index: {}]
  %s13 = sld [smem:[#allocation0]]
  $region58: #{pitg_forward_train.1} parent=0
    _
  %s15 = ssub.s32 1, %s13
  %s16 = scalar_select 0, %s15, %s13
  // Predicated region
  $region2: #{pitg_forward_train.1} parent=0 // pred_check
    _
  $region3: #{pitg_forward_train.1} parent=0 // pred_check_branch
    %18 = sbr.rel (0) target = $region5
  $region4: #{pitg_forward_train.1} parent=0 // pred_region
    _
  $region5: #{pitg_forward_train.1} parent=0 // pred_fallthru
    _
  // Predicated region
  $region6: #{pitg_forward_train.1} parent=0 // pred_check
    _
  $region7: #{pitg_forward_train.1} parent=0 // pred_check_branch
    %20 = sbr.rel (0) target = $region9
  $region8: #{pitg_forward_train.1} parent=0 // pred_region
    _
  $region9: #{pitg_forward_train.1} parent=0 // pred_fallthru
    _
  // Predicated region
  $region10: #{pitg_forward_train.1} parent=0 // pred_check
    _
  $region11: #{pitg_forward_train.1} parent=0 // pred_check_branch
    %22 = sbr.rel (0) target = $region13
  $region12: #{pitg_forward_train.1} parent=0 // pred_region
    _
  $region13: #{pitg_forward_train.1} parent=0 // pred_fallthru
    _
  // Predicated region
  $region14: #{pitg_forward_train.1} parent=0 // pred_check
    _
  $region15: #{pitg_forward_train.1} parent=0 // pred_check_branch
    %24 = sbr.rel (0) target = $region17
  $region16: #{pitg_forward_train.1} parent=0 // pred_region
    _
  $region17: #{pitg_forward_train.1} parent=0 // pred_fallthru
    _
  // Predicated region
  $region18: #{pitg_forward_train.1} parent=0 // pred_check
    _
  $region19: #{pitg_forward_train.1} parent=0 // pred_check_branch
    %26 = sbr.rel (0) target = $region21
  $region20: #{pitg_forward_train.1} parent=0 // pred_region
    _
  $region21: #{pitg_forward_train.1} parent=0 // pred_fallthru
    _
  // Predicated region
  $region22: #{pitg_forward_train.1} parent=0 // pred_check
    _
  $region23: #{pitg_forward_train.1} parent=0 // pred_check_branch
    %28 = sbr.rel (0) target = $region25
  $region24: #{pitg_forward_train.1} parent=0 // pred_region
    _
  $region25: #{pitg_forward_train.1} parent=0 // pred_fallthru
    _
  // Predicated region
  $region26: #{pitg_forward_train.1} parent=0 // pred_check
    _
  $region27: #{pitg_forward_train.1} parent=0 // pred_check_branch
    %30 = sbr.rel (0) target = $region29
  $region28: #{pitg_forward_train.1} parent=0 // pred_region
    _
  $region29: #{pitg_forward_train.1} parent=0 // pred_fallthru
    _
  // Predicated region
  $region30: #{pitg_forward_train.1} parent=0 // pred_check
    _
  $region31: #{pitg_forward_train.1} parent=0 // pred_check_branch
    %32 = sbr.rel (0) target = $region33
  $region32: #{pitg_forward_train.1} parent=0 // pred_region
    _
  $region33: #{pitg_forward_train.1} parent=0 // pred_fallthru
    _
  // Predicated region
  $region34: #{pitg_forward_train.1} parent=0 // pred_check
    _
  $region35: #{pitg_forward_train.1} parent=0 // pred_check_branch
    %34 = sbr.rel (0) target = $region37
  $region36: #{pitg_forward_train.1} parent=0 // pred_region
    _
  $region37: #{pitg_forward_train.1} parent=0 // pred_fallthru
    _
  // Predicated region
  $region38: #{pitg_forward_train.1} parent=0 // pred_check
    _
  $region39: #{pitg_forward_train.1} parent=0 // pred_check_branch
    %36 = sbr.rel (0) target = $region41
  $region40: #{pitg_forward_train.1} parent=0 // pred_region
    _
  $region41: #{pitg_forward_train.1} parent=0 // pred_fallthru
    _
  // Predicated region
  $region42: #{pitg_forward_train.1} parent=0 // pred_check
    _
  $region43: #{pitg_forward_train.1} parent=0 // pred_check_branch
    %38 = sbr.rel (0) target = $region45
  $region44: #{pitg_forward_train.1} parent=0 // pred_region
    _
  $region45: #{pitg_forward_train.1} parent=0 // pred_fallthru
    _
  // Predicated region
  $region46: #{pitg_forward_train.1} parent=0 // pred_check
    _
  $region47: #{pitg_forward_train.1} parent=0 // pred_check_branch
    %40 = sbr.rel (0) target = $region49
  $region48: #{pitg_forward_train.1} parent=0 // pred_region
    _
  $region49: #{pitg_forward_train.1} parent=0 // pred_fallthru
    _
  %v41 = vld [vmem:[%s1] sm:$0xff]
  %v42 = vld [vmem:[%s1 + $0x8] sm:$0xff]
  %v43 = vld [vmem:[%s1 + $0x10] sm:$0xff]
  %v44 = vld [vmem:[%s1 + $0x18] sm:$0xff]
  %v45 = vld [vmem:[%s7] sm:$0xff]
  %v46 = vld [vmem:[%s7 + $0x8] sm:$0xff]
  %v47 = vld [vmem:[%s7 + $0x10] sm:$0xff]
  %v48 = vld [vmem:[%s7 + $0x18] sm:$0xff]
  %v49 = vld [vmem:[%s3] sm:$0xff]
  %v50 = vld [vmem:[%s3 + $0x8] sm:$0xff]
  %v51 = vld [vmem:[%s3 + $0x10] sm:$0xff]
  %v52 = vld [vmem:[%s3 + $0x18] sm:$0xff]
  %v53 = vld [vmem:[%s9] sm:$0xff]
  %v54 = vld [vmem:[%s9 + $0x8] sm:$0xff]
  %v55 = vld [vmem:[%s9 + $0x10] sm:$0xff]
  %v56 = vld [vmem:[%s9 + $0x18] sm:$0xff]
  %v57 = vld [vmem:[%s10] sm:$0xff]
  %v58 = vld [vmem:[%s10 + $0x8] sm:$0xff]
  %v59 = vld [vmem:[%s10 + $0x10] sm:$0xff]
  %v60 = vld [vmem:[%s10 + $0x18] sm:$0xff]
  %v61 = vld [vmem:[%s2] sm:$0x1]
  %v63 = vlaneseq
  %v64 = vshrl.u32 %v63, 7
  %v65 = vsub.s32 0, %v64
  %v66 = vrot.slane %v61, %v65
  %v68 = vld [vmem:[%s8] sm:$0x1]
  %v70 = vlaneseq
  %v71 = vshrl.u32 %v70, 7
  %v72 = vsub.s32 0, %v71
  %v73 = vrot.slane %v68, %v72
  %v75 = vld [vmem:[%s11] sm:$0x1]
  %v77 = vlaneseq
  %v78 = vshrl.u32 %v77, 7
  %v79 = vsub.s32 0, %v78
  %v80 = vrot.slane %v75, %v79
  %v82 = vld [vmem:[%s4] sm:$0xff]
  %v83 = vld [vmem:[%s5] sm:$0xff]
  %v84 = vld [vmem:[%s0] sm:$0xff]
  %vm85 = vcmask 261120
  %v87 = vsel %vm85, %v82, 0
  %89 = vmatprep.subr.mxu0 0.0
  %90 = vmatpush1.msra.mxu0 %v49
  %91 = vmatprep.subr.mxu0 0.0
  %92 = vmatpush1.msra.mxu0 %v50
  %93 = vmatprep.subr.mxu0 0.0
  %94 = vmatpush1.msra.mxu0 %v51
  %95 = vmatprep.subr.mxu0 0.0
  %96 = vmatpush1.msra.mxu0 %v52
  %97 = vmatprep.subr.mxu0 0.0
  %98 = vmatpush1.msra.mxu0 0.0
  %99 = vmatprep.subr.mxu0 0.0
  %100 = vmatpush1.msra.mxu0 0.0
  %101 = vmatprep.subr.mxu0 0.0
  %102 = vmatpush1.msra.mxu0 0.0
  %103 = vmatprep.subr.mxu0 0.0
  %104 = vmatpush1.msra.mxu0 0.0
  %105 = vmatprep.subr.mxu0 0.0
  %106 = vmatpush1.msra.mxu0 0.0
  %107 = vmatprep.subr.mxu0 0.0
  %108 = vmatpush1.msra.mxu0 0.0
  %109 = vmatprep.subr.mxu0 0.0
  %110 = vmatpush1.msra.mxu0 0.0
  %111 = vmatprep.subr.mxu0 0.0
  %112 = vmatpush1.msra.mxu0 0.0
  %113 = vmatprep.subr.mxu0 0.0
  %114 = vmatpush1.msra.mxu0 0.0
  %115 = vmatprep.subr.mxu0 0.0
  %116 = vmatpush1.msra.mxu0 0.0
  %117 = vmatprep.subr.mxu0 0.0
  %118 = vmatpush1.msra.mxu0 0.0
  %119 = vmatprep.subr.mxu0 0.0
  %120 = vmatpush1.msra.mxu0 0.0
  %121 = vmatprep.subr.mxu0 0.0
  %122 = vmatpush1.msra.mxu0 0.0
  %123 = vmatprep.subr.mxu0 0.0
  %124 = vmatpush1.msra.mxu0 0.0
  %125 = vmatprep.subr.mxu0 0.0
  %126 = vmatpush1.msra.mxu0 0.0
  %127 = vmatprep.subr.mxu0 0.0
  %128 = vmatpush1.msra.mxu0 0.0
  %129 = vmatprep.subr.mxu0 0.0
  %130 = vmatpush1.msra.mxu0 0.0
  %131 = vmatprep.subr.mxu0 0.0
  %132 = vmatpush1.msra.mxu0 0.0
  %133 = vmatprep.subr.mxu0 0.0
  %134 = vmatpush1.msra.mxu0 0.0
  %135 = vmatprep.subr.mxu0 0.0
  %136 = vmatpush1.msra.mxu0 0.0
  %137 = vmatprep.subr.mxu0 0.0
  %138 = vmatpush1.msra.mxu0 0.0
  %139 = vmatprep.subr.mxu0 0.0
  %140 = vmatpush1.msra.mxu0 0.0
  %141 = vmatprep.subr.mxu0 0.0
  %142 = vmatpush1.msra.mxu0 0.0
  %143 = vmatprep.subr.mxu0 0.0
  %144 = vmatpush1.msra.mxu0 0.0
  %145 = vmatprep.subr.mxu0 0.0
  %146 = vmatpush1.msra.mxu0 0.0
  %147 = vmatprep.subr.mxu0 0.0
  %148 = vmatpush1.msra.mxu0 0.0
  %149 = vmatprep.subr.mxu0 0.0
  %150 = vmatpush1.msra.mxu0 0.0
  %151 = vmatprep.subr.mxu0 0.0
  %152 = vmatpush1.msra.mxu0 0.0
  %153 = vmatprep.mubr.f32.mxu0 0.0
  %154 = vmatmul.mubr.f32.gmra.mrb[0].mxu0 %v87
  %v155 = vpop.f32.mrb[0].mxu0
  %v156 = vadd.f32 0.0, %v155
  %v157 = vpop.f32.mrb[0].mxu0
  %158 = vdwg.mxu0
  %v160 = vsel %vm85, %v84, 0
  %162 = vmatprep.subr.mxu0 0.0
  %163 = vmatpush1.msra.mxu0 %v41
  %164 = vmatprep.subr.mxu0 0.0
  %165 = vmatpush1.msra.mxu0 %v42
  %166 = vmatprep.subr.mxu0 0.0
  %167 = vmatpush1.msra.mxu0 %v43
  %168 = vmatprep.subr.mxu0 0.0
  %169 = vmatpush1.msra.mxu0 %v44
  %170 = vmatprep.subr.mxu0 0.0
  %171 = vmatpush1.msra.mxu0 0.0
  %172 = vmatprep.subr.mxu0 0.0
  %173 = vmatpush1.msra.mxu0 0.0
  %174 = vmatprep.subr.mxu0 0.0
  %175 = vmatpush1.msra.mxu0 0.0
  %176 = vmatprep.subr.mxu0 0.0
  %177 = vmatpush1.msra.mxu0 0.0
  %178 = vmatprep.subr.mxu0 0.0
  %179 = vmatpush1.msra.mxu0 0.0
  %180 = vmatprep.subr.mxu0 0.0
  %181 = vmatpush1.msra.mxu0 0.0
  %182 = vmatprep.subr.mxu0 0.0
  %183 = vmatpush1.msra.mxu0 0.0
  %184 = vmatprep.subr.mxu0 0.0
  %185 = vmatpush1.msra.mxu0 0.0
  %186 = vmatprep.subr.mxu0 0.0
  %187 = vmatpush1.msra.mxu0 0.0
  %188 = vmatprep.subr.mxu0 0.0
  %189 = vmatpush1.msra.mxu0 0.0
  %190 = vmatprep.subr.mxu0 0.0
  %191 = vmatpush1.msra.mxu0 0.0
  %192 = vmatprep.subr.mxu0 0.0
  %193 = vmatpush1.msra.mxu0 0.0
  %194 = vmatprep.subr.mxu0 0.0
  %195 = vmatpush1.msra.mxu0 0.0
  %196 = vmatprep.subr.mxu0 0.0
  %197 = vmatpush1.msra.mxu0 0.0
  %198 = vmatprep.subr.mxu0 0.0
  %199 = vmatpush1.msra.mxu0 0.0
  %200 = vmatprep.subr.mxu0 0.0
  %201 = vmatpush1.msra.mxu0 0.0
  %202 = vmatprep.subr.mxu0 0.0
  %203 = vmatpush1.msra.mxu0 0.0
  %204 = vmatprep.subr.mxu0 0.0
  %205 = vmatpush1.msra.mxu0 0.0
  %206 = vmatprep.subr.mxu0 0.0
  %207 = vmatpush1.msra.mxu0 0.0
  %208 = vmatprep.subr.mxu0 0.0
  %209 = vmatpush1.msra.mxu0 0.0
  %210 = vmatprep.subr.mxu0 0.0
  %211 = vmatpush1.msra.mxu0 0.0
  %212 = vmatprep.subr.mxu0 0.0
  %213 = vmatpush1.msra.mxu0 0.0
  %214 = vmatprep.subr.mxu0 0.0
  %215 = vmatpush1.msra.mxu0 0.0
  %216 = vmatprep.subr.mxu0 0.0
  %217 = vmatpush1.msra.mxu0 0.0
  %218 = vmatprep.subr.mxu0 0.0
  %219 = vmatpush1.msra.mxu0 0.0
  %220 = vmatprep.subr.mxu0 0.0
  %221 = vmatpush1.msra.mxu0 0.0
  %222 = vmatprep.subr.mxu0 0.0
  %223 = vmatpush1.msra.mxu0 0.0
  %224 = vmatprep.subr.mxu0 0.0
  %225 = vmatpush1.msra.mxu0 0.0
  %226 = vmatprep.mubr.f32.mxu0 0.0
  %227 = vmatmul.mubr.f32.gmra.mrb[0].mxu0 %v160
  %v228 = vpop.f32.mrb[0].mxu0
  %v229 = vadd.f32 %v156, %v228
  %v230 = vpop.f32.mrb[0].mxu0
  %231 = vdwg.mxu0
  %v232 = vadd.f32 %v229, %v66
  %v233 = vxor.u32 %v232, 2147483648
  %v234 = vmul.f32 %v233, 1.442695
  %v235 = vpow.pop %v234
  %v236 = vadd.f32 %v235, 1.0
  %v237 = vrcp.pop %v236
  %v238 = vmul.f32 1.0, %v237
  %v239 = vtanh.pop %v232
  %241 = vrot.lane.b32.xlu0 %v83, 32
  %v242 = vpop.permute.xlu0 %241
  %v244 = vmul.f32 %v238, %v242
  %246 = vrot.lane.b32.xlu0 %v239, 64
  %v247 = vpop.permute.xlu0 %246
  %v249 = vmul.f32 %v238, %v247
  %251 = vrot.lane.b32.xlu0 %v249, 32
  %v252 = vpop.permute.xlu0 %251
  %v254 = vadd.f32 %v244, %v252
  %v255 = vtanh.pop %v254
  %257 = vrot.lane.b32.xlu0 %v255, 64
  %v258 = vpop.permute.xlu0 %257
  %v260 = vmul.f32 %v238, %v258
  %s261 = scalar_lea.vmem %s0, 8
  %v262 = vld [vmem:[%s261] sm:$0xff]
  %264 = vrot.lane.b32.xlu0 %v260, 32
  %v265 = vpop.permute.xlu0 %264
  %v266 = vsel %vm85, %v265, 0
  %268 = vmatprep.subr.mxu0 0.0
  %269 = vmatpush1.msra.mxu0 %v49
  %270 = vmatprep.subr.mxu0 0.0
  %271 = vmatpush1.msra.mxu0 %v50
  %272 = vmatprep.subr.mxu0 0.0
  %273 = vmatpush1.msra.mxu0 %v51
  %274 = vmatprep.subr.mxu0 0.0
  %275 = vmatpush1.msra.mxu0 %v52
  %276 = vmatprep.subr.mxu0 0.0
  %277 = vmatpush1.msra.mxu0 0.0
  %278 = vmatprep.subr.mxu0 0.0
  %279 = vmatpush1.msra.mxu0 0.0
  %280 = vmatprep.subr.mxu0 0.0
  %281 = vmatpush1.msra.mxu0 0.0
  %282 = vmatprep.subr.mxu0 0.0
  %283 = vmatpush1.msra.mxu0 0.0
  %284 = vmatprep.subr.mxu0 0.0
  %285 = vmatpush1.msra.mxu0 0.0
  %286 = vmatprep.subr.mxu0 0.0
  %287 = vmatpush1.msra.mxu0 0.0
  %288 = vmatprep.subr.mxu0 0.0
  %289 = vmatpush1.msra.mxu0 0.0
  %290 = vmatprep.subr.mxu0 0.0
  %291 = vmatpush1.msra.mxu0 0.0
  %292 = vmatprep.subr.mxu0 0.0
  %293 = vmatpush1.msra.mxu0 0.0
  %294 = vmatprep.subr.mxu0 0.0
  %295 = vmatpush1.msra.mxu0 0.0
  %296 = vmatprep.subr.mxu0 0.0
  %297 = vmatpush1.msra.mxu0 0.0
  %298 = vmatprep.subr.mxu0 0.0
  %299 = vmatpush1.msra.mxu0 0.0
  %300 = vmatprep.subr.mxu0 0.0
  %301 = vmatpush1.msra.mxu0 0.0
  %302 = vmatprep.subr.mxu0 0.0
  %303 = vmatpush1.msra.mxu0 0.0
  %304 = vmatprep.subr.mxu0 0.0
  %305 = vmatpush1.msra.mxu0 0.0
  %306 = vmatprep.subr.mxu0 0.0
  %307 = vmatpush1.msra.mxu0 0.0
  %308 = vmatprep.subr.mxu0 0.0
  %309 = vmatpush1.msra.mxu0 0.0
  %310 = vmatprep.subr.mxu0 0.0
  %311 = vmatpush1.msra.mxu0 0.0
  %312 = vmatprep.subr.mxu0 0.0
  %313 = vmatpush1.msra.mxu0 0.0
  %314 = vmatprep.subr.mxu0 0.0
  %315 = vmatpush1.msra.mxu0 0.0
  %316 = vmatprep.subr.mxu0 0.0
  %317 = vmatpush1.msra.mxu0 0.0
  %318 = vmatprep.subr.mxu0 0.0
  %319 = vmatpush1.msra.mxu0 0.0
  %320 = vmatprep.subr.mxu0 0.0
  %321 = vmatpush1.msra.mxu0 0.0
  %322 = vmatprep.subr.mxu0 0.0
  %323 = vmatpush1.msra.mxu0 0.0
  %324 = vmatprep.subr.mxu0 0.0
  %325 = vmatpush1.msra.mxu0 0.0
  %326 = vmatprep.subr.mxu0 0.0
  %327 = vmatpush1.msra.mxu0 0.0
  %328 = vmatprep.subr.mxu0 0.0
  %329 = vmatpush1.msra.mxu0 0.0
  %330 = vmatprep.subr.mxu0 0.0
  %331 = vmatpush1.msra.mxu0 0.0
  %332 = vmatprep.mubr.f32.mxu0 0.0
  %333 = vmatmul.mubr.f32.gmra.mrb[0].mxu0 %v266
  %v334 = vpop.f32.mrb[0].mxu0
  %v335 = vadd.f32 0.0, %v334
  %v336 = vpop.f32.mrb[0].mxu0
  %337 = vdwg.mxu0
  %v339 = vsel %vm85, %v262, 0
  %341 = vmatprep.subr.mxu0 0.0
  %342 = vmatpush1.msra.mxu0 %v41
  %343 = vmatprep.subr.mxu0 0.0
  %344 = vmatpush1.msra.mxu0 %v42
  %345 = vmatprep.subr.mxu0 0.0
  %346 = vmatpush1.msra.mxu0 %v43
  %347 = vmatprep.subr.mxu0 0.0
  %348 = vmatpush1.msra.mxu0 %v44
  %349 = vmatprep.subr.mxu0 0.0
  %350 = vmatpush1.msra.mxu0 0.0
  %351 = vmatprep.subr.mxu0 0.0
  %352 = vmatpush1.msra.mxu0 0.0
  %353 = vmatprep.subr.mxu0 0.0
  %354 = vmatpush1.msra.mxu0 0.0
  %355 = vmatprep.subr.mxu0 0.0
  %356 = vmatpush1.msra.mxu0 0.0
  %357 = vmatprep.subr.mxu0 0.0
  %358 = vmatpush1.msra.mxu0 0.0
  %359 = vmatprep.subr.mxu0 0.0
  %360 = vmatpush1.msra.mxu0 0.0
  %361 = vmatprep.subr.mxu0 0.0
  %362 = vmatpush1.msra.mxu0 0.0
  %363 = vmatprep.subr.mxu0 0.0
  %364 = vmatpush1.msra.mxu0 0.0
  %365 = vmatprep.subr.mxu0 0.0
  %366 = vmatpush1.msra.mxu0 0.0
  %367 = vmatprep.subr.mxu0 0.0
  %368 = vmatpush1.msra.mxu0 0.0
  %369 = vmatprep.subr.mxu0 0.0
  %370 = vmatpush1.msra.mxu0 0.0
  %371 = vmatprep.subr.mxu0 0.0
  %372 = vmatpush1.msra.mxu0 0.0
  %373 = vmatprep.subr.mxu0 0.0
  %374 = vmatpush1.msra.mxu0 0.0
  %375 = vmatprep.subr.mxu0 0.0
  %376 = vmatpush1.msra.mxu0 0.0
  %377 = vmatprep.subr.mxu0 0.0
  %378 = vmatpush1.msra.mxu0 0.0
  %379 = vmatprep.subr.mxu0 0.0
  %380 = vmatpush1.msra.mxu0 0.0
  %381 = vmatprep.subr.mxu0 0.0
  %382 = vmatpush1.msra.mxu0 0.0
  %383 = vmatprep.subr.mxu0 0.0
  %384 = vmatpush1.msra.mxu0 0.0
  %385 = vmatprep.subr.mxu0 0.0
  %386 = vmatpush1.msra.mxu0 0.0
  %387 = vmatprep.subr.mxu0 0.0
  %388 = vmatpush1.msra.mxu0 0.0
  %389 = vmatprep.subr.mxu0 0.0
  %390 = vmatpush1.msra.mxu0 0.0
  %391 = vmatprep.subr.mxu0 0.0
  %392 = vmatpush1.msra.mxu0 0.0
  %393 = vmatprep.subr.mxu0 0.0
  %394 = vmatpush1.msra.mxu0 0.0
  %395 = vmatprep.subr.mxu0 0.0
  %396 = vmatpush1.msra.mxu0 0.0
  %397 = vmatprep.subr.mxu0 0.0
  %398 = vmatpush1.msra.mxu0 0.0
  %399 = vmatprep.subr.mxu0 0.0
  %400 = vmatpush1.msra.mxu0 0.0
  %401 = vmatprep.subr.mxu0 0.0
  %402 = vmatpush1.msra.mxu0 0.0
  %403 = vmatprep.subr.mxu0 0.0
  %404 = vmatpush1.msra.mxu0 0.0
  %405 = vmatprep.mubr.f32.mxu0 0.0
  %406 = vmatmul.mubr.f32.gmra.mrb[0].mxu0 %v339
  %v407 = vpop.f32.mrb[0].mxu0
  %v408 = vadd.f32 %v335, %v407
  %v409 = vpop.f32.mrb[0].mxu0
  %410 = vdwg.mxu0
  %v411 = vadd.f32 %v408, %v66
  %v412 = vxor.u32 %v411, 2147483648
  %v413 = vmul.f32 %v412, 1.442695
  %v414 = vpow.pop %v413
  %v415 = vadd.f32 %v414, 1.0
  %v416 = vrcp.pop %v415
  %v417 = vmul.f32 1.0, %v416
  %v418 = vtanh.pop %v411
  %v419 = vmul.f32 %v417, %v254
  %421 = vrot.lane.b32.xlu0 %v418, 64
  %v422 = vpop.permute.xlu0 %421
  %v424 = vmul.f32 %v417, %v422
  %426 = vrot.lane.b32.xlu0 %v424, 32
  %v427 = vpop.permute.xlu0 %426
  %v429 = vadd.f32 %v419, %v427
  %v430 = vtanh.pop %v429
  %432 = vrot.lane.b32.xlu0 %v430, 64
  %v433 = vpop.permute.xlu0 %432
  %v435 = vmul.f32 %v417, %v433
  %s436 = scalar_lea.vmem %s0, 16
  %v437 = vld [vmem:[%s436] sm:$0xff]
  %439 = vrot.lane.b32.xlu0 %v435, 32
  %v440 = vpop.permute.xlu0 %439
  %v441 = vsel %vm85, %v440, 0
  %443 = vmatprep.subr.mxu0 0.0
  %444 = vmatpush1.msra.mxu0 %v49
  %445 = vmatprep.subr.mxu0 0.0
  %446 = vmatpush1.msra.mxu0 %v50
  %447 = vmatprep.subr.mxu0 0.0
  %448 = vmatpush1.msra.mxu0 %v51
  %449 = vmatprep.subr.mxu0 0.0
  %450 = vmatpush1.msra.mxu0 %v52
  %451 = vmatprep.subr.mxu0 0.0
  %452 = vmatpush1.msra.mxu0 0.0
  %453 = vmatprep.subr.mxu0 0.0
  %454 = vmatpush1.msra.mxu0 0.0
  %455 = vmatprep.subr.mxu0 0.0
  %456 = vmatpush1.msra.mxu0 0.0
  %457 = vmatprep.subr.mxu0 0.0
  %458 = vmatpush1.msra.mxu0 0.0
  %459 = vmatprep.subr.mxu0 0.0
  %460 = vmatpush1.msra.mxu0 0.0
  %461 = vmatprep.subr.mxu0 0.0
  %462 = vmatpush1.msra.mxu0 0.0
  %463 = vmatprep.subr.mxu0 0.0
  %464 = vmatpush1.msra.mxu0 0.0
  %465 = vmatprep.subr.mxu0 0.0
  %466 = vmatpush1.msra.mxu0 0.0
  %467 = vmatprep.subr.mxu0 0.0
  %468 = vmatpush1.msra.mxu0 0.0
  %469 = vmatprep.subr.mxu0 0.0
  %470 = vmatpush1.msra.mxu0 0.0
  %471 = vmatprep.subr.mxu0 0.0
  %472 = vmatpush1.msra.mxu0 0.0
  %473 = vmatprep.subr.mxu0 0.0
  %474 = vmatpush1.msra.mxu0 0.0
  %475 = vmatprep.subr.mxu0 0.0
  %476 = vmatpush1.msra.mxu0 0.0
  %477 = vmatprep.subr.mxu0 0.0
  %478 = vmatpush1.msra.mxu0 0.0
  %479 = vmatprep.subr.mxu0 0.0
  %480 = vmatpush1.msra.mxu0 0.0
  %481 = vmatprep.subr.mxu0 0.0
  %482 = vmatpush1.msra.mxu0 0.0
  %483 = vmatprep.subr.mxu0 0.0
  %484 = vmatpush1.msra.mxu0 0.0
  %485 = vmatprep.subr.mxu0 0.0
  %486 = vmatpush1.msra.mxu0 0.0
  %487 = vmatprep.subr.mxu0 0.0
  %488 = vmatpush1.msra.mxu0 0.0
  %489 = vmatprep.subr.mxu0 0.0
  %490 = vmatpush1.msra.mxu0 0.0
  %491 = vmatprep.subr.mxu0 0.0
  %492 = vmatpush1.msra.mxu0 0.0
  %493 = vmatprep.subr.mxu0 0.0
  %494 = vmatpush1.msra.mxu0 0.0
  %495 = vmatprep.subr.mxu0 0.0
  %496 = vmatpush1.msra.mxu0 0.0
  %497 = vmatprep.subr.mxu0 0.0
  %498 = vmatpush1.msra.mxu0 0.0
  %499 = vmatprep.subr.mxu0 0.0
  %500 = vmatpush1.msra.mxu0 0.0
  %501 = vmatprep.subr.mxu0 0.0
  %502 = vmatpush1.msra.mxu0 0.0
  %503 = vmatprep.subr.mxu0 0.0
  %504 = vmatpush1.msra.mxu0 0.0
  %505 = vmatprep.subr.mxu0 0.0
  %506 = vmatpush1.msra.mxu0 0.0
  %507 = vmatprep.mubr.f32.mxu0 0.0
  %508 = vmatmul.mubr.f32.gmra.mrb[0].mxu0 %v441
  %v509 = vpop.f32.mrb[0].mxu0
  %v510 = vadd.f32 0.0, %v509
  %v511 = vpop.f32.mrb[0].mxu0
  %512 = vdwg.mxu0
  %v514 = vsel %vm85, %v437, 0
  %516 = vmatprep.subr.mxu0 0.0
  %517 = vmatpush1.msra.mxu0 %v41
  %518 = vmatprep.subr.mxu0 0.0
  %519 = vmatpush1.msra.mxu0 %v42
  %520 = vmatprep.subr.mxu0 0.0
  %521 = vmatpush1.msra.mxu0 %v43
  %522 = vmatprep.subr.mxu0 0.0
  %523 = vmatpush1.msra.mxu0 %v44
  %524 = vmatprep.subr.mxu0 0.0
  %525 = vmatpush1.msra.mxu0 0.0
  %526 = vmatprep.subr.mxu0 0.0
  %527 = vmatpush1.msra.mxu0 0.0
  %528 = vmatprep.subr.mxu0 0.0
  %529 = vmatpush1.msra.mxu0 0.0
  %530 = vmatprep.subr.mxu0 0.0
  %531 = vmatpush1.msra.mxu0 0.0
  %532 = vmatprep.subr.mxu0 0.0
  %533 = vmatpush1.msra.mxu0 0.0
  %534 = vmatprep.subr.mxu0 0.0
  %535 = vmatpush1.msra.mxu0 0.0
  %536 = vmatprep.subr.mxu0 0.0
  %537 = vmatpush1.msra.mxu0 0.0
  %538 = vmatprep.subr.mxu0 0.0
  %539 = vmatpush1.msra.mxu0 0.0
  %540 = vmatprep.subr.mxu0 0.0
  %541 = vmatpush1.msra.mxu0 0.0
  %542 = vmatprep.subr.mxu0 0.0
  %543 = vmatpush1.msra.mxu0 0.0
  %544 = vmatprep.subr.mxu0 0.0
  %545 = vmatpush1.msra.mxu0 0.0
  %546 = vmatprep.subr.mxu0 0.0
  %547 = vmatpush1.msra.mxu0 0.0
  %548 = vmatprep.subr.mxu0 0.0
  %549 = vmatpush1.msra.mxu0 0.0
  %550 = vmatprep.subr.mxu0 0.0
  %551 = vmatpush1.msra.mxu0 0.0
  %552 = vmatprep.subr.mxu0 0.0
  %553 = vmatpush1.msra.mxu0 0.0
  %554 = vmatprep.subr.mxu0 0.0
  %555 = vmatpush1.msra.mxu0 0.0
  %556 = vmatprep.subr.mxu0 0.0
  %557 = vmatpush1.msra.mxu0 0.0
  %558 = vmatprep.subr.mxu0 0.0
  %559 = vmatpush1.msra.mxu0 0.0
  %560 = vmatprep.subr.mxu0 0.0
  %561 = vmatpush1.msra.mxu0 0.0
  %562 = vmatprep.subr.mxu0 0.0
  %563 = vmatpush1.msra.mxu0 0.0
  %564 = vmatprep.subr.mxu0 0.0
  %565 = vmatpush1.msra.mxu0 0.0
  %566 = vmatprep.subr.mxu0 0.0
  %567 = vmatpush1.msra.mxu0 0.0
  %568 = vmatprep.subr.mxu0 0.0
  %569 = vmatpush1.msra.mxu0 0.0
  %570 = vmatprep.subr.mxu0 0.0
  %571 = vmatpush1.msra.mxu0 0.0
  %572 = vmatprep.subr.mxu0 0.0
  %573 = vmatpush1.msra.mxu0 0.0
  %574 = vmatprep.subr.mxu0 0.0
  %575 = vmatpush1.msra.mxu0 0.0
  %576 = vmatprep.subr.mxu0 0.0
  %577 = vmatpush1.msra.mxu0 0.0
  %578 = vmatprep.subr.mxu0 0.0
  %579 = vmatpush1.msra.mxu0 0.0
  %580 = vmatprep.mubr.f32.mxu0 0.0
  %581 = vmatmul.mubr.f32.gmra.mrb[0].mxu0 %v514
  %v582 = vpop.f32.mrb[0].mxu0
  %v583 = vadd.f32 %v510, %v582
  %v584 = vpop.f32.mrb[0].mxu0
  %585 = vdwg.mxu0
  %v586 = vadd.f32 %v583, %v66
  %v587 = vxor.u32 %v586, 2147483648
  %v588 = vmul.f32 %v587, 1.442695
  %v589 = vpow.pop %v588
  %v590 = vadd.f32 %v589, 1.0
  %v591 = vrcp.pop %v590
  %v592 = vmul.f32 1.0, %v591
  %v593 = vtanh.pop %v586
  %v594 = vmul.f32 %v592, %v429
  %596 = vrot.lane.b32.xlu0 %v593, 64
  %v597 = vpop.permute.xlu0 %596
  %v599 = vmul.f32 %v592, %v597
  %601 = vrot.lane.b32.xlu0 %v599, 32
  %v602 = vpop.permute.xlu0 %601
  %v604 = vadd.f32 %v594, %v602
  %v605 = vtanh.pop %v604
  %607 = vrot.lane.b32.xlu0 %v605, 64
  %v608 = vpop.permute.xlu0 %607
  %v610 = vmul.f32 %v592, %v608
  %s611 = scalar_lea.vmem %s0, 24
  %v612 = vld [vmem:[%s611] sm:$0xff]
  %614 = vrot.lane.b32.xlu0 %v610, 32
  %v615 = vpop.permute.xlu0 %614
  %v616 = vsel %vm85, %v615, 0
  %618 = vmatprep.subr.mxu0 0.0
  %619 = vmatpush1.msra.mxu0 %v49
  %620 = vmatprep.subr.mxu0 0.0
  %621 = vmatpush1.msra.mxu0 %v50
  %622 = vmatprep.subr.mxu0 0.0
  %623 = vmatpush1.msra.mxu0 %v51
  %624 = vmatprep.subr.mxu0 0.0
  %625 = vmatpush1.msra.mxu0 %v52
  %626 = vmatprep.subr.mxu0 0.0
  %627 = vmatpush1.msra.mxu0 0.0
  %628 = vmatprep.subr.mxu0 0.0
  %629 = vmatpush1.msra.mxu0 0.0
  %630 = vmatprep.subr.mxu0 0.0
  %631 = vmatpush1.msra.mxu0 0.0
  %632 = vmatprep.subr.mxu0 0.0
  %633 = vmatpush1.msra.mxu0 0.0
  %634 = vmatprep.subr.mxu0 0.0
  %635 = vmatpush1.msra.mxu0 0.0
  %636 = vmatprep.subr.mxu0 0.0
  %637 = vmatpush1.msra.mxu0 0.0
  %638 = vmatprep.subr.mxu0 0.0
  %639 = vmatpush1.msra.mxu0 0.0
  %640 = vmatprep.subr.mxu0 0.0
  %641 = vmatpush1.msra.mxu0 0.0
  %642 = vmatprep.subr.mxu0 0.0
  %643 = vmatpush1.msra.mxu0 0.0
  %644 = vmatprep.subr.mxu0 0.0
  %645 = vmatpush1.msra.mxu0 0.0
  %646 = vmatprep.subr.mxu0 0.0
  %647 = vmatpush1.msra.mxu0 0.0
  %648 = vmatprep.subr.mxu0 0.0
  %649 = vmatpush1.msra.mxu0 0.0
  %650 = vmatprep.subr.mxu0 0.0
  %651 = vmatpush1.msra.mxu0 0.0
  %652 = vmatprep.subr.mxu0 0.0
  %653 = vmatpush1.msra.mxu0 0.0
  %654 = vmatprep.subr.mxu0 0.0
  %655 = vmatpush1.msra.mxu0 0.0
  %656 = vmatprep.subr.mxu0 0.0
  %657 = vmatpush1.msra.mxu0 0.0
  %658 = vmatprep.subr.mxu0 0.0
  %659 = vmatpush1.msra.mxu0 0.0
  %660 = vmatprep.subr.mxu0 0.0
  %661 = vmatpush1.msra.mxu0 0.0
  %662 = vmatprep.subr.mxu0 0.0
  %663 = vmatpush1.msra.mxu0 0.0
  %664 = vmatprep.subr.mxu0 0.0
  %665 = vmatpush1.msra.mxu0 0.0
  %666 = vmatprep.subr.mxu0 0.0
  %667 = vmatpush1.msra.mxu0 0.0
  %668 = vmatprep.subr.mxu0 0.0
  %669 = vmatpush1.msra.mxu0 0.0
  %670 = vmatprep.subr.mxu0 0.0
  %671 = vmatpush1.msra.mxu0 0.0
  %672 = vmatprep.subr.mxu0 0.0
  %673 = vmatpush1.msra.mxu0 0.0
  %674 = vmatprep.subr.mxu0 0.0
  %675 = vmatpush1.msra.mxu0 0.0
  %676 = vmatprep.subr.mxu0 0.0
  %677 = vmatpush1.msra.mxu0 0.0
  %678 = vmatprep.subr.mxu0 0.0
  %679 = vmatpush1.msra.mxu0 0.0
  %680 = vmatprep.subr.mxu0 0.0
  %681 = vmatpush1.msra.mxu0 0.0
  %682 = vmatprep.mubr.f32.mxu0 0.0
  %683 = vmatmul.mubr.f32.gmra.mrb[0].mxu0 %v616
  %v684 = vpop.f32.mrb[0].mxu0
  %v685 = vadd.f32 0.0, %v684
  %v686 = vpop.f32.mrb[0].mxu0
  %687 = vdwg.mxu0
  %v689 = vsel %vm85, %v612, 0
  %691 = vmatprep.subr.mxu0 0.0
  %692 = vmatpush1.msra.mxu0 %v41
  %693 = vmatprep.subr.mxu0 0.0
  %694 = vmatpush1.msra.mxu0 %v42
  %695 = vmatprep.subr.mxu0 0.0
  %696 = vmatpush1.msra.mxu0 %v43
  %697 = vmatprep.subr.mxu0 0.0
  %698 = vmatpush1.msra.mxu0 %v44
  %699 = vmatprep.subr.mxu0 0.0
  %700 = vmatpush1.msra.mxu0 0.0
  %701 = vmatprep.subr.mxu0 0.0
  %702 = vmatpush1.msra.mxu0 0.0
  %703 = vmatprep.subr.mxu0 0.0
  %704 = vmatpush1.msra.mxu0 0.0
  %705 = vmatprep.subr.mxu0 0.0
  %706 = vmatpush1.msra.mxu0 0.0
  %707 = vmatprep.subr.mxu0 0.0
  %708 = vmatpush1.msra.mxu0 0.0
  %709 = vmatprep.subr.mxu0 0.0
  %710 = vmatpush1.msra.mxu0 0.0
  %711 = vmatprep.subr.mxu0 0.0
  %712 = vmatpush1.msra.mxu0 0.0
  %713 = vmatprep.subr.mxu0 0.0
  %714 = vmatpush1.msra.mxu0 0.0
  %715 = vmatprep.subr.mxu0 0.0
  %716 = vmatpush1.msra.mxu0 0.0
  %717 = vmatprep.subr.mxu0 0.0
  %718 = vmatpush1.msra.mxu0 0.0
  %719 = vmatprep.subr.mxu0 0.0
  %720 = vmatpush1.msra.mxu0 0.0
  %721 = vmatprep.subr.mxu0 0.0
  %722 = vmatpush1.msra.mxu0 0.0
  %723 = vmatprep.subr.mxu0 0.0
  %724 = vmatpush1.msra.mxu0 0.0
  %725 = vmatprep.subr.mxu0 0.0
  %726 = vmatpush1.msra.mxu0 0.0
  %727 = vmatprep.subr.mxu0 0.0
  %728 = vmatpush1.msra.mxu0 0.0
  %729 = vmatprep.subr.mxu0 0.0
  %730 = vmatpush1.msra.mxu0 0.0
  %731 = vmatprep.subr.mxu0 0.0
  %732 = vmatpush1.msra.mxu0 0.0
  %733 = vmatprep.subr.mxu0 0.0
  %734 = vmatpush1.msra.mxu0 0.0
  %735 = vmatprep.subr.mxu0 0.0
  %736 = vmatpush1.msra.mxu0 0.0
  %737 = vmatprep.subr.mxu0 0.0
  %738 = vmatpush1.msra.mxu0 0.0
  %739 = vmatprep.subr.mxu0 0.0
  %740 = vmatpush1.msra.mxu0 0.0
  %741 = vmatprep.subr.mxu0 0.0
  %742 = vmatpush1.msra.mxu0 0.0
  %743 = vmatprep.subr.mxu0 0.0
  %744 = vmatpush1.msra.mxu0 0.0
  %745 = vmatprep.subr.mxu0 0.0
  %746 = vmatpush1.msra.mxu0 0.0
  %747 = vmatprep.subr.mxu0 0.0
  %748 = vmatpush1.msra.mxu0 0.0
  %749 = vmatprep.subr.mxu0 0.0
  %750 = vmatpush1.msra.mxu0 0.0
  %751 = vmatprep.subr.mxu0 0.0
  %752 = vmatpush1.msra.mxu0 0.0
  %753 = vmatprep.subr.mxu0 0.0
  %754 = vmatpush1.msra.mxu0 0.0
  %755 = vmatprep.mubr.f32.mxu0 0.0
  %756 = vmatmul.mubr.f32.gmra.mrb[0].mxu0 %v689
  %v757 = vpop.f32.mrb[0].mxu0
  %v758 = vadd.f32 %v685, %v757
  %v759 = vpop.f32.mrb[0].mxu0
  %760 = vdwg.mxu0
  %v761 = vadd.f32 %v758, %v66
  %v762 = vxor.u32 %v761, 2147483648
  %v763 = vmul.f32 %v762, 1.442695
  %v764 = vpow.pop %v763
  %v765 = vadd.f32 %v764, 1.0
  %v766 = vrcp.pop %v765
  %v767 = vmul.f32 1.0, %v766
  %v768 = vtanh.pop %v761
  %v769 = vmul.f32 %v767, %v604
  %771 = vrot.lane.b32.xlu0 %v768, 64
  %v772 = vpop.permute.xlu0 %771
  %v774 = vmul.f32 %v767, %v772
  %776 = vrot.lane.b32.xlu0 %v774, 32
  %v777 = vpop.permute.xlu0 %776
  %v779 = vadd.f32 %v769, %v777
  %v780 = vtanh.pop %v779
  %782 = vrot.lane.b32.xlu0 %v780, 64
  %v783 = vpop.permute.xlu0 %782
  %v785 = vmul.f32 %v767, %v783
  %s786 = scalar_lea.vmem %s0, 32
  %v787 = vld [vmem:[%s786] sm:$0xff]
  %789 = vrot.lane.b32.xlu0 %v785, 32
  %v790 = vpop.permute.xlu0 %789
  %v791 = vsel %vm85, %v790, 0
  %793 = vmatprep.subr.mxu0 0.0
  %794 = vmatpush1.msra.mxu0 %v49
  %795 = vmatprep.subr.mxu0 0.0
  %796 = vmatpush1.msra.mxu0 %v50
  %797 = vmatprep.subr.mxu0 0.0
  %798 = vmatpush1.msra.mxu0 %v51
  %799 = vmatprep.subr.mxu0 0.0
  %800 = vmatpush1.msra.mxu0 %v52
  %801 = vmatprep.subr.mxu0 0.0
  %802 = vmatpush1.msra.mxu0 0.0
  %803 = vmatprep.subr.mxu0 0.0
  %804 = vmatpush1.msra.mxu0 0.0
  %805 = vmatprep.subr.mxu0 0.0
  %806 = vmatpush1.msra.mxu0 0.0
  %807 = vmatprep.subr.mxu0 0.0
  %808 = vmatpush1.msra.mxu0 0.0
  %809 = vmatprep.subr.mxu0 0.0
  %810 = vmatpush1.msra.mxu0 0.0
  %811 = vmatprep.subr.mxu0 0.0
  %812 = vmatpush1.msra.mxu0 0.0
  %813 = vmatprep.subr.mxu0 0.0
  %814 = vmatpush1.msra.mxu0 0.0
  %815 = vmatprep.subr.mxu0 0.0
  %816 = vmatpush1.msra.mxu0 0.0
  %817 = vmatprep.subr.mxu0 0.0
  %818 = vmatpush1.msra.mxu0 0.0
  %819 = vmatprep.subr.mxu0 0.0
  %820 = vmatpush1.msra.mxu0 0.0
  %821 = vmatprep.subr.mxu0 0.0
  %822 = vmatpush1.msra.mxu0 0.0
  %823 = vmatprep.subr.mxu0 0.0
  %824 = vmatpush1.msra.mxu0 0.0
  %825 = vmatprep.subr.mxu0 0.0
  %826 = vmatpush1.msra.mxu0 0.0
  %827 = vmatprep.subr.mxu0 0.0
  %828 = vmatpush1.msra.mxu0 0.0
  %829 = vmatprep.subr.mxu0 0.0
  %830 = vmatpush1.msra.mxu0 0.0
  %831 = vmatprep.subr.mxu0 0.0
  %832 = vmatpush1.msra.mxu0 0.0
  %833 = vmatprep.subr.mxu0 0.0
  %834 = vmatpush1.msra.mxu0 0.0
  %835 = vmatprep.subr.mxu0 0.0
  %836 = vmatpush1.msra.mxu0 0.0
  %837 = vmatprep.subr.mxu0 0.0
  %838 = vmatpush1.msra.mxu0 0.0
  %839 = vmatprep.subr.mxu0 0.0
  %840 = vmatpush1.msra.mxu0 0.0
  %841 = vmatprep.subr.mxu0 0.0
  %842 = vmatpush1.msra.mxu0 0.0
  %843 = vmatprep.subr.mxu0 0.0
  %844 = vmatpush1.msra.mxu0 0.0
  %845 = vmatprep.subr.mxu0 0.0
  %846 = vmatpush1.msra.mxu0 0.0
  %847 = vmatprep.subr.mxu0 0.0
  %848 = vmatpush1.msra.mxu0 0.0
  %849 = vmatprep.subr.mxu0 0.0
  %850 = vmatpush1.msra.mxu0 0.0
  %851 = vmatprep.subr.mxu0 0.0
  %852 = vmatpush1.msra.mxu0 0.0
  %853 = vmatprep.subr.mxu0 0.0
  %854 = vmatpush1.msra.mxu0 0.0
  %855 = vmatprep.subr.mxu0 0.0
  %856 = vmatpush1.msra.mxu0 0.0
  %857 = vmatprep.mubr.f32.mxu0 0.0
  %858 = vmatmul.mubr.f32.gmra.mrb[0].mxu0 %v791
  %v859 = vpop.f32.mrb[0].mxu0
  %v860 = vadd.f32 0.0, %v859
  %v861 = vpop.f32.mrb[0].mxu0
  %862 = vdwg.mxu0
  %v864 = vsel %vm85, %v787, 0
  %866 = vmatprep.subr.mxu0 0.0
  %867 = vmatpush1.msra.mxu0 %v41
  %868 = vmatprep.subr.mxu0 0.0
  %869 = vmatpush1.msra.mxu0 %v42
  %870 = vmatprep.subr.mxu0 0.0
  %871 = vmatpush1.msra.mxu0 %v43
  %872 = vmatprep.subr.mxu0 0.0
  %873 = vmatpush1.msra.mxu0 %v44
  %874 = vmatprep.subr.mxu0 0.0
  %875 = vmatpush1.msra.mxu0 0.0
  %876 = vmatprep.subr.mxu0 0.0
  %877 = vmatpush1.msra.mxu0 0.0
  %878 = vmatprep.subr.mxu0 0.0
  %879 = vmatpush1.msra.mxu0 0.0
  %880 = vmatprep.subr.mxu0 0.0
  %881 = vmatpush1.msra.mxu0 0.0
  %882 = vmatprep.subr.mxu0 0.0
  %883 = vmatpush1.msra.mxu0 0.0
  %884 = vmatprep.subr.mxu0 0.0
  %885 = vmatpush1.msra.mxu0 0.0
  %886 = vmatprep.subr.mxu0 0.0
  %887 = vmatpush1.msra.mxu0 0.0
  %888 = vmatprep.subr.mxu0 0.0
  %889 = vmatpush1.msra.mxu0 0.0
  %890 = vmatprep.subr.mxu0 0.0
  %891 = vmatpush1.msra.mxu0 0.0
  %892 = vmatprep.subr.mxu0 0.0
  %893 = vmatpush1.msra.mxu0 0.0
  %894 = vmatprep.subr.mxu0 0.0
  %895 = vmatpush1.msra.mxu0 0.0
  %896 = vmatprep.subr.mxu0 0.0
  %897 = vmatpush1.msra.mxu0 0.0
  %898 = vmatprep.subr.mxu0 0.0
  %899 = vmatpush1.msra.mxu0 0.0
  %900 = vmatprep.subr.mxu0 0.0
  %901 = vmatpush1.msra.mxu0 0.0
  %902 = vmatprep.subr.mxu0 0.0
  %903 = vmatpush1.msra.mxu0 0.0
  %904 = vmatprep.subr.mxu0 0.0
  %905 = vmatpush1.msra.mxu0 0.0
  %906 = vmatprep.subr.mxu0 0.0
  %907 = vmatpush1.msra.mxu0 0.0
  %908 = vmatprep.subr.mxu0 0.0
  %909 = vmatpush1.msra.mxu0 0.0
  %910 = vmatprep.subr.mxu0 0.0
  %911 = vmatpush1.msra.mxu0 0.0
  %912 = vmatprep.subr.mxu0 0.0
  %913 = vmatpush1.msra.mxu0 0.0
  %914 = vmatprep.subr.mxu0 0.0
  %915 = vmatpush1.msra.mxu0 0.0
  %916 = vmatprep.subr.mxu0 0.0
  %917 = vmatpush1.msra.mxu0 0.0
  %918 = vmatprep.subr.mxu0 0.0
  %919 = vmatpush1.msra.mxu0 0.0
  %920 = vmatprep.subr.mxu0 0.0
  %921 = vmatpush1.msra.mxu0 0.0
  %922 = vmatprep.subr.mxu0 0.0
  %923 = vmatpush1.msra.mxu0 0.0
  %924 = vmatprep.subr.mxu0 0.0
  %925 = vmatpush1.msra.mxu0 0.0
  %926 = vmatprep.subr.mxu0 0.0
  %927 = vmatpush1.msra.mxu0 0.0
  %928 = vmatprep.subr.mxu0 0.0
  %929 = vmatpush1.msra.mxu0 0.0
  %930 = vmatprep.mubr.f32.mxu0 0.0
  %931 = vmatmul.mubr.f32.gmra.mrb[0].mxu0 %v864
  %v932 = vpop.f32.mrb[0].mxu0
  %v933 = vadd.f32 %v860, %v932
  %v934 = vpop.f32.mrb[0].mxu0
  %935 = vdwg.mxu0
  %v936 = vadd.f32 %v933, %v66
  %v937 = vxor.u32 %v936, 2147483648
  %v938 = vmul.f32 %v937, 1.442695
  %v939 = vpow.pop %v938
  %v940 = vadd.f32 %v939, 1.0
  %v941 = vrcp.pop %v940
  %v942 = vmul.f32 1.0, %v941
  %v943 = vtanh.pop %v936
  %v944 = vmul.f32 %v942, %v779
  %946 = vrot.lane.b32.xlu0 %v943, 64
  %v947 = vpop.permute.xlu0 %946
  %v949 = vmul.f32 %v942, %v947
  %951 = vrot.lane.b32.xlu0 %v949, 32
  %v952 = vpop.permute.xlu0 %951
  %v954 = vadd.f32 %v944, %v952
  %v955 = vtanh.pop %v954
  %957 = vrot.lane.b32.xlu0 %v955, 64
  %v958 = vpop.permute.xlu0 %957
  %v960 = vmul.f32 %v942, %v958
  %s961 = scalar_lea.vmem %s0, 40
  %v962 = vld [vmem:[%s961] sm:$0xff]
  %964 = vrot.lane.b32.xlu0 %v960, 32
  %v965 = vpop.permute.xlu0 %964
  %v966 = vsel %vm85, %v965, 0
  %968 = vmatprep.subr.mxu0 0.0
  %969 = vmatpush1.msra.mxu0 %v49
  %970 = vmatprep.subr.mxu0 0.0
  %971 = vmatpush1.msra.mxu0 %v50
  %972 = vmatprep.subr.mxu0 0.0
  %973 = vmatpush1.msra.mxu0 %v51
  %974 = vmatprep.subr.mxu0 0.0
  %975 = vmatpush1.msra.mxu0 %v52
  %976 = vmatprep.subr.mxu0 0.0
  %977 = vmatpush1.msra.mxu0 0.0
  %978 = vmatprep.subr.mxu0 0.0
  %979 = vmatpush1.msra.mxu0 0.0
  %980 = vmatprep.subr.mxu0 0.0
  %981 = vmatpush1.msra.mxu0 0.0
  %982 = vmatprep.subr.mxu0 0.0
  %983 = vmatpush1.msra.mxu0 0.0
  %984 = vmatprep.subr.mxu0 0.0
  %985 = vmatpush1.msra.mxu0 0.0
  %986 = vmatprep.subr.mxu0 0.0
  %987 = vmatpush1.msra.mxu0 0.0
  %988 = vmatprep.subr.mxu0 0.0
  %989 = vmatpush1.msra.mxu0 0.0
  %990 = vmatprep.subr.mxu0 0.0
  %991 = vmatpush1.msra.mxu0 0.0
  %992 = vmatprep.subr.mxu0 0.0
  %993 = vmatpush1.msra.mxu0 0.0
  %994 = vmatprep.subr.mxu0 0.0
  %995 = vmatpush1.msra.mxu0 0.0
  %996 = vmatprep.subr.mxu0 0.0
  %997 = vmatpush1.msra.mxu0 0.0
  %998 = vmatprep.subr.mxu0 0.0
  %999 = vmatpush1.msra.mxu0 0.0
  %1000 = vmatprep.subr.mxu0 0.0
  %1001 = vmatpush1.msra.mxu0 0.0
  %1002 = vmatprep.subr.mxu0 0.0
  %1003 = vmatpush1.msra.mxu0 0.0
  %1004 = vmatprep.subr.mxu0 0.0
  %1005 = vmatpush1.msra.mxu0 0.0
  %1006 = vmatprep.subr.mxu0 0.0
  %1007 = vmatpush1.msra.mxu0 0.0
  %1008 = vmatprep.subr.mxu0 0.0
  %1009 = vmatpush1.msra.mxu0 0.0
  %1010 = vmatprep.subr.mxu0 0.0
  %1011 = vmatpush1.msra.mxu0 0.0
  %1012 = vmatprep.subr.mxu0 0.0
  %1013 = vmatpush1.msra.mxu0 0.0
  %1014 = vmatprep.subr.mxu0 0.0
  %1015 = vmatpush1.msra.mxu0 0.0
  %1016 = vmatprep.subr.mxu0 0.0
  %1017 = vmatpush1.msra.mxu0 0.0
  %1018 = vmatprep.subr.mxu0 0.0
  %1019 = vmatpush1.msra.mxu0 0.0
  %1020 = vmatprep.subr.mxu0 0.0
  %1021 = vmatpush1.msra.mxu0 0.0
  %1022 = vmatprep.subr.mxu0 0.0
  %1023 = vmatpush1.msra.mxu0 0.0
  %1024 = vmatprep.subr.mxu0 0.0
  %1025 = vmatpush1.msra.mxu0 0.0
  %1026 = vmatprep.subr.mxu0 0.0
  %1027 = vmatpush1.msra.mxu0 0.0
  %1028 = vmatprep.subr.mxu0 0.0
  %1029 = vmatpush1.msra.mxu0 0.0
  %1030 = vmatprep.subr.mxu0 0.0
  %1031 = vmatpush1.msra.mxu0 0.0
  %1032 = vmatprep.mubr.f32.mxu0 0.0
  %1033 = vmatmul.mubr.f32.gmra.mrb[0].mxu0 %v966
  %v1034 = vpop.f32.mrb[0].mxu0
  %v1035 = vadd.f32 0.0, %v1034
  %v1036 = vpop.f32.mrb[0].mxu0
  %1037 = vdwg.mxu0
  %v1039 = vsel %vm85, %v962, 0
  %1041 = vmatprep.subr.mxu0 0.0
  %1042 = vmatpush1.msra.mxu0 %v41
  %1043 = vmatprep.subr.mxu0 0.0
  %1044 = vmatpush1.msra.mxu0 %v42
  %1045 = vmatprep.subr.mxu0 0.0
  %1046 = vmatpush1.msra.mxu0 %v43
  %1047 = vmatprep.subr.mxu0 0.0
  %1048 = vmatpush1.msra.mxu0 %v44
  %1049 = vmatprep.subr.mxu0 0.0
  %1050 = vmatpush1.msra.mxu0 0.0
  %1051 = vmatprep.subr.mxu0 0.0
  %1052 = vmatpush1.msra.mxu0 0.0
  %1053 = vmatprep.subr.mxu0 0.0
  %1054 = vmatpush1.msra.mxu0 0.0
  %1055 = vmatprep.subr.mxu0 0.0
  %1056 = vmatpush1.msra.mxu0 0.0
  %1057 = vmatprep.subr.mxu0 0.0
  %1058 = vmatpush1.msra.mxu0 0.0
  %1059 = vmatprep.subr.mxu0 0.0
  %1060 = vmatpush1.msra.mxu0 0.0
  %1061 = vmatprep.subr.mxu0 0.0
  %1062 = vmatpush1.msra.mxu0 0.0
  %1063 = vmatprep.subr.mxu0 0.0
  %1064 = vmatpush1.msra.mxu0 0.0
  %1065 = vmatprep.subr.mxu0 0.0
  %1066 = vmatpush1.msra.mxu0 0.0
  %1067 = vmatprep.subr.mxu0 0.0
  %1068 = vmatpush1.msra.mxu0 0.0
  %1069 = vmatprep.subr.mxu0 0.0
  %1070 = vmatpush1.msra.mxu0 0.0
  %1071 = vmatprep.subr.mxu0 0.0
  %1072 = vmatpush1.msra.mxu0 0.0
  %1073 = vmatprep.subr.mxu0 0.0
  %1074 = vmatpush1.msra.mxu0 0.0
  %1075 = vmatprep.subr.mxu0 0.0
  %1076 = vmatpush1.msra.mxu0 0.0
  %1077 = vmatprep.subr.mxu0 0.0
  %1078 = vmatpush1.msra.mxu0 0.0
  %1079 = vmatprep.subr.mxu0 0.0
  %1080 = vmatpush1.msra.mxu0 0.0
  %1081 = vmatprep.subr.mxu0 0.0
  %1082 = vmatpush1.msra.mxu0 0.0
  %1083 = vmatprep.subr.mxu0 0.0
  %1084 = vmatpush1.msra.mxu0 0.0
  %1085 = vmatprep.subr.mxu0 0.0
  %1086 = vmatpush1.msra.mxu0 0.0
  %1087 = vmatprep.subr.mxu0 0.0
  %1088 = vmatpush1.msra.mxu0 0.0
  %1089 = vmatprep.subr.mxu0 0.0
  %1090 = vmatpush1.msra.mxu0 0.0
  %1091 = vmatprep.subr.mxu0 0.0
  %1092 = vmatpush1.msra.mxu0 0.0
  %1093 = vmatprep.subr.mxu0 0.0
  %1094 = vmatpush1.msra.mxu0 0.0
  %1095 = vmatprep.subr.mxu0 0.0
  %1096 = vmatpush1.msra.mxu0 0.0
  %1097 = vmatprep.subr.mxu0 0.0
  %1098 = vmatpush1.msra.mxu0 0.0
  %1099 = vmatprep.subr.mxu0 0.0
  %1100 = vmatpush1.msra.mxu0 0.0
  %1101 = vmatprep.subr.mxu0 0.0
  %1102 = vmatpush1.msra.mxu0 0.0
  %1103 = vmatprep.subr.mxu0 0.0
  %1104 = vmatpush1.msra.mxu0 0.0
  %1105 = vmatprep.mubr.f32.mxu0 0.0
  %1106 = vmatmul.mubr.f32.gmra.mrb[0].mxu0 %v1039
  %v1107 = vpop.f32.mrb[0].mxu0
  %v1108 = vadd.f32 %v1035, %v1107
  %v1109 = vpop.f32.mrb[0].mxu0
  %1110 = vdwg.mxu0
  %v1111 = vadd.f32 %v1108, %v66
  %v1112 = vxor.u32 %v1111, 2147483648
  %v1113 = vmul.f32 %v1112, 1.442695
  %v1114 = vpow.pop %v1113
  %v1115 = vadd.f32 %v1114, 1.0
  %v1116 = vrcp.pop %v1115
  %v1117 = vmul.f32 1.0, %v1116
  %v1118 = vtanh.pop %v1111
  %v1119 = vmul.f32 %v1117, %v954
  %1121 = vrot.lane.b32.xlu0 %v1118, 64
  %v1122 = vpop.permute.xlu0 %1121
  %v1124 = vmul.f32 %v1117, %v1122
  %1126 = vrot.lane.b32.xlu0 %v1124, 32
  %v1127 = vpop.permute.xlu0 %1126
  %v1129 = vadd.f32 %v1119, %v1127
  %v1130 = vtanh.pop %v1129
  %1132 = vrot.lane.b32.xlu0 %v1130, 64
  %v1133 = vpop.permute.xlu0 %1132
  %v1135 = vmul.f32 %v1117, %v1133
  %s1136 = scalar_lea.vmem %s0, 48
  %v1137 = vld [vmem:[%s1136] sm:$0xff]
  %1139 = vrot.lane.b32.xlu0 %v1135, 32
  %v1140 = vpop.permute.xlu0 %1139
  %v1141 = vsel %vm85, %v1140, 0
  %1143 = vmatprep.subr.mxu0 0.0
  %1144 = vmatpush1.msra.mxu0 %v49
  %1145 = vmatprep.subr.mxu0 0.0
  %1146 = vmatpush1.msra.mxu0 %v50
  %1147 = vmatprep.subr.mxu0 0.0
  %1148 = vmatpush1.msra.mxu0 %v51
  %1149 = vmatprep.subr.mxu0 0.0
  %1150 = vmatpush1.msra.mxu0 %v52
  %1151 = vmatprep.subr.mxu0 0.0
  %1152 = vmatpush1.msra.mxu0 0.0
  %1153 = vmatprep.subr.mxu0 0.0
  %1154 = vmatpush1.msra.mxu0 0.0
  %1155 = vmatprep.subr.mxu0 0.0
  %1156 = vmatpush1.msra.mxu0 0.0
  %1157 = vmatprep.subr.mxu0 0.0
  %1158 = vmatpush1.msra.mxu0 0.0
  %1159 = vmatprep.subr.mxu0 0.0
  %1160 = vmatpush1.msra.mxu0 0.0
  %1161 = vmatprep.subr.mxu0 0.0
  %1162 = vmatpush1.msra.mxu0 0.0
  %1163 = vmatprep.subr.mxu0 0.0
  %1164 = vmatpush1.msra.mxu0 0.0
  %1165 = vmatprep.subr.mxu0 0.0
  %1166 = vmatpush1.msra.mxu0 0.0
  %1167 = vmatprep.subr.mxu0 0.0
  %1168 = vmatpush1.msra.mxu0 0.0
  %1169 = vmatprep.subr.mxu0 0.0
  %1170 = vmatpush1.msra.mxu0 0.0
  %1171 = vmatprep.subr.mxu0 0.0
  %1172 = vmatpush1.msra.mxu0 0.0
  %1173 = vmatprep.subr.mxu0 0.0
  %1174 = vmatpush1.msra.mxu0 0.0
  %1175 = vmatprep.subr.mxu0 0.0
  %1176 = vmatpush1.msra.mxu0 0.0
  %1177 = vmatprep.subr.mxu0 0.0
  %1178 = vmatpush1.msra.mxu0 0.0
  %1179 = vmatprep.subr.mxu0 0.0
  %1180 = vmatpush1.msra.mxu0 0.0
  %1181 = vmatprep.subr.mxu0 0.0
  %1182 = vmatpush1.msra.mxu0 0.0
  %1183 = vmatprep.subr.mxu0 0.0
  %1184 = vmatpush1.msra.mxu0 0.0
  %1185 = vmatprep.subr.mxu0 0.0
  %1186 = vmatpush1.msra.mxu0 0.0
  %1187 = vmatprep.subr.mxu0 0.0
  %1188 = vmatpush1.msra.mxu0 0.0
  %1189 = vmatprep.subr.mxu0 0.0
  %1190 = vmatpush1.msra.mxu0 0.0
  %1191 = vmatprep.subr.mxu0 0.0
  %1192 = vmatpush1.msra.mxu0 0.0
  %1193 = vmatprep.subr.mxu0 0.0
  %1194 = vmatpush1.msra.mxu0 0.0
  %1195 = vmatprep.subr.mxu0 0.0
  %1196 = vmatpush1.msra.mxu0 0.0
  %1197 = vmatprep.subr.mxu0 0.0
  %1198 = vmatpush1.msra.mxu0 0.0
  %1199 = vmatprep.subr.mxu0 0.0
  %1200 = vmatpush1.msra.mxu0 0.0
  %1201 = vmatprep.subr.mxu0 0.0
  %1202 = vmatpush1.msra.mxu0 0.0
  %1203 = vmatprep.subr.mxu0 0.0
  %1204 = vmatpush1.msra.mxu0 0.0
  %1205 = vmatprep.subr.mxu0 0.0
  %1206 = vmatpush1.msra.mxu0 0.0
  %1207 = vmatprep.mubr.f32.mxu0 0.0
  %1208 = vmatmul.mubr.f32.gmra.mrb[0].mxu0 %v1141
  %v1209 = vpop.f32.mrb[0].mxu0
  %v1210 = vadd.f32 0.0, %v1209
  %v1211 = vpop.f32.mrb[0].mxu0
  %1212 = vdwg.mxu0
  %v1214 = vsel %vm85, %v1137, 0
  %1216 = vmatprep.subr.mxu0 0.0
  %1217 = vmatpush1.msra.mxu0 %v41
  %1218 = vmatprep.subr.mxu0 0.0
  %1219 = vmatpush1.msra.mxu0 %v42
  %1220 = vmatprep.subr.mxu0 0.0
  %1221 = vmatpush1.msra.mxu0 %v43
  %1222 = vmatprep.subr.mxu0 0.0
  %1223 = vmatpush1.msra.mxu0 %v44
  %1224 = vmatprep.subr.mxu0 0.0
  %1225 = vmatpush1.msra.mxu0 0.0
  %1226 = vmatprep.subr.mxu0 0.0
  %1227 = vmatpush1.msra.mxu0 0.0
  %1228 = vmatprep.subr.mxu0 0.0
  %1229 = vmatpush1.msra.mxu0 0.0
  %1230 = vmatprep.subr.mxu0 0.0
  %1231 = vmatpush1.msra.mxu0 0.0
  %1232 = vmatprep.subr.mxu0 0.0
  %1233 = vmatpush1.msra.mxu0 0.0
  %1234 = vmatprep.subr.mxu0 0.0
  %1235 = vmatpush1.msra.mxu0 0.0
  %1236 = vmatprep.subr.mxu0 0.0
  %1237 = vmatpush1.msra.mxu0 0.0
  %1238 = vmatprep.subr.mxu0 0.0
  %1239 = vmatpush1.msra.mxu0 0.0
  %1240 = vmatprep.subr.mxu0 0.0
  %1241 = vmatpush1.msra.mxu0 0.0
  %1242 = vmatprep.subr.mxu0 0.0
  %1243 = vmatpush1.msra.mxu0 0.0
  %1244 = vmatprep.subr.mxu0 0.0
  %1245 = vmatpush1.msra.mxu0 0.0
  %1246 = vmatprep.subr.mxu0 0.0
  %1247 = vmatpush1.msra.mxu0 0.0
  %1248 = vmatprep.subr.mxu0 0.0
  %1249 = vmatpush1.msra.mxu0 0.0
  %1250 = vmatprep.subr.mxu0 0.0
  %1251 = vmatpush1.msra.mxu0 0.0
  %1252 = vmatprep.subr.mxu0 0.0
  %1253 = vmatpush1.msra.mxu0 0.0
  %1254 = vmatprep.subr.mxu0 0.0
  %1255 = vmatpush1.msra.mxu0 0.0
  %1256 = vmatprep.subr.mxu0 0.0
  %1257 = vmatpush1.msra.mxu0 0.0
  %1258 = vmatprep.subr.mxu0 0.0
  %1259 = vmatpush1.msra.mxu0 0.0
  %1260 = vmatprep.subr.mxu0 0.0
  %1261 = vmatpush1.msra.mxu0 0.0
  %1262 = vmatprep.subr.mxu0 0.0
  %1263 = vmatpush1.msra.mxu0 0.0
  %1264 = vmatprep.subr.mxu0 0.0
  %1265 = vmatpush1.msra.mxu0 0.0
  %1266 = vmatprep.subr.mxu0 0.0
  %1267 = vmatpush1.msra.mxu0 0.0
  %1268 = vmatprep.subr.mxu0 0.0
  %1269 = vmatpush1.msra.mxu0 0.0
  %1270 = vmatprep.subr.mxu0 0.0
  %1271 = vmatpush1.msra.mxu0 0.0
  %1272 = vmatprep.subr.mxu0 0.0
  %1273 = vmatpush1.msra.mxu0 0.0
  %1274 = vmatprep.subr.mxu0 0.0
  %1275 = vmatpush1.msra.mxu0 0.0
  %1276 = vmatprep.subr.mxu0 0.0
  %1277 = vmatpush1.msra.mxu0 0.0
  %1278 = vmatprep.subr.mxu0 0.0
  %1279 = vmatpush1.msra.mxu0 0.0
  %1280 = vmatprep.mubr.f32.mxu0 0.0
  %1281 = vmatmul.mubr.f32.gmra.mrb[0].mxu0 %v1214
  %v1282 = vpop.f32.mrb[0].mxu0
  %v1283 = vadd.f32 %v1210, %v1282
  %v1284 = vpop.f32.mrb[0].mxu0
  %1285 = vdwg.mxu0
  %v1286 = vadd.f32 %v1283, %v66
  %v1287 = vxor.u32 %v1286, 2147483648
  %v1288 = vmul.f32 %v1287, 1.442695
  %v1289 = vpow.pop %v1288
  %v1290 = vadd.f32 %v1289, 1.0
  %v1291 = vrcp.pop %v1290
  %v1292 = vmul.f32 1.0, %v1291
  %v1293 = vtanh.pop %v1286
  %v1294 = vmul.f32 %v1292, %v1129
  %1296 = vrot.lane.b32.xlu0 %v1293, 64
  %v1297 = vpop.permute.xlu0 %1296
  %v1299 = vmul.f32 %v1292, %v1297
  %1301 = vrot.lane.b32.xlu0 %v1299, 32
  %v1302 = vpop.permute.xlu0 %1301
  %v1304 = vadd.f32 %v1294, %v1302
  %v1305 = vtanh.pop %v1304
  %1307 = vrot.lane.b32.xlu0 %v1305, 64
  %v1308 = vpop.permute.xlu0 %1307
  %v1310 = vmul.f32 %v1292, %v1308
  %s1311 = scalar_lea.vmem %s0, 56
  %v1312 = vld [vmem:[%s1311] sm:$0xff]
  %1314 = vrot.lane.b32.xlu0 %v1310, 32
  %v1315 = vpop.permute.xlu0 %1314
  %v1316 = vsel %vm85, %v1315, 0
  %1318 = vmatprep.subr.mxu0 0.0
  %1319 = vmatpush1.msra.mxu0 %v49
  %1320 = vmatprep.subr.mxu0 0.0
  %1321 = vmatpush1.msra.mxu0 %v50
  %1322 = vmatprep.subr.mxu0 0.0
  %1323 = vmatpush1.msra.mxu0 %v51
  %1324 = vmatprep.subr.mxu0 0.0
  %1325 = vmatpush1.msra.mxu0 %v52
  %1326 = vmatprep.subr.mxu0 0.0
  %1327 = vmatpush1.msra.mxu0 0.0
  %1328 = vmatprep.subr.mxu0 0.0
  %1329 = vmatpush1.msra.mxu0 0.0
  %1330 = vmatprep.subr.mxu0 0.0
  %1331 = vmatpush1.msra.mxu0 0.0
  %1332 = vmatprep.subr.mxu0 0.0
  %1333 = vmatpush1.msra.mxu0 0.0
  %1334 = vmatprep.subr.mxu0 0.0
  %1335 = vmatpush1.msra.mxu0 0.0
  %1336 = vmatprep.subr.mxu0 0.0
  %1337 = vmatpush1.msra.mxu0 0.0
  %1338 = vmatprep.subr.mxu0 0.0
  %1339 = vmatpush1.msra.mxu0 0.0
  %1340 = vmatprep.subr.mxu0 0.0
  %1341 = vmatpush1.msra.mxu0 0.0
  %1342 = vmatprep.subr.mxu0 0.0
  %1343 = vmatpush1.msra.mxu0 0.0
  %1344 = vmatprep.subr.mxu0 0.0
  %1345 = vmatpush1.msra.mxu0 0.0
  %1346 = vmatprep.subr.mxu0 0.0
  %1347 = vmatpush1.msra.mxu0 0.0
  %1348 = vmatprep.subr.mxu0 0.0
  %1349 = vmatpush1.msra.mxu0 0.0
  %1350 = vmatprep.subr.mxu0 0.0
  %1351 = vmatpush1.msra.mxu0 0.0
  %1352 = vmatprep.subr.mxu0 0.0
  %1353 = vmatpush1.msra.mxu0 0.0
  %1354 = vmatprep.subr.mxu0 0.0
  %1355 = vmatpush1.msra.mxu0 0.0
  %1356 = vmatprep.subr.mxu0 0.0
  %1357 = vmatpush1.msra.mxu0 0.0
  %1358 = vmatprep.subr.mxu0 0.0
  %1359 = vmatpush1.msra.mxu0 0.0
  %1360 = vmatprep.subr.mxu0 0.0
  %1361 = vmatpush1.msra.mxu0 0.0
  %1362 = vmatprep.subr.mxu0 0.0
  %1363 = vmatpush1.msra.mxu0 0.0
  %1364 = vmatprep.subr.mxu0 0.0
  %1365 = vmatpush1.msra.mxu0 0.0
  %1366 = vmatprep.subr.mxu0 0.0
  %1367 = vmatpush1.msra.mxu0 0.0
  %1368 = vmatprep.subr.mxu0 0.0
  %1369 = vmatpush1.msra.mxu0 0.0
  %1370 = vmatprep.subr.mxu0 0.0
  %1371 = vmatpush1.msra.mxu0 0.0
  %1372 = vmatprep.subr.mxu0 0.0
  %1373 = vmatpush1.msra.mxu0 0.0
  %1374 = vmatprep.subr.mxu0 0.0
  %1375 = vmatpush1.msra.mxu0 0.0
  %1376 = vmatprep.subr.mxu0 0.0
  %1377 = vmatpush1.msra.mxu0 0.0
  %1378 = vmatprep.subr.mxu0 0.0
  %1379 = vmatpush1.msra.mxu0 0.0
  %1380 = vmatprep.subr.mxu0 0.0
  %1381 = vmatpush1.msra.mxu0 0.0
  %1382 = vmatprep.mubr.f32.mxu0 0.0
  %1383 = vmatmul.mubr.f32.gmra.mrb[0].mxu0 %v1316
  %v1384 = vpop.f32.mrb[0].mxu0
  %v1385 = vadd.f32 0.0, %v1384
  %v1386 = vpop.f32.mrb[0].mxu0
  %1387 = vdwg.mxu0
  %v1389 = vsel %vm85, %v1312, 0
  %1391 = vmatprep.subr.mxu0 0.0
  %1392 = vmatpush1.msra.mxu0 %v41
  %1393 = vmatprep.subr.mxu0 0.0
  %1394 = vmatpush1.msra.mxu0 %v42
  %1395 = vmatprep.subr.mxu0 0.0
  %1396 = vmatpush1.msra.mxu0 %v43
  %1397 = vmatprep.subr.mxu0 0.0
  %1398 = vmatpush1.msra.mxu0 %v44
  %1399 = vmatprep.subr.mxu0 0.0
  %1400 = vmatpush1.msra.mxu0 0.0
  %1401 = vmatprep.subr.mxu0 0.0
  %1402 = vmatpush1.msra.mxu0 0.0
  %1403 = vmatprep.subr.mxu0 0.0
  %1404 = vmatpush1.msra.mxu0 0.0
  %1405 = vmatprep.subr.mxu0 0.0
  %1406 = vmatpush1.msra.mxu0 0.0
  %1407 = vmatprep.subr.mxu0 0.0
  %1408 = vmatpush1.msra.mxu0 0.0
  %1409 = vmatprep.subr.mxu0 0.0
  %1410 = vmatpush1.msra.mxu0 0.0
  %1411 = vmatprep.subr.mxu0 0.0
  %1412 = vmatpush1.msra.mxu0 0.0
  %1413 = vmatprep.subr.mxu0 0.0
  %1414 = vmatpush1.msra.mxu0 0.0
  %1415 = vmatprep.subr.mxu0 0.0
  %1416 = vmatpush1.msra.mxu0 0.0
  %1417 = vmatprep.subr.mxu0 0.0
  %1418 = vmatpush1.msra.mxu0 0.0
  %1419 = vmatprep.subr.mxu0 0.0
  %1420 = vmatpush1.msra.mxu0 0.0
  %1421 = vmatprep.subr.mxu0 0.0
  %1422 = vmatpush1.msra.mxu0 0.0
  %1423 = vmatprep.subr.mxu0 0.0
  %1424 = vmatpush1.msra.mxu0 0.0
  %1425 = vmatprep.subr.mxu0 0.0
  %1426 = vmatpush1.msra.mxu0 0.0
  %1427 = vmatprep.subr.mxu0 0.0
  %1428 = vmatpush1.msra.mxu0 0.0
  %1429 = vmatprep.subr.mxu0 0.0
  %1430 = vmatpush1.msra.mxu0 0.0
  %1431 = vmatprep.subr.mxu0 0.0
  %1432 = vmatpush1.msra.mxu0 0.0
  %1433 = vmatprep.subr.mxu0 0.0
  %1434 = vmatpush1.msra.mxu0 0.0
  %1435 = vmatprep.subr.mxu0 0.0
  %1436 = vmatpush1.msra.mxu0 0.0
  %1437 = vmatprep.subr.mxu0 0.0
  %1438 = vmatpush1.msra.mxu0 0.0
  %1439 = vmatprep.subr.mxu0 0.0
  %1440 = vmatpush1.msra.mxu0 0.0
  %1441 = vmatprep.subr.mxu0 0.0
  %1442 = vmatpush1.msra.mxu0 0.0
  %1443 = vmatprep.subr.mxu0 0.0
  %1444 = vmatpush1.msra.mxu0 0.0
  %1445 = vmatprep.subr.mxu0 0.0
  %1446 = vmatpush1.msra.mxu0 0.0
  %1447 = vmatprep.subr.mxu0 0.0
  %1448 = vmatpush1.msra.mxu0 0.0
  %1449 = vmatprep.subr.mxu0 0.0
  %1450 = vmatpush1.msra.mxu0 0.0
  %1451 = vmatprep.subr.mxu0 0.0
  %1452 = vmatpush1.msra.mxu0 0.0
  %1453 = vmatprep.subr.mxu0 0.0
  %1454 = vmatpush1.msra.mxu0 0.0
  %1455 = vmatprep.mubr.f32.mxu0 0.0
  %1456 = vmatmul.mubr.f32.gmra.mrb[0].mxu0 %v1389
  %v1457 = vpop.f32.mrb[0].mxu0
  %v1458 = vadd.f32 %v1385, %v1457
  %v1459 = vpop.f32.mrb[0].mxu0
  %1460 = vdwg.mxu0
  %v1461 = vadd.f32 %v1458, %v66
  %v1462 = vxor.u32 %v1461, 2147483648
  %v1463 = vmul.f32 %v1462, 1.442695
  %v1464 = vpow.pop %v1463
  %v1465 = vadd.f32 %v1464, 1.0
  %v1466 = vrcp.pop %v1465
  %v1467 = vmul.f32 1.0, %v1466
  %v1468 = vtanh.pop %v1461
  %v1469 = vmul.f32 %v1467, %v1304
  %1471 = vrot.lane.b32.xlu0 %v1468, 64
  %v1472 = vpop.permute.xlu0 %1471
  %v1474 = vmul.f32 %v1467, %v1472
  %1476 = vrot.lane.b32.xlu0 %v1474, 32
  %v1477 = vpop.permute.xlu0 %1476
  %v1479 = vadd.f32 %v1469, %v1477
  %v1480 = vtanh.pop %v1479
  %1482 = vrot.lane.b32.xlu0 %v1480, 64
  %v1483 = vpop.permute.xlu0 %1482
  %v1485 = vmul.f32 %v1467, %v1483
  %v1486 = vld [vmem:[%s6] sm:$0xff]
  %1488 = vrot.lane.b32.xlu0 %v1485, 32
  %v1489 = vpop.permute.xlu0 %1488
  %v1490 = vsel %vm85, %v1489, 0
  %1492 = vmatprep.subr.mxu0 0.0
  %1493 = vmatpush1.msra.mxu0 %v53
  %1494 = vmatprep.subr.mxu0 0.0
  %1495 = vmatpush1.msra.mxu0 %v54
  %1496 = vmatprep.subr.mxu0 0.0
  %1497 = vmatpush1.msra.mxu0 %v55
  %1498 = vmatprep.subr.mxu0 0.0
  %1499 = vmatpush1.msra.mxu0 %v56
  %1500 = vmatprep.subr.mxu0 0.0
  %1501 = vmatpush1.msra.mxu0 0.0
  %1502 = vmatprep.subr.mxu0 0.0
  %1503 = vmatpush1.msra.mxu0 0.0
  %1504 = vmatprep.subr.mxu0 0.0
  %1505 = vmatpush1.msra.mxu0 0.0
  %1506 = vmatprep.subr.mxu0 0.0
  %1507 = vmatpush1.msra.mxu0 0.0
  %1508 = vmatprep.subr.mxu0 0.0
  %1509 = vmatpush1.msra.mxu0 0.0
  %1510 = vmatprep.subr.mxu0 0.0
  %1511 = vmatpush1.msra.mxu0 0.0
  %1512 = vmatprep.subr.mxu0 0.0
  %1513 = vmatpush1.msra.mxu0 0.0
  %1514 = vmatprep.subr.mxu0 0.0
  %1515 = vmatpush1.msra.mxu0 0.0
  %1516 = vmatprep.subr.mxu0 0.0
  %1517 = vmatpush1.msra.mxu0 0.0
  %1518 = vmatprep.subr.mxu0 0.0
  %1519 = vmatpush1.msra.mxu0 0.0
  %1520 = vmatprep.subr.mxu0 0.0
  %1521 = vmatpush1.msra.mxu0 0.0
  %1522 = vmatprep.subr.mxu0 0.0
  %1523 = vmatpush1.msra.mxu0 0.0
  %1524 = vmatprep.subr.mxu0 0.0
  %1525 = vmatpush1.msra.mxu0 0.0
  %1526 = vmatprep.subr.mxu0 0.0
  %1527 = vmatpush1.msra.mxu0 0.0
  %1528 = vmatprep.subr.mxu0 0.0
  %1529 = vmatpush1.msra.mxu0 0.0
  %1530 = vmatprep.subr.mxu0 0.0
  %1531 = vmatpush1.msra.mxu0 0.0
  %1532 = vmatprep.subr.mxu0 0.0
  %1533 = vmatpush1.msra.mxu0 0.0
  %1534 = vmatprep.subr.mxu0 0.0
  %1535 = vmatpush1.msra.mxu0 0.0
  %1536 = vmatprep.subr.mxu0 0.0
  %1537 = vmatpush1.msra.mxu0 0.0
  %1538 = vmatprep.subr.mxu0 0.0
  %1539 = vmatpush1.msra.mxu0 0.0
  %1540 = vmatprep.subr.mxu0 0.0
  %1541 = vmatpush1.msra.mxu0 0.0
  %1542 = vmatprep.subr.mxu0 0.0
  %1543 = vmatpush1.msra.mxu0 0.0
  %1544 = vmatprep.subr.mxu0 0.0
  %1545 = vmatpush1.msra.mxu0 0.0
  %1546 = vmatprep.subr.mxu0 0.0
  %1547 = vmatpush1.msra.mxu0 0.0
  %1548 = vmatprep.subr.mxu0 0.0
  %1549 = vmatpush1.msra.mxu0 0.0
  %1550 = vmatprep.subr.mxu0 0.0
  %1551 = vmatpush1.msra.mxu0 0.0
  %1552 = vmatprep.subr.mxu0 0.0
  %1553 = vmatpush1.msra.mxu0 0.0
  %1554 = vmatprep.subr.mxu0 0.0
  %1555 = vmatpush1.msra.mxu0 0.0
  %1556 = vmatprep.mubr.f32.mxu0 0.0
  %1557 = vmatmul.mubr.f32.gmra.mrb[0].mxu0 %v1490
  %v1558 = vpop.f32.mrb[0].mxu0
  %v1559 = vadd.f32 0.0, %v1558
  %v1560 = vpop.f32.mrb[0].mxu0
  %1561 = vdwg.mxu0
  %v1563 = vsel %vm85, %v1486, 0
  %1565 = vmatprep.subr.mxu0 0.0
  %1566 = vmatpush1.msra.mxu0 %v45
  %1567 = vmatprep.subr.mxu0 0.0
  %1568 = vmatpush1.msra.mxu0 %v46
  %1569 = vmatprep.subr.mxu0 0.0
  %1570 = vmatpush1.msra.mxu0 %v47
  %1571 = vmatprep.subr.mxu0 0.0
  %1572 = vmatpush1.msra.mxu0 %v48
  %1573 = vmatprep.subr.mxu0 0.0
  %1574 = vmatpush1.msra.mxu0 0.0
  %1575 = vmatprep.subr.mxu0 0.0
  %1576 = vmatpush1.msra.mxu0 0.0
  %1577 = vmatprep.subr.mxu0 0.0
  %1578 = vmatpush1.msra.mxu0 0.0
  %1579 = vmatprep.subr.mxu0 0.0
  %1580 = vmatpush1.msra.mxu0 0.0
  %1581 = vmatprep.subr.mxu0 0.0
  %1582 = vmatpush1.msra.mxu0 0.0
  %1583 = vmatprep.subr.mxu0 0.0
  %1584 = vmatpush1.msra.mxu0 0.0
  %1585 = vmatprep.subr.mxu0 0.0
  %1586 = vmatpush1.msra.mxu0 0.0
  %1587 = vmatprep.subr.mxu0 0.0
  %1588 = vmatpush1.msra.mxu0 0.0
  %1589 = vmatprep.subr.mxu0 0.0
  %1590 = vmatpush1.msra.mxu0 0.0
  %1591 = vmatprep.subr.mxu0 0.0
  %1592 = vmatpush1.msra.mxu0 0.0
  %1593 = vmatprep.subr.mxu0 0.0
  %1594 = vmatpush1.msra.mxu0 0.0
  %1595 = vmatprep.subr.mxu0 0.0
  %1596 = vmatpush1.msra.mxu0 0.0
  %1597 = vmatprep.subr.mxu0 0.0
  %1598 = vmatpush1.msra.mxu0 0.0
  %1599 = vmatprep.subr.mxu0 0.0
  %1600 = vmatpush1.msra.mxu0 0.0
  %1601 = vmatprep.subr.mxu0 0.0
  %1602 = vmatpush1.msra.mxu0 0.0
  %1603 = vmatprep.subr.mxu0 0.0
  %1604 = vmatpush1.msra.mxu0 0.0
  %1605 = vmatprep.subr.mxu0 0.0
  %1606 = vmatpush1.msra.mxu0 0.0
  %1607 = vmatprep.subr.mxu0 0.0
  %1608 = vmatpush1.msra.mxu0 0.0
  %1609 = vmatprep.subr.mxu0 0.0
  %1610 = vmatpush1.msra.mxu0 0.0
  %1611 = vmatprep.subr.mxu0 0.0
  %1612 = vmatpush1.msra.mxu0 0.0
  %1613 = vmatprep.subr.mxu0 0.0
  %1614 = vmatpush1.msra.mxu0 0.0
  %1615 = vmatprep.subr.mxu0 0.0
  %1616 = vmatpush1.msra.mxu0 0.0
  %1617 = vmatprep.subr.mxu0 0.0
  %1618 = vmatpush1.msra.mxu0 0.0
  %1619 = vmatprep.subr.mxu0 0.0
  %1620 = vmatpush1.msra.mxu0 0.0
  %1621 = vmatprep.subr.mxu0 0.0
  %1622 = vmatpush1.msra.mxu0 0.0
  %1623 = vmatprep.subr.mxu0 0.0
  %1624 = vmatpush1.msra.mxu0 0.0
  %1625 = vmatprep.subr.mxu0 0.0
  %1626 = vmatpush1.msra.mxu0 0.0
  %1627 = vmatprep.subr.mxu0 0.0
  %1628 = vmatpush1.msra.mxu0 0.0
  %1629 = vmatprep.mubr.f32.mxu0 0.0
  %1630 = vmatmul.mubr.f32.gmra.mrb[0].mxu0 %v1563
  %v1631 = vpop.f32.mrb[0].mxu0
  %v1632 = vadd.f32 %v1559, %v1631
  %v1633 = vpop.f32.mrb[0].mxu0
  %1634 = vdwg.mxu0
  %v1635 = vadd.f32 %v1632, %v73
  %v1636 = vxor.u32 %v1635, 2147483648
  %v1637 = vmul.f32 %v1636, 1.442695
  %v1638 = vpow.pop %v1637
  %v1639 = vadd.f32 %v1638, 1.0
  %v1640 = vrcp.pop %v1639
  %v1641 = vmul.f32 1.0, %v1640
  %v1642 = vtanh.pop %v1635
  %v1643 = vmul.f32 %v1641, %v1479
  %1645 = vrot.lane.b32.xlu0 %v1642, 64
  %v1646 = vpop.permute.xlu0 %1645
  %v1648 = vmul.f32 %v1641, %v1646
  %1650 = vrot.lane.b32.xlu0 %v1648, 32
  %v1651 = vpop.permute.xlu0 %1650
  %v1653 = vadd.f32 %v1643, %v1651
  %v1654 = vtanh.pop %v1653
  %1656 = vrot.lane.b32.xlu0 %v1654, 64
  %v1657 = vpop.permute.xlu0 %1656
  %v1659 = vmul.f32 %v1641, %v1657
  %1661 = vrot.lane.b32.xlu0 %v1659, 32
  %v1662 = vpop.permute.xlu0 %1661
  %v1663 = vsel %vm85, %v1662, 0
  %1665 = vmatprep.subr.mxu0 0.0
  %1666 = vmatpush1.msra.mxu0 %v57
  %1667 = vmatprep.subr.mxu0 0.0
  %1668 = vmatpush1.msra.mxu0 %v58
  %1669 = vmatprep.subr.mxu0 0.0
  %1670 = vmatpush1.msra.mxu0 %v59
  %1671 = vmatprep.subr.mxu0 0.0
  %1672 = vmatpush1.msra.mxu0 %v60
  %1673 = vmatprep.subr.mxu0 0.0
  %1674 = vmatpush1.msra.mxu0 0.0
  %1675 = vmatprep.subr.mxu0 0.0
  %1676 = vmatpush1.msra.mxu0 0.0
  %1677 = vmatprep.subr.mxu0 0.0
  %1678 = vmatpush1.msra.mxu0 0.0
  %1679 = vmatprep.subr.mxu0 0.0
  %1680 = vmatpush1.msra.mxu0 0.0
  %1681 = vmatprep.subr.mxu0 0.0
  %1682 = vmatpush1.msra.mxu0 0.0
  %1683 = vmatprep.subr.mxu0 0.0
  %1684 = vmatpush1.msra.mxu0 0.0
  %1685 = vmatprep.subr.mxu0 0.0
  %1686 = vmatpush1.msra.mxu0 0.0
  %1687 = vmatprep.subr.mxu0 0.0
  %1688 = vmatpush1.msra.mxu0 0.0
  %1689 = vmatprep.subr.mxu0 0.0
  %1690 = vmatpush1.msra.mxu0 0.0
  %1691 = vmatprep.subr.mxu0 0.0
  %1692 = vmatpush1.msra.mxu0 0.0
  %1693 = vmatprep.subr.mxu0 0.0
  %1694 = vmatpush1.msra.mxu0 0.0
  %1695 = vmatprep.subr.mxu0 0.0
  %1696 = vmatpush1.msra.mxu0 0.0
  %1697 = vmatprep.subr.mxu0 0.0
  %1698 = vmatpush1.msra.mxu0 0.0
  %1699 = vmatprep.subr.mxu0 0.0
  %1700 = vmatpush1.msra.mxu0 0.0
  %1701 = vmatprep.subr.mxu0 0.0
  %1702 = vmatpush1.msra.mxu0 0.0
  %1703 = vmatprep.subr.mxu0 0.0
  %1704 = vmatpush1.msra.mxu0 0.0
  %1705 = vmatprep.subr.mxu0 0.0
  %1706 = vmatpush1.msra.mxu0 0.0
  %1707 = vmatprep.subr.mxu0 0.0
  %1708 = vmatpush1.msra.mxu0 0.0
  %1709 = vmatprep.subr.mxu0 0.0
  %1710 = vmatpush1.msra.mxu0 0.0
  %1711 = vmatprep.subr.mxu0 0.0
  %1712 = vmatpush1.msra.mxu0 0.0
  %1713 = vmatprep.subr.mxu0 0.0
  %1714 = vmatpush1.msra.mxu0 0.0
  %1715 = vmatprep.subr.mxu0 0.0
  %1716 = vmatpush1.msra.mxu0 0.0
  %1717 = vmatprep.subr.mxu0 0.0
  %1718 = vmatpush1.msra.mxu0 0.0
  %1719 = vmatprep.subr.mxu0 0.0
  %1720 = vmatpush1.msra.mxu0 0.0
  %1721 = vmatprep.subr.mxu0 0.0
  %1722 = vmatpush1.msra.mxu0 0.0
  %1723 = vmatprep.subr.mxu0 0.0
  %1724 = vmatpush1.msra.mxu0 0.0
  %1725 = vmatprep.subr.mxu0 0.0
  %1726 = vmatpush1.msra.mxu0 0.0
  %1727 = vmatprep.subr.mxu0 0.0
  %1728 = vmatpush1.msra.mxu0 0.0
  %1729 = vmatprep.mubr.f32.mxu0 0.0
  %1730 = vmatmul.mubr.f32.gmra.mrb[0].mxu0 %v1663
  %v1731 = vpop.f32.mrb[0].mxu0
  %v1732 = vadd.f32 %v80, %v1731
  %v1733 = vpop.f32.mrb[0].mxu0
  %1734 = vdwg.mxu0
  %1735 = vmax.xlane.f32.xlu0 %v1732
  %v1736 = vpop.xlane.xlu0 %1735
  %v1737 = vsub.f32 %v1732, %v1736
  %v1738 = vmul.f32 %v1737, 1.442695
  %v1739 = vpow.pop %v1738
  %1740 = vadd.xlane.f32.xlu0 %v1739
  %v1741 = vpop.xlane.xlu0 %1740
  %v1742 = vlog2.pop %v1741
  %v1743 = vmul.f32 %v1742, 0.6931472
  %v1744 = vadd.f32 %v1736, %v1743
  %v1745 = vsub.f32 %v1732, %v1744
  %1746 = vst [vmem:[%s12] sm:$0xff] %v1745
  %s1747 = scalar_lea.vmem %s6, 8
  %v1748 = vld [vmem:[%s1747] sm:$0xff]
  %1749 = vmatprep.subr.mxu0 0.0
  %1750 = vmatpush1.msra.mxu0 %v53
  %1751 = vmatprep.subr.mxu0 0.0
  %1752 = vmatpush1.msra.mxu0 %v54
  %1753 = vmatprep.subr.mxu0 0.0
  %1754 = vmatpush1.msra.mxu0 %v55
  %1755 = vmatprep.subr.mxu0 0.0
  %1756 = vmatpush1.msra.mxu0 %v56
  %1757 = vmatprep.subr.mxu0 0.0
  %1758 = vmatpush1.msra.mxu0 0.0
  %1759 = vmatprep.subr.mxu0 0.0
  %1760 = vmatpush1.msra.mxu0 0.0
  %1761 = vmatprep.subr.mxu0 0.0
  %1762 = vmatpush1.msra.mxu0 0.0
  %1763 = vmatprep.subr.mxu0 0.0
  %1764 = vmatpush1.msra.mxu0 0.0
  %1765 = vmatprep.subr.mxu0 0.0
  %1766 = vmatpush1.msra.mxu0 0.0
  %1767 = vmatprep.subr.mxu0 0.0
  %1768 = vmatpush1.msra.mxu0 0.0
  %1769 = vmatprep.subr.mxu0 0.0
  %1770 = vmatpush1.msra.mxu0 0.0
  %1771 = vmatprep.subr.mxu0 0.0
  %1772 = vmatpush1.msra.mxu0 0.0
  %1773 = vmatprep.subr.mxu0 0.0
  %1774 = vmatpush1.msra.mxu0 0.0
  %1775 = vmatprep.subr.mxu0 0.0
  %1776 = vmatpush1.msra.mxu0 0.0
  %1777 = vmatprep.subr.mxu0 0.0
  %1778 = vmatpush1.msra.mxu0 0.0
  %1779 = vmatprep.subr.mxu0 0.0
  %1780 = vmatpush1.msra.mxu0 0.0
  %1781 = vmatprep.subr.mxu0 0.0
  %1782 = vmatpush1.msra.mxu0 0.0
  %1783 = vmatprep.subr.mxu0 0.0
  %1784 = vmatpush1.msra.mxu0 0.0
  %1785 = vmatprep.subr.mxu0 0.0
  %1786 = vmatpush1.msra.mxu0 0.0
  %1787 = vmatprep.subr.mxu0 0.0
  %1788 = vmatpush1.msra.mxu0 0.0
  %1789 = vmatprep.subr.mxu0 0.0
  %1790 = vmatpush1.msra.mxu0 0.0
  %1791 = vmatprep.subr.mxu0 0.0
  %1792 = vmatpush1.msra.mxu0 0.0
  %1793 = vmatprep.subr.mxu0 0.0
  %1794 = vmatpush1.msra.mxu0 0.0
  %1795 = vmatprep.subr.mxu0 0.0
  %1796 = vmatpush1.msra.mxu0 0.0
  %1797 = vmatprep.subr.mxu0 0.0
  %1798 = vmatpush1.msra.mxu0 0.0
  %1799 = vmatprep.subr.mxu0 0.0
  %1800 = vmatpush1.msra.mxu0 0.0
  %1801 = vmatprep.subr.mxu0 0.0
  %1802 = vmatpush1.msra.mxu0 0.0
  %1803 = vmatprep.subr.mxu0 0.0
  %1804 = vmatpush1.msra.mxu0 0.0
  %1805 = vmatprep.subr.mxu0 0.0
  %1806 = vmatpush1.msra.mxu0 0.0
  %1807 = vmatprep.subr.mxu0 0.0
  %1808 = vmatpush1.msra.mxu0 0.0
  %1809 = vmatprep.subr.mxu0 0.0
  %1810 = vmatpush1.msra.mxu0 0.0
  %1811 = vmatprep.subr.mxu0 0.0
  %1812 = vmatpush1.msra.mxu0 0.0
  %1813 = vmatprep.mubr.f32.mxu0 0.0
  %1814 = vmatmul.mubr.f32.gmra.mrb[0].mxu0 %v1663
  %v1815 = vpop.f32.mrb[0].mxu0
  %v1816 = vadd.f32 0.0, %v1815
  %v1817 = vpop.f32.mrb[0].mxu0
  %1818 = vdwg.mxu0
  %v1820 = vsel %vm85, %v1748, 0
  %1822 = vmatprep.subr.mxu0 0.0
  %1823 = vmatpush1.msra.mxu0 %v45
  %1824 = vmatprep.subr.mxu0 0.0
  %1825 = vmatpush1.msra.mxu0 %v46
  %1826 = vmatprep.subr.mxu0 0.0
  %1827 = vmatpush1.msra.mxu0 %v47
  %1828 = vmatprep.subr.mxu0 0.0
  %1829 = vmatpush1.msra.mxu0 %v48
  %1830 = vmatprep.subr.mxu0 0.0
  %1831 = vmatpush1.msra.mxu0 0.0
  %1832 = vmatprep.subr.mxu0 0.0
  %1833 = vmatpush1.msra.mxu0 0.0
  %1834 = vmatprep.subr.mxu0 0.0
  %1835 = vmatpush1.msra.mxu0 0.0
  %1836 = vmatprep.subr.mxu0 0.0
  %1837 = vmatpush1.msra.mxu0 0.0
  %1838 = vmatprep.subr.mxu0 0.0
  %1839 = vmatpush1.msra.mxu0 0.0
  %1840 = vmatprep.subr.mxu0 0.0
  %1841 = vmatpush1.msra.mxu0 0.0
  %1842 = vmatprep.subr.mxu0 0.0
  %1843 = vmatpush1.msra.mxu0 0.0
  %1844 = vmatprep.subr.mxu0 0.0
  %1845 = vmatpush1.msra.mxu0 0.0
  %1846 = vmatprep.subr.mxu0 0.0
  %1847 = vmatpush1.msra.mxu0 0.0
  %1848 = vmatprep.subr.mxu0 0.0
  %1849 = vmatpush1.msra.mxu0 0.0
  %1850 = vmatprep.subr.mxu0 0.0
  %1851 = vmatpush1.msra.mxu0 0.0
  %1852 = vmatprep.subr.mxu0 0.0
  %1853 = vmatpush1.msra.mxu0 0.0
  %1854 = vmatprep.subr.mxu0 0.0
  %1855 = vmatpush1.msra.mxu0 0.0
  %1856 = vmatprep.subr.mxu0 0.0
  %1857 = vmatpush1.msra.mxu0 0.0
  %1858 = vmatprep.subr.mxu0 0.0
  %1859 = vmatpush1.msra.mxu0 0.0
  %1860 = vmatprep.subr.mxu0 0.0
  %1861 = vmatpush1.msra.mxu0 0.0
  %1862 = vmatprep.subr.mxu0 0.0
  %1863 = vmatpush1.msra.mxu0 0.0
  %1864 = vmatprep.subr.mxu0 0.0
  %1865 = vmatpush1.msra.mxu0 0.0
  %1866 = vmatprep.subr.mxu0 0.0
  %1867 = vmatpush1.msra.mxu0 0.0
  %1868 = vmatprep.subr.mxu0 0.0
  %1869 = vmatpush1.msra.mxu0 0.0
  %1870 = vmatprep.subr.mxu0 0.0
  %1871 = vmatpush1.msra.mxu0 0.0
  %1872 = vmatprep.subr.mxu0 0.0
  %1873 = vmatpush1.msra.mxu0 0.0
  %1874 = vmatprep.subr.mxu0 0.0
  %1875 = vmatpush1.msra.mxu0 0.0
  %1876 = vmatprep.subr.mxu0 0.0
  %1877 = vmatpush1.msra.mxu0 0.0
  %1878 = vmatprep.subr.mxu0 0.0
  %1879 = vmatpush1.msra.mxu0 0.0
  %1880 = vmatprep.subr.mxu0 0.0
  %1881 = vmatpush1.msra.mxu0 0.0
  %1882 = vmatprep.subr.mxu0 0.0
  %1883 = vmatpush1.msra.mxu0 0.0
  %1884 = vmatprep.subr.mxu0 0.0
  %1885 = vmatpush1.msra.mxu0 0.0
  %1886 = vmatprep.mubr.f32.mxu0 0.0
  %1887 = vmatmul.mubr.f32.gmra.mrb[0].mxu0 %v1820
  %v1888 = vpop.f32.mrb[0].mxu0
  %v1889 = vadd.f32 %v1816, %v1888
  %v1890 = vpop.f32.mrb[0].mxu0
  %1891 = vdwg.mxu0
  %v1892 = vadd.f32 %v1889, %v73
  %v1893 = vxor.u32 %v1892, 2147483648
  %v1894 = vmul.f32 %v1893, 1.442695
  %v1895 = vpow.pop %v1894
  %v1896 = vadd.f32 %v1895, 1.0
  %v1897 = vrcp.pop %v1896
  %v1898 = vmul.f32 1.0, %v1897
  %v1899 = vtanh.pop %v1892
  %v1900 = vmul.f32 %v1898, %v1653
  %1902 = vrot.lane.b32.xlu0 %v1899, 64
  %v1903 = vpop.permute.xlu0 %1902
  %v1905 = vmul.f32 %v1898, %v1903
  %1907 = vrot.lane.b32.xlu0 %v1905, 32
  %v1908 = vpop.permute.xlu0 %1907
  %v1910 = vadd.f32 %v1900, %v1908
  %v1911 = vtanh.pop %v1910
  %1913 = vrot.lane.b32.xlu0 %v1911, 64
  %v1914 = vpop.permute.xlu0 %1913
  %v1916 = vmul.f32 %v1898, %v1914
  %1918 = vrot.lane.b32.xlu0 %v1916, 32
  %v1919 = vpop.permute.xlu0 %1918
  %v1920 = vsel %vm85, %v1919, 0
  %1922 = vmatprep.subr.mxu0 0.0
  %1923 = vmatpush1.msra.mxu0 %v57
  %1924 = vmatprep.subr.mxu0 0.0
  %1925 = vmatpush1.msra.mxu0 %v58
  %1926 = vmatprep.subr.mxu0 0.0
  %1927 = vmatpush1.msra.mxu0 %v59
  %1928 = vmatprep.subr.mxu0 0.0
  %1929 = vmatpush1.msra.mxu0 %v60
  %1930 = vmatprep.subr.mxu0 0.0
  %1931 = vmatpush1.msra.mxu0 0.0
  %1932 = vmatprep.subr.mxu0 0.0
  %1933 = vmatpush1.msra.mxu0 0.0
  %1934 = vmatprep.subr.mxu0 0.0
  %1935 = vmatpush1.msra.mxu0 0.0
  %1936 = vmatprep.subr.mxu0 0.0
  %1937 = vmatpush1.msra.mxu0 0.0
  %1938 = vmatprep.subr.mxu0 0.0
  %1939 = vmatpush1.msra.mxu0 0.0
  %1940 = vmatprep.subr.mxu0 0.0
  %1941 = vmatpush1.msra.mxu0 0.0
  %1942 = vmatprep.subr.mxu0 0.0
  %1943 = vmatpush1.msra.mxu0 0.0
  %1944 = vmatprep.subr.mxu0 0.0
  %1945 = vmatpush1.msra.mxu0 0.0
  %1946 = vmatprep.subr.mxu0 0.0
  %1947 = vmatpush1.msra.mxu0 0.0
  %1948 = vmatprep.subr.mxu0 0.0
  %1949 = vmatpush1.msra.mxu0 0.0
  %1950 = vmatprep.subr.mxu0 0.0
  %1951 = vmatpush1.msra.mxu0 0.0
  %1952 = vmatprep.subr.mxu0 0.0
  %1953 = vmatpush1.msra.mxu0 0.0
  %1954 = vmatprep.subr.mxu0 0.0
  %1955 = vmatpush1.msra.mxu0 0.0
  %1956 = vmatprep.subr.mxu0 0.0
  %1957 = vmatpush1.msra.mxu0 0.0
  %1958 = vmatprep.subr.mxu0 0.0
  %1959 = vmatpush1.msra.mxu0 0.0
  %1960 = vmatprep.subr.mxu0 0.0
  %1961 = vmatpush1.msra.mxu0 0.0
  %1962 = vmatprep.subr.mxu0 0.0
  %1963 = vmatpush1.msra.mxu0 0.0
  %1964 = vmatprep.subr.mxu0 0.0
  %1965 = vmatpush1.msra.mxu0 0.0
  %1966 = vmatprep.subr.mxu0 0.0
  %1967 = vmatpush1.msra.mxu0 0.0
  %1968 = vmatprep.subr.mxu0 0.0
  %1969 = vmatpush1.msra.mxu0 0.0
  %1970 = vmatprep.subr.mxu0 0.0
  %1971 = vmatpush1.msra.mxu0 0.0
  %1972 = vmatprep.subr.mxu0 0.0
  %1973 = vmatpush1.msra.mxu0 0.0
  %1974 = vmatprep.subr.mxu0 0.0
  %1975 = vmatpush1.msra.mxu0 0.0
  %1976 = vmatprep.subr.mxu0 0.0
  %1977 = vmatpush1.msra.mxu0 0.0
  %1978 = vmatprep.subr.mxu0 0.0
  %1979 = vmatpush1.msra.mxu0 0.0
  %1980 = vmatprep.subr.mxu0 0.0
  %1981 = vmatpush1.msra.mxu0 0.0
  %1982 = vmatprep.subr.mxu0 0.0
  %1983 = vmatpush1.msra.mxu0 0.0
  %1984 = vmatprep.subr.mxu0 0.0
  %1985 = vmatpush1.msra.mxu0 0.0
  %1986 = vmatprep.mubr.f32.mxu0 0.0
  %1987 = vmatmul.mubr.f32.gmra.mrb[0].mxu0 %v1920
  %v1988 = vpop.f32.mrb[0].mxu0
  %v1989 = vadd.f32 %v80, %v1988
  %v1990 = vpop.f32.mrb[0].mxu0
  %1991 = vdwg.mxu0
  %1992 = vmax.xlane.f32.xlu0 %v1989
  %v1993 = vpop.xlane.xlu0 %1992
  %v1994 = vsub.f32 %v1989, %v1993
  %v1995 = vmul.f32 %v1994, 1.442695
  %v1996 = vpow.pop %v1995
  %1997 = vadd.xlane.f32.xlu0 %v1996
  %v1998 = vpop.xlane.xlu0 %1997
  %v1999 = vlog2.pop %v1998
  %v2000 = vmul.f32 %v1999, 0.6931472
  %v2001 = vadd.f32 %v1993, %v2000
  %v2002 = vsub.f32 %v1989, %v2001
  %s2003 = scalar_lea.vmem %s12, 8
  %2004 = vst [vmem:[%s2003] sm:$0xff] %v2002
  %s2005 = scalar_lea.vmem %s6, 16
  %v2006 = vld [vmem:[%s2005] sm:$0xff]
  %2007 = vmatprep.subr.mxu0 0.0
  %2008 = vmatpush1.msra.mxu0 %v53
  %2009 = vmatprep.subr.mxu0 0.0
  %2010 = vmatpush1.msra.mxu0 %v54
  %2011 = vmatprep.subr.mxu0 0.0
  %2012 = vmatpush1.msra.mxu0 %v55
  %2013 = vmatprep.subr.mxu0 0.0
  %2014 = vmatpush1.msra.mxu0 %v56
  %2015 = vmatprep.subr.mxu0 0.0
  %2016 = vmatpush1.msra.mxu0 0.0
  %2017 = vmatprep.subr.mxu0 0.0
  %2018 = vmatpush1.msra.mxu0 0.0
  %2019 = vmatprep.subr.mxu0 0.0
  %2020 = vmatpush1.msra.mxu0 0.0
  %2021 = vmatprep.subr.mxu0 0.0
  %2022 = vmatpush1.msra.mxu0 0.0
  %2023 = vmatprep.subr.mxu0 0.0
  %2024 = vmatpush1.msra.mxu0 0.0
  %2025 = vmatprep.subr.mxu0 0.0
  %2026 = vmatpush1.msra.mxu0 0.0
  %2027 = vmatprep.subr.mxu0 0.0
  %2028 = vmatpush1.msra.mxu0 0.0
  %2029 = vmatprep.subr.mxu0 0.0
  %2030 = vmatpush1.msra.mxu0 0.0
  %2031 = vmatprep.subr.mxu0 0.0
  %2032 = vmatpush1.msra.mxu0 0.0
  %2033 = vmatprep.subr.mxu0 0.0
  %2034 = vmatpush1.msra.mxu0 0.0
  %2035 = vmatprep.subr.mxu0 0.0
  %2036 = vmatpush1.msra.mxu0 0.0
  %2037 = vmatprep.subr.mxu0 0.0
  %2038 = vmatpush1.msra.mxu0 0.0
  %2039 = vmatprep.subr.mxu0 0.0
  %2040 = vmatpush1.msra.mxu0 0.0
  %2041 = vmatprep.subr.mxu0 0.0
  %2042 = vmatpush1.msra.mxu0 0.0
  %2043 = vmatprep.subr.mxu0 0.0
  %2044 = vmatpush1.msra.mxu0 0.0
  %2045 = vmatprep.subr.mxu0 0.0
  %2046 = vmatpush1.msra.mxu0 0.0
  %2047 = vmatprep.subr.mxu0 0.0
  %2048 = vmatpush1.msra.mxu0 0.0
  %2049 = vmatprep.subr.mxu0 0.0
  %2050 = vmatpush1.msra.mxu0 0.0
  %2051 = vmatprep.subr.mxu0 0.0
  %2052 = vmatpush1.msra.mxu0 0.0
  %2053 = vmatprep.subr.mxu0 0.0
  %2054 = vmatpush1.msra.mxu0 0.0
  %2055 = vmatprep.subr.mxu0 0.0
  %2056 = vmatpush1.msra.mxu0 0.0
  %2057 = vmatprep.subr.mxu0 0.0
  %2058 = vmatpush1.msra.mxu0 0.0
  %2059 = vmatprep.subr.mxu0 0.0
  %2060 = vmatpush1.msra.mxu0 0.0
  %2061 = vmatprep.subr.mxu0 0.0
  %2062 = vmatpush1.msra.mxu0 0.0
  %2063 = vmatprep.subr.mxu0 0.0
  %2064 = vmatpush1.msra.mxu0 0.0
  %2065 = vmatprep.subr.mxu0 0.0
  %2066 = vmatpush1.msra.mxu0 0.0
  %2067 = vmatprep.subr.mxu0 0.0
  %2068 = vmatpush1.msra.mxu0 0.0
  %2069 = vmatprep.subr.mxu0 0.0
  %2070 = vmatpush1.msra.mxu0 0.0
  %2071 = vmatprep.mubr.f32.mxu0 0.0
  %2072 = vmatmul.mubr.f32.gmra.mrb[0].mxu0 %v1920
  %v2073 = vpop.f32.mrb[0].mxu0
  %v2074 = vadd.f32 0.0, %v2073
  %v2075 = vpop.f32.mrb[0].mxu0
  %2076 = vdwg.mxu0
  %v2078 = vsel %vm85, %v2006, 0
  %2080 = vmatprep.subr.mxu0 0.0
  %2081 = vmatpush1.msra.mxu0 %v45
  %2082 = vmatprep.subr.mxu0 0.0
  %2083 = vmatpush1.msra.mxu0 %v46
  %2084 = vmatprep.subr.mxu0 0.0
  %2085 = vmatpush1.msra.mxu0 %v47
  %2086 = vmatprep.subr.mxu0 0.0
  %2087 = vmatpush1.msra.mxu0 %v48
  %2088 = vmatprep.subr.mxu0 0.0
  %2089 = vmatpush1.msra.mxu0 0.0
  %2090 = vmatprep.subr.mxu0 0.0
  %2091 = vmatpush1.msra.mxu0 0.0
  %2092 = vmatprep.subr.mxu0 0.0
  %2093 = vmatpush1.msra.mxu0 0.0
  %2094 = vmatprep.subr.mxu0 0.0
  %2095 = vmatpush1.msra.mxu0 0.0
  %2096 = vmatprep.subr.mxu0 0.0
  %2097 = vmatpush1.msra.mxu0 0.0
  %2098 = vmatprep.subr.mxu0 0.0
  %2099 = vmatpush1.msra.mxu0 0.0
  %2100 = vmatprep.subr.mxu0 0.0
  %2101 = vmatpush1.msra.mxu0 0.0
  %2102 = vmatprep.subr.mxu0 0.0
  %2103 = vmatpush1.msra.mxu0 0.0
  %2104 = vmatprep.subr.mxu0 0.0
  %2105 = vmatpush1.msra.mxu0 0.0
  %2106 = vmatprep.subr.mxu0 0.0
  %2107 = vmatpush1.msra.mxu0 0.0
  %2108 = vmatprep.subr.mxu0 0.0
  %2109 = vmatpush1.msra.mxu0 0.0
  %2110 = vmatprep.subr.mxu0 0.0
  %2111 = vmatpush1.msra.mxu0 0.0
  %2112 = vmatprep.subr.mxu0 0.0
  %2113 = vmatpush1.msra.mxu0 0.0
  %2114 = vmatprep.subr.mxu0 0.0
  %2115 = vmatpush1.msra.mxu0 0.0
  %2116 = vmatprep.subr.mxu0 0.0
  %2117 = vmatpush1.msra.mxu0 0.0
  %2118 = vmatprep.subr.mxu0 0.0
  %2119 = vmatpush1.msra.mxu0 0.0
  %2120 = vmatprep.subr.mxu0 0.0
  %2121 = vmatpush1.msra.mxu0 0.0
  %2122 = vmatprep.subr.mxu0 0.0
  %2123 = vmatpush1.msra.mxu0 0.0
  %2124 = vmatprep.subr.mxu0 0.0
  %2125 = vmatpush1.msra.mxu0 0.0
  %2126 = vmatprep.subr.mxu0 0.0
  %2127 = vmatpush1.msra.mxu0 0.0
  %2128 = vmatprep.subr.mxu0 0.0
  %2129 = vmatpush1.msra.mxu0 0.0
  %2130 = vmatprep.subr.mxu0 0.0
  %2131 = vmatpush1.msra.mxu0 0.0
  %2132 = vmatprep.subr.mxu0 0.0
  %2133 = vmatpush1.msra.mxu0 0.0
  %2134 = vmatprep.subr.mxu0 0.0
  %2135 = vmatpush1.msra.mxu0 0.0
  %2136 = vmatprep.subr.mxu0 0.0
  %2137 = vmatpush1.msra.mxu0 0.0
  %2138 = vmatprep.subr.mxu0 0.0
  %2139 = vmatpush1.msra.mxu0 0.0
  %2140 = vmatprep.subr.mxu0 0.0
  %2141 = vmatpush1.msra.mxu0 0.0
  %2142 = vmatprep.subr.mxu0 0.0
  %2143 = vmatpush1.msra.mxu0 0.0
  %2144 = vmatprep.mubr.f32.mxu0 0.0
  %2145 = vmatmul.mubr.f32.gmra.mrb[0].mxu0 %v2078
  %v2146 = vpop.f32.mrb[0].mxu0
  %v2147 = vadd.f32 %v2074, %v2146
  %v2148 = vpop.f32.mrb[0].mxu0
  %2149 = vdwg.mxu0
  %v2150 = vadd.f32 %v2147, %v73
  %v2151 = vxor.u32 %v2150, 2147483648
  %v2152 = vmul.f32 %v2151, 1.442695
  %v2153 = vpow.pop %v2152
  %v2154 = vadd.f32 %v2153, 1.0
  %v2155 = vrcp.pop %v2154
  %v2156 = vmul.f32 1.0, %v2155
  %v2157 = vtanh.pop %v2150
  %v2158 = vmul.f32 %v2156, %v1910
  %2160 = vrot.lane.b32.xlu0 %v2157, 64
  %v2161 = vpop.permute.xlu0 %2160
  %v2163 = vmul.f32 %v2156, %v2161
  %2165 = vrot.lane.b32.xlu0 %v2163, 32
  %v2166 = vpop.permute.xlu0 %2165
  %v2168 = vadd.f32 %v2158, %v2166
  %v2169 = vtanh.pop %v2168
  %2171 = vrot.lane.b32.xlu0 %v2169, 64
  %v2172 = vpop.permute.xlu0 %2171
  %v2174 = vmul.f32 %v2156, %v2172
  %2176 = vrot.lane.b32.xlu0 %v2174, 32
  %v2177 = vpop.permute.xlu0 %2176
  %v2178 = vsel %vm85, %v2177, 0
  %2180 = vmatprep.subr.mxu0 0.0
  %2181 = vmatpush1.msra.mxu0 %v57
  %2182 = vmatprep.subr.mxu0 0.0
  %2183 = vmatpush1.msra.mxu0 %v58
  %2184 = vmatprep.subr.mxu0 0.0
  %2185 = vmatpush1.msra.mxu0 %v59
  %2186 = vmatprep.subr.mxu0 0.0
  %2187 = vmatpush1.msra.mxu0 %v60
  %2188 = vmatprep.subr.mxu0 0.0
  %2189 = vmatpush1.msra.mxu0 0.0
  %2190 = vmatprep.subr.mxu0 0.0
  %2191 = vmatpush1.msra.mxu0 0.0
  %2192 = vmatprep.subr.mxu0 0.0
  %2193 = vmatpush1.msra.mxu0 0.0
  %2194 = vmatprep.subr.mxu0 0.0
  %2195 = vmatpush1.msra.mxu0 0.0
  %2196 = vmatprep.subr.mxu0 0.0
  %2197 = vmatpush1.msra.mxu0 0.0
  %2198 = vmatprep.subr.mxu0 0.0
  %2199 = vmatpush1.msra.mxu0 0.0
  %2200 = vmatprep.subr.mxu0 0.0
  %2201 = vmatpush1.msra.mxu0 0.0
  %2202 = vmatprep.subr.mxu0 0.0
  %2203 = vmatpush1.msra.mxu0 0.0
  %2204 = vmatprep.subr.mxu0 0.0
  %2205 = vmatpush1.msra.mxu0 0.0
  %2206 = vmatprep.subr.mxu0 0.0
  %2207 = vmatpush1.msra.mxu0 0.0
  %2208 = vmatprep.subr.mxu0 0.0
  %2209 = vmatpush1.msra.mxu0 0.0
  %2210 = vmatprep.subr.mxu0 0.0
  %2211 = vmatpush1.msra.mxu0 0.0
  %2212 = vmatprep.subr.mxu0 0.0
  %2213 = vmatpush1.msra.mxu0 0.0
  %2214 = vmatprep.subr.mxu0 0.0
  %2215 = vmatpush1.msra.mxu0 0.0
  %2216 = vmatprep.subr.mxu0 0.0
  %2217 = vmatpush1.msra.mxu0 0.0
  %2218 = vmatprep.subr.mxu0 0.0
  %2219 = vmatpush1.msra.mxu0 0.0
  %2220 = vmatprep.subr.mxu0 0.0
  %2221 = vmatpush1.msra.mxu0 0.0
  %2222 = vmatprep.subr.mxu0 0.0
  %2223 = vmatpush1.msra.mxu0 0.0
  %2224 = vmatprep.subr.mxu0 0.0
  %2225 = vmatpush1.msra.mxu0 0.0
  %2226 = vmatprep.subr.mxu0 0.0
  %2227 = vmatpush1.msra.mxu0 0.0
  %2228 = vmatprep.subr.mxu0 0.0
  %2229 = vmatpush1.msra.mxu0 0.0
  %2230 = vmatprep.subr.mxu0 0.0
  %2231 = vmatpush1.msra.mxu0 0.0
  %2232 = vmatprep.subr.mxu0 0.0
  %2233 = vmatpush1.msra.mxu0 0.0
  %2234 = vmatprep.subr.mxu0 0.0
  %2235 = vmatpush1.msra.mxu0 0.0
  %2236 = vmatprep.subr.mxu0 0.0
  %2237 = vmatpush1.msra.mxu0 0.0
  %2238 = vmatprep.subr.mxu0 0.0
  %2239 = vmatpush1.msra.mxu0 0.0
  %2240 = vmatprep.subr.mxu0 0.0
  %2241 = vmatpush1.msra.mxu0 0.0
  %2242 = vmatprep.subr.mxu0 0.0
  %2243 = vmatpush1.msra.mxu0 0.0
  %2244 = vmatprep.mubr.f32.mxu0 0.0
  %2245 = vmatmul.mubr.f32.gmra.mrb[0].mxu0 %v2178
  %v2246 = vpop.f32.mrb[0].mxu0
  %v2247 = vadd.f32 %v80, %v2246
  %v2248 = vpop.f32.mrb[0].mxu0
  %2249 = vdwg.mxu0
  %2250 = vmax.xlane.f32.xlu0 %v2247
  %v2251 = vpop.xlane.xlu0 %2250
  %v2252 = vsub.f32 %v2247, %v2251
  %v2253 = vmul.f32 %v2252, 1.442695
  %v2254 = vpow.pop %v2253
  %2255 = vadd.xlane.f32.xlu0 %v2254
  %v2256 = vpop.xlane.xlu0 %2255
  %v2257 = vlog2.pop %v2256
  %v2258 = vmul.f32 %v2257, 0.6931472
  %v2259 = vadd.f32 %v2251, %v2258
  %v2260 = vsub.f32 %v2247, %v2259
  %s2261 = scalar_lea.vmem %s12, 16
  %2262 = vst [vmem:[%s2261] sm:$0xff] %v2260
  %s2263 = scalar_lea.vmem %s6, 24
  %v2264 = vld [vmem:[%s2263] sm:$0xff]
  %2265 = vmatprep.subr.mxu0 0.0
  %2266 = vmatpush1.msra.mxu0 %v53
  %2267 = vmatprep.subr.mxu0 0.0
  %2268 = vmatpush1.msra.mxu0 %v54
  %2269 = vmatprep.subr.mxu0 0.0
  %2270 = vmatpush1.msra.mxu0 %v55
  %2271 = vmatprep.subr.mxu0 0.0
  %2272 = vmatpush1.msra.mxu0 %v56
  %2273 = vmatprep.subr.mxu0 0.0
  %2274 = vmatpush1.msra.mxu0 0.0
  %2275 = vmatprep.subr.mxu0 0.0
  %2276 = vmatpush1.msra.mxu0 0.0
  %2277 = vmatprep.subr.mxu0 0.0
  %2278 = vmatpush1.msra.mxu0 0.0
  %2279 = vmatprep.subr.mxu0 0.0
  %2280 = vmatpush1.msra.mxu0 0.0
  %2281 = vmatprep.subr.mxu0 0.0
  %2282 = vmatpush1.msra.mxu0 0.0
  %2283 = vmatprep.subr.mxu0 0.0
  %2284 = vmatpush1.msra.mxu0 0.0
  %2285 = vmatprep.subr.mxu0 0.0
  %2286 = vmatpush1.msra.mxu0 0.0
  %2287 = vmatprep.subr.mxu0 0.0
  %2288 = vmatpush1.msra.mxu0 0.0
  %2289 = vmatprep.subr.mxu0 0.0
  %2290 = vmatpush1.msra.mxu0 0.0
  %2291 = vmatprep.subr.mxu0 0.0
  %2292 = vmatpush1.msra.mxu0 0.0
  %2293 = vmatprep.subr.mxu0 0.0
  %2294 = vmatpush1.msra.mxu0 0.0
  %2295 = vmatprep.subr.mxu0 0.0
  %2296 = vmatpush1.msra.mxu0 0.0
  %2297 = vmatprep.subr.mxu0 0.0
  %2298 = vmatpush1.msra.mxu0 0.0
  %2299 = vmatprep.subr.mxu0 0.0
  %2300 = vmatpush1.msra.mxu0 0.0
  %2301 = vmatprep.subr.mxu0 0.0
  %2302 = vmatpush1.msra.mxu0 0.0
  %2303 = vmatprep.subr.mxu0 0.0
  %2304 = vmatpush1.msra.mxu0 0.0
  %2305 = vmatprep.subr.mxu0 0.0
  %2306 = vmatpush1.msra.mxu0 0.0
  %2307 = vmatprep.subr.mxu0 0.0
  %2308 = vmatpush1.msra.mxu0 0.0
  %2309 = vmatprep.subr.mxu0 0.0
  %2310 = vmatpush1.msra.mxu0 0.0
  %2311 = vmatprep.subr.mxu0 0.0
  %2312 = vmatpush1.msra.mxu0 0.0
  %2313 = vmatprep.subr.mxu0 0.0
  %2314 = vmatpush1.msra.mxu0 0.0
  %2315 = vmatprep.subr.mxu0 0.0
  %2316 = vmatpush1.msra.mxu0 0.0
  %2317 = vmatprep.subr.mxu0 0.0
  %2318 = vmatpush1.msra.mxu0 0.0
  %2319 = vmatprep.subr.mxu0 0.0
  %2320 = vmatpush1.msra.mxu0 0.0
  %2321 = vmatprep.subr.mxu0 0.0
  %2322 = vmatpush1.msra.mxu0 0.0
  %2323 = vmatprep.subr.mxu0 0.0
  %2324 = vmatpush1.msra.mxu0 0.0
  %2325 = vmatprep.subr.mxu0 0.0
  %2326 = vmatpush1.msra.mxu0 0.0
  %2327 = vmatprep.subr.mxu0 0.0
  %2328 = vmatpush1.msra.mxu0 0.0
  %2329 = vmatprep.mubr.f32.mxu0 0.0
  %2330 = vmatmul.mubr.f32.gmra.mrb[0].mxu0 %v2178
  %v2331 = vpop.f32.mrb[0].mxu0
  %v2332 = vadd.f32 0.0, %v2331
  %v2333 = vpop.f32.mrb[0].mxu0
  %2334 = vdwg.mxu0
  %v2336 = vsel %vm85, %v2264, 0
  %2338 = vmatprep.subr.mxu0 0.0
  %2339 = vmatpush1.msra.mxu0 %v45
  %2340 = vmatprep.subr.mxu0 0.0
  %2341 = vmatpush1.msra.mxu0 %v46
  %2342 = vmatprep.subr.mxu0 0.0
  %2343 = vmatpush1.msra.mxu0 %v47
  %2344 = vmatprep.subr.mxu0 0.0
  %2345 = vmatpush1.msra.mxu0 %v48
  %2346 = vmatprep.subr.mxu0 0.0
  %2347 = vmatpush1.msra.mxu0 0.0
  %2348 = vmatprep.subr.mxu0 0.0
  %2349 = vmatpush1.msra.mxu0 0.0
  %2350 = vmatprep.subr.mxu0 0.0
  %2351 = vmatpush1.msra.mxu0 0.0
  %2352 = vmatprep.subr.mxu0 0.0
  %2353 = vmatpush1.msra.mxu0 0.0
  %2354 = vmatprep.subr.mxu0 0.0
  %2355 = vmatpush1.msra.mxu0 0.0
  %2356 = vmatprep.subr.mxu0 0.0
  %2357 = vmatpush1.msra.mxu0 0.0
  %2358 = vmatprep.subr.mxu0 0.0
  %2359 = vmatpush1.msra.mxu0 0.0
  %2360 = vmatprep.subr.mxu0 0.0
  %2361 = vmatpush1.msra.mxu0 0.0
  %2362 = vmatprep.subr.mxu0 0.0
  %2363 = vmatpush1.msra.mxu0 0.0
  %2364 = vmatprep.subr.mxu0 0.0
  %2365 = vmatpush1.msra.mxu0 0.0
  %2366 = vmatprep.subr.mxu0 0.0
  %2367 = vmatpush1.msra.mxu0 0.0
  %2368 = vmatprep.subr.mxu0 0.0
  %2369 = vmatpush1.msra.mxu0 0.0
  %2370 = vmatprep.subr.mxu0 0.0
  %2371 = vmatpush1.msra.mxu0 0.0
  %2372 = vmatprep.subr.mxu0 0.0
  %2373 = vmatpush1.msra.mxu0 0.0
  %2374 = vmatprep.subr.mxu0 0.0
  %2375 = vmatpush1.msra.mxu0 0.0
  %2376 = vmatprep.subr.mxu0 0.0
  %2377 = vmatpush1.msra.mxu0 0.0
  %2378 = vmatprep.subr.mxu0 0.0
  %2379 = vmatpush1.msra.mxu0 0.0
  %2380 = vmatprep.subr.mxu0 0.0
  %2381 = vmatpush1.msra.mxu0 0.0
  %2382 = vmatprep.subr.mxu0 0.0
  %2383 = vmatpush1.msra.mxu0 0.0
  %2384 = vmatprep.subr.mxu0 0.0
  %2385 = vmatpush1.msra.mxu0 0.0
  %2386 = vmatprep.subr.mxu0 0.0
  %2387 = vmatpush1.msra.mxu0 0.0
  %2388 = vmatprep.subr.mxu0 0.0
  %2389 = vmatpush1.msra.mxu0 0.0
  %2390 = vmatprep.subr.mxu0 0.0
  %2391 = vmatpush1.msra.mxu0 0.0
  %2392 = vmatprep.subr.mxu0 0.0
  %2393 = vmatpush1.msra.mxu0 0.0
  %2394 = vmatprep.subr.mxu0 0.0
  %2395 = vmatpush1.msra.mxu0 0.0
  %2396 = vmatprep.subr.mxu0 0.0
  %2397 = vmatpush1.msra.mxu0 0.0
  %2398 = vmatprep.subr.mxu0 0.0
  %2399 = vmatpush1.msra.mxu0 0.0
  %2400 = vmatprep.subr.mxu0 0.0
  %2401 = vmatpush1.msra.mxu0 0.0
  %2402 = vmatprep.mubr.f32.mxu0 0.0
  %2403 = vmatmul.mubr.f32.gmra.mrb[0].mxu0 %v2336
  %v2404 = vpop.f32.mrb[0].mxu0
  %v2405 = vadd.f32 %v2332, %v2404
  %v2406 = vpop.f32.mrb[0].mxu0
  %2407 = vdwg.mxu0
  %v2408 = vadd.f32 %v2405, %v73
  %v2409 = vxor.u32 %v2408, 2147483648
  %v2410 = vmul.f32 %v2409, 1.442695
  %v2411 = vpow.pop %v2410
  %v2412 = vadd.f32 %v2411, 1.0
  %v2413 = vrcp.pop %v2412
  %v2414 = vmul.f32 1.0, %v2413
  %v2415 = vtanh.pop %v2408
  %v2416 = vmul.f32 %v2414, %v2168
  %2418 = vrot.lane.b32.xlu0 %v2415, 64
  %v2419 = vpop.permute.xlu0 %2418
  %v2421 = vmul.f32 %v2414, %v2419
  %2423 = vrot.lane.b32.xlu0 %v2421, 32
  %v2424 = vpop.permute.xlu0 %2423
  %v2426 = vadd.f32 %v2416, %v2424
  %v2427 = vtanh.pop %v2426
  %2429 = vrot.lane.b32.xlu0 %v2427, 64
  %v2430 = vpop.permute.xlu0 %2429
  %v2432 = vmul.f32 %v2414, %v2430
  %2434 = vrot.lane.b32.xlu0 %v2432, 32
  %v2435 = vpop.permute.xlu0 %2434
  %v2436 = vsel %vm85, %v2435, 0
  %2438 = vmatprep.subr.mxu0 0.0
  %2439 = vmatpush1.msra.mxu0 %v57
  %2440 = vmatprep.subr.mxu0 0.0
  %2441 = vmatpush1.msra.mxu0 %v58
  %2442 = vmatprep.subr.mxu0 0.0
  %2443 = vmatpush1.msra.mxu0 %v59
  %2444 = vmatprep.subr.mxu0 0.0
  %2445 = vmatpush1.msra.mxu0 %v60
  %2446 = vmatprep.subr.mxu0 0.0
  %2447 = vmatpush1.msra.mxu0 0.0
  %2448 = vmatprep.subr.mxu0 0.0
  %2449 = vmatpush1.msra.mxu0 0.0
  %2450 = vmatprep.subr.mxu0 0.0
  %2451 = vmatpush1.msra.mxu0 0.0
  %2452 = vmatprep.subr.mxu0 0.0
  %2453 = vmatpush1.msra.mxu0 0.0
  %2454 = vmatprep.subr.mxu0 0.0
  %2455 = vmatpush1.msra.mxu0 0.0
  %2456 = vmatprep.subr.mxu0 0.0
  %2457 = vmatpush1.msra.mxu0 0.0
  %2458 = vmatprep.subr.mxu0 0.0
  %2459 = vmatpush1.msra.mxu0 0.0
  %2460 = vmatprep.subr.mxu0 0.0
  %2461 = vmatpush1.msra.mxu0 0.0
  %2462 = vmatprep.subr.mxu0 0.0
  %2463 = vmatpush1.msra.mxu0 0.0
  %2464 = vmatprep.subr.mxu0 0.0
  %2465 = vmatpush1.msra.mxu0 0.0
  %2466 = vmatprep.subr.mxu0 0.0
  %2467 = vmatpush1.msra.mxu0 0.0
  %2468 = vmatprep.subr.mxu0 0.0
  %2469 = vmatpush1.msra.mxu0 0.0
  %2470 = vmatprep.subr.mxu0 0.0
  %2471 = vmatpush1.msra.mxu0 0.0
  %2472 = vmatprep.subr.mxu0 0.0
  %2473 = vmatpush1.msra.mxu0 0.0
  %2474 = vmatprep.subr.mxu0 0.0
  %2475 = vmatpush1.msra.mxu0 0.0
  %2476 = vmatprep.subr.mxu0 0.0
  %2477 = vmatpush1.msra.mxu0 0.0
  %2478 = vmatprep.subr.mxu0 0.0
  %2479 = vmatpush1.msra.mxu0 0.0
  %2480 = vmatprep.subr.mxu0 0.0
  %2481 = vmatpush1.msra.mxu0 0.0
  %2482 = vmatprep.subr.mxu0 0.0
  %2483 = vmatpush1.msra.mxu0 0.0
  %2484 = vmatprep.subr.mxu0 0.0
  %2485 = vmatpush1.msra.mxu0 0.0
  %2486 = vmatprep.subr.mxu0 0.0
  %2487 = vmatpush1.msra.mxu0 0.0
  %2488 = vmatprep.subr.mxu0 0.0
  %2489 = vmatpush1.msra.mxu0 0.0
  %2490 = vmatprep.subr.mxu0 0.0
  %2491 = vmatpush1.msra.mxu0 0.0
  %2492 = vmatprep.subr.mxu0 0.0
  %2493 = vmatpush1.msra.mxu0 0.0
  %2494 = vmatprep.subr.mxu0 0.0
  %2495 = vmatpush1.msra.mxu0 0.0
  %2496 = vmatprep.subr.mxu0 0.0
  %2497 = vmatpush1.msra.mxu0 0.0
  %2498 = vmatprep.subr.mxu0 0.0
  %2499 = vmatpush1.msra.mxu0 0.0
  %2500 = vmatprep.subr.mxu0 0.0
  %2501 = vmatpush1.msra.mxu0 0.0
  %2502 = vmatprep.mubr.f32.mxu0 0.0
  %2503 = vmatmul.mubr.f32.gmra.mrb[0].mxu0 %v2436
  %v2504 = vpop.f32.mrb[0].mxu0
  %v2505 = vadd.f32 %v80, %v2504
  %v2506 = vpop.f32.mrb[0].mxu0
  %2507 = vdwg.mxu0
  %2508 = vmax.xlane.f32.xlu0 %v2505
  %v2509 = vpop.xlane.xlu0 %2508
  %v2510 = vsub.f32 %v2505, %v2509
  %v2511 = vmul.f32 %v2510, 1.442695
  %v2512 = vpow.pop %v2511
  %2513 = vadd.xlane.f32.xlu0 %v2512
  %v2514 = vpop.xlane.xlu0 %2513
  %v2515 = vlog2.pop %v2514
  %v2516 = vmul.f32 %v2515, 0.6931472
  %v2517 = vadd.f32 %v2509, %v2516
  %v2518 = vsub.f32 %v2505, %v2517
  %s2519 = scalar_lea.vmem %s12, 24
  %2520 = vst [vmem:[%s2519] sm:$0xff] %v2518
  %s2521 = scalar_lea.vmem %s6, 32
  %v2522 = vld [vmem:[%s2521] sm:$0xff]
  %2523 = vmatprep.subr.mxu0 0.0
  %2524 = vmatpush1.msra.mxu0 %v53
  %2525 = vmatprep.subr.mxu0 0.0
  %2526 = vmatpush1.msra.mxu0 %v54
  %2527 = vmatprep.subr.mxu0 0.0
  %2528 = vmatpush1.msra.mxu0 %v55
  %2529 = vmatprep.subr.mxu0 0.0
  %2530 = vmatpush1.msra.mxu0 %v56
  %2531 = vmatprep.subr.mxu0 0.0
  %2532 = vmatpush1.msra.mxu0 0.0
  %2533 = vmatprep.subr.mxu0 0.0
  %2534 = vmatpush1.msra.mxu0 0.0
  %2535 = vmatprep.subr.mxu0 0.0
  %2536 = vmatpush1.msra.mxu0 0.0
  %2537 = vmatprep.subr.mxu0 0.0
  %2538 = vmatpush1.msra.mxu0 0.0
  %2539 = vmatprep.subr.mxu0 0.0
  %2540 = vmatpush1.msra.mxu0 0.0
  %2541 = vmatprep.subr.mxu0 0.0
  %2542 = vmatpush1.msra.mxu0 0.0
  %2543 = vmatprep.subr.mxu0 0.0
  %2544 = vmatpush1.msra.mxu0 0.0
  %2545 = vmatprep.subr.mxu0 0.0
  %2546 = vmatpush1.msra.mxu0 0.0
  %2547 = vmatprep.subr.mxu0 0.0
  %2548 = vmatpush1.msra.mxu0 0.0
  %2549 = vmatprep.subr.mxu0 0.0
  %2550 = vmatpush1.msra.mxu0 0.0
  %2551 = vmatprep.subr.mxu0 0.0
  %2552 = vmatpush1.msra.mxu0 0.0
  %2553 = vmatprep.subr.mxu0 0.0
  %2554 = vmatpush1.msra.mxu0 0.0
  %2555 = vmatprep.subr.mxu0 0.0
  %2556 = vmatpush1.msra.mxu0 0.0
  %2557 = vmatprep.subr.mxu0 0.0
  %2558 = vmatpush1.msra.mxu0 0.0
  %2559 = vmatprep.subr.mxu0 0.0
  %2560 = vmatpush1.msra.mxu0 0.0
  %2561 = vmatprep.subr.mxu0 0.0
  %2562 = vmatpush1.msra.mxu0 0.0
  %2563 = vmatprep.subr.mxu0 0.0
  %2564 = vmatpush1.msra.mxu0 0.0
  %2565 = vmatprep.subr.mxu0 0.0
  %2566 = vmatpush1.msra.mxu0 0.0
  %2567 = vmatprep.subr.mxu0 0.0
  %2568 = vmatpush1.msra.mxu0 0.0
  %2569 = vmatprep.subr.mxu0 0.0
  %2570 = vmatpush1.msra.mxu0 0.0
  %2571 = vmatprep.subr.mxu0 0.0
  %2572 = vmatpush1.msra.mxu0 0.0
  %2573 = vmatprep.subr.mxu0 0.0
  %2574 = vmatpush1.msra.mxu0 0.0
  %2575 = vmatprep.subr.mxu0 0.0
  %2576 = vmatpush1.msra.mxu0 0.0
  %2577 = vmatprep.subr.mxu0 0.0
  %2578 = vmatpush1.msra.mxu0 0.0
  %2579 = vmatprep.subr.mxu0 0.0
  %2580 = vmatpush1.msra.mxu0 0.0
  %2581 = vmatprep.subr.mxu0 0.0
  %2582 = vmatpush1.msra.mxu0 0.0
  %2583 = vmatprep.subr.mxu0 0.0
  %2584 = vmatpush1.msra.mxu0 0.0
  %2585 = vmatprep.subr.mxu0 0.0
  %2586 = vmatpush1.msra.mxu0 0.0
  %2587 = vmatprep.mubr.f32.mxu0 0.0
  %2588 = vmatmul.mubr.f32.gmra.mrb[0].mxu0 %v2436
  %v2589 = vpop.f32.mrb[0].mxu0
  %v2590 = vadd.f32 0.0, %v2589
  %v2591 = vpop.f32.mrb[0].mxu0
  %2592 = vdwg.mxu0
  %v2594 = vsel %vm85, %v2522, 0
  %2596 = vmatprep.subr.mxu0 0.0
  %2597 = vmatpush1.msra.mxu0 %v45
  %2598 = vmatprep.subr.mxu0 0.0
  %2599 = vmatpush1.msra.mxu0 %v46
  %2600 = vmatprep.subr.mxu0 0.0
  %2601 = vmatpush1.msra.mxu0 %v47
  %2602 = vmatprep.subr.mxu0 0.0
  %2603 = vmatpush1.msra.mxu0 %v48
  %2604 = vmatprep.subr.mxu0 0.0
  %2605 = vmatpush1.msra.mxu0 0.0
  %2606 = vmatprep.subr.mxu0 0.0
  %2607 = vmatpush1.msra.mxu0 0.0
  %2608 = vmatprep.subr.mxu0 0.0
  %2609 = vmatpush1.msra.mxu0 0.0
  %2610 = vmatprep.subr.mxu0 0.0
  %2611 = vmatpush1.msra.mxu0 0.0
  %2612 = vmatprep.subr.mxu0 0.0
  %2613 = vmatpush1.msra.mxu0 0.0
  %2614 = vmatprep.subr.mxu0 0.0
  %2615 = vmatpush1.msra.mxu0 0.0
  %2616 = vmatprep.subr.mxu0 0.0
  %2617 = vmatpush1.msra.mxu0 0.0
  %2618 = vmatprep.subr.mxu0 0.0
  %2619 = vmatpush1.msra.mxu0 0.0
  %2620 = vmatprep.subr.mxu0 0.0
  %2621 = vmatpush1.msra.mxu0 0.0
  %2622 = vmatprep.subr.mxu0 0.0
  %2623 = vmatpush1.msra.mxu0 0.0
  %2624 = vmatprep.subr.mxu0 0.0
  %2625 = vmatpush1.msra.mxu0 0.0
  %2626 = vmatprep.subr.mxu0 0.0
  %2627 = vmatpush1.msra.mxu0 0.0
  %2628 = vmatprep.subr.mxu0 0.0
  %2629 = vmatpush1.msra.mxu0 0.0
  %2630 = vmatprep.subr.mxu0 0.0
  %2631 = vmatpush1.msra.mxu0 0.0
  %2632 = vmatprep.subr.mxu0 0.0
  %2633 = vmatpush1.msra.mxu0 0.0
  %2634 = vmatprep.subr.mxu0 0.0
  %2635 = vmatpush1.msra.mxu0 0.0
  %2636 = vmatprep.subr.mxu0 0.0
  %2637 = vmatpush1.msra.mxu0 0.0
  %2638 = vmatprep.subr.mxu0 0.0
  %2639 = vmatpush1.msra.mxu0 0.0
  %2640 = vmatprep.subr.mxu0 0.0
  %2641 = vmatpush1.msra.mxu0 0.0
  %2642 = vmatprep.subr.mxu0 0.0
  %2643 = vmatpush1.msra.mxu0 0.0
  %2644 = vmatprep.subr.mxu0 0.0
  %2645 = vmatpush1.msra.mxu0 0.0
  %2646 = vmatprep.subr.mxu0 0.0
  %2647 = vmatpush1.msra.mxu0 0.0
  %2648 = vmatprep.subr.mxu0 0.0
  %2649 = vmatpush1.msra.mxu0 0.0
  %2650 = vmatprep.subr.mxu0 0.0
  %2651 = vmatpush1.msra.mxu0 0.0
  %2652 = vmatprep.subr.mxu0 0.0
  %2653 = vmatpush1.msra.mxu0 0.0
  %2654 = vmatprep.subr.mxu0 0.0
  %2655 = vmatpush1.msra.mxu0 0.0
  %2656 = vmatprep.subr.mxu0 0.0
  %2657 = vmatpush1.msra.mxu0 0.0
  %2658 = vmatprep.subr.mxu0 0.0
  %2659 = vmatpush1.msra.mxu0 0.0
  %2660 = vmatprep.mubr.f32.mxu0 0.0
  %2661 = vmatmul.mubr.f32.gmra.mrb[0].mxu0 %v2594
  %v2662 = vpop.f32.mrb[0].mxu0
  %v2663 = vadd.f32 %v2590, %v2662
  %v2664 = vpop.f32.mrb[0].mxu0
  %2665 = vdwg.mxu0
  %v2666 = vadd.f32 %v2663, %v73
  %v2667 = vxor.u32 %v2666, 2147483648
  %v2668 = vmul.f32 %v2667, 1.442695
  %v2669 = vpow.pop %v2668
  %v2670 = vadd.f32 %v2669, 1.0
  %v2671 = vrcp.pop %v2670
  %v2672 = vmul.f32 1.0, %v2671
  %v2673 = vtanh.pop %v2666
  %v2674 = vmul.f32 %v2672, %v2426
  %2676 = vrot.lane.b32.xlu0 %v2673, 64
  %v2677 = vpop.permute.xlu0 %2676
  %v2679 = vmul.f32 %v2672, %v2677
  %2681 = vrot.lane.b32.xlu0 %v2679, 32
  %v2682 = vpop.permute.xlu0 %2681
  %v2684 = vadd.f32 %v2674, %v2682
  %v2685 = vtanh.pop %v2684
  %2687 = vrot.lane.b32.xlu0 %v2685, 64
  %v2688 = vpop.permute.xlu0 %2687
  %v2690 = vmul.f32 %v2672, %v2688
  %2692 = vrot.lane.b32.xlu0 %v2690, 32
  %v2693 = vpop.permute.xlu0 %2692
  %v2694 = vsel %vm85, %v2693, 0
  %2696 = vmatprep.subr.mxu0 0.0
  %2697 = vmatpush1.msra.mxu0 %v57
  %2698 = vmatprep.subr.mxu0 0.0
  %2699 = vmatpush1.msra.mxu0 %v58
  %2700 = vmatprep.subr.mxu0 0.0
  %2701 = vmatpush1.msra.mxu0 %v59
  %2702 = vmatprep.subr.mxu0 0.0
  %2703 = vmatpush1.msra.mxu0 %v60
  %2704 = vmatprep.subr.mxu0 0.0
  %2705 = vmatpush1.msra.mxu0 0.0
  %2706 = vmatprep.subr.mxu0 0.0
  %2707 = vmatpush1.msra.mxu0 0.0
  %2708 = vmatprep.subr.mxu0 0.0
  %2709 = vmatpush1.msra.mxu0 0.0
  %2710 = vmatprep.subr.mxu0 0.0
  %2711 = vmatpush1.msra.mxu0 0.0
  %2712 = vmatprep.subr.mxu0 0.0
  %2713 = vmatpush1.msra.mxu0 0.0
  %2714 = vmatprep.subr.mxu0 0.0
  %2715 = vmatpush1.msra.mxu0 0.0
  %2716 = vmatprep.subr.mxu0 0.0
  %2717 = vmatpush1.msra.mxu0 0.0
  %2718 = vmatprep.subr.mxu0 0.0
  %2719 = vmatpush1.msra.mxu0 0.0
  %2720 = vmatprep.subr.mxu0 0.0
  %2721 = vmatpush1.msra.mxu0 0.0
  %2722 = vmatprep.subr.mxu0 0.0
  %2723 = vmatpush1.msra.mxu0 0.0
  %2724 = vmatprep.subr.mxu0 0.0
  %2725 = vmatpush1.msra.mxu0 0.0
  %2726 = vmatprep.subr.mxu0 0.0
  %2727 = vmatpush1.msra.mxu0 0.0
  %2728 = vmatprep.subr.mxu0 0.0
  %2729 = vmatpush1.msra.mxu0 0.0
  %2730 = vmatprep.subr.mxu0 0.0
  %2731 = vmatpush1.msra.mxu0 0.0
  %2732 = vmatprep.subr.mxu0 0.0
  %2733 = vmatpush1.msra.mxu0 0.0
  %2734 = vmatprep.subr.mxu0 0.0
  %2735 = vmatpush1.msra.mxu0 0.0
  %2736 = vmatprep.subr.mxu0 0.0
  %2737 = vmatpush1.msra.mxu0 0.0
  %2738 = vmatprep.subr.mxu0 0.0
  %2739 = vmatpush1.msra.mxu0 0.0
  %2740 = vmatprep.subr.mxu0 0.0
  %2741 = vmatpush1.msra.mxu0 0.0
  %2742 = vmatprep.subr.mxu0 0.0
  %2743 = vmatpush1.msra.mxu0 0.0
  %2744 = vmatprep.subr.mxu0 0.0
  %2745 = vmatpush1.msra.mxu0 0.0
  %2746 = vmatprep.subr.mxu0 0.0
  %2747 = vmatpush1.msra.mxu0 0.0
  %2748 = vmatprep.subr.mxu0 0.0
  %2749 = vmatpush1.msra.mxu0 0.0
  %2750 = vmatprep.subr.mxu0 0.0
  %2751 = vmatpush1.msra.mxu0 0.0
  %2752 = vmatprep.subr.mxu0 0.0
  %2753 = vmatpush1.msra.mxu0 0.0
  %2754 = vmatprep.subr.mxu0 0.0
  %2755 = vmatpush1.msra.mxu0 0.0
  %2756 = vmatprep.subr.mxu0 0.0
  %2757 = vmatpush1.msra.mxu0 0.0
  %2758 = vmatprep.subr.mxu0 0.0
  %2759 = vmatpush1.msra.mxu0 0.0
  %2760 = vmatprep.mubr.f32.mxu0 0.0
  %2761 = vmatmul.mubr.f32.gmra.mrb[0].mxu0 %v2694
  %v2762 = vpop.f32.mrb[0].mxu0
  %v2763 = vadd.f32 %v80, %v2762
  %v2764 = vpop.f32.mrb[0].mxu0
  %2765 = vdwg.mxu0
  %2766 = vmax.xlane.f32.xlu0 %v2763
  %v2767 = vpop.xlane.xlu0 %2766
  %v2768 = vsub.f32 %v2763, %v2767
  %v2769 = vmul.f32 %v2768, 1.442695
  %v2770 = vpow.pop %v2769
  %2771 = vadd.xlane.f32.xlu0 %v2770
  %v2772 = vpop.xlane.xlu0 %2771
  %v2773 = vlog2.pop %v2772
  %v2774 = vmul.f32 %v2773, 0.6931472
  %v2775 = vadd.f32 %v2767, %v2774
  %v2776 = vsub.f32 %v2763, %v2775
  %s2777 = scalar_lea.vmem %s12, 32
  %2778 = vst [vmem:[%s2777] sm:$0xff] %v2776
  %s2779 = scalar_lea.vmem %s6, 40
  %v2780 = vld [vmem:[%s2779] sm:$0xff]
  %2781 = vmatprep.subr.mxu0 0.0
  %2782 = vmatpush1.msra.mxu0 %v53
  %2783 = vmatprep.subr.mxu0 0.0
  %2784 = vmatpush1.msra.mxu0 %v54
  %2785 = vmatprep.subr.mxu0 0.0
  %2786 = vmatpush1.msra.mxu0 %v55
  %2787 = vmatprep.subr.mxu0 0.0
  %2788 = vmatpush1.msra.mxu0 %v56
  %2789 = vmatprep.subr.mxu0 0.0
  %2790 = vmatpush1.msra.mxu0 0.0
  %2791 = vmatprep.subr.mxu0 0.0
  %2792 = vmatpush1.msra.mxu0 0.0
  %2793 = vmatprep.subr.mxu0 0.0
  %2794 = vmatpush1.msra.mxu0 0.0
  %2795 = vmatprep.subr.mxu0 0.0
  %2796 = vmatpush1.msra.mxu0 0.0
  %2797 = vmatprep.subr.mxu0 0.0
  %2798 = vmatpush1.msra.mxu0 0.0
  %2799 = vmatprep.subr.mxu0 0.0
  %2800 = vmatpush1.msra.mxu0 0.0
  %2801 = vmatprep.subr.mxu0 0.0
  %2802 = vmatpush1.msra.mxu0 0.0
  %2803 = vmatprep.subr.mxu0 0.0
  %2804 = vmatpush1.msra.mxu0 0.0
  %2805 = vmatprep.subr.mxu0 0.0
  %2806 = vmatpush1.msra.mxu0 0.0
  %2807 = vmatprep.subr.mxu0 0.0
  %2808 = vmatpush1.msra.mxu0 0.0
  %2809 = vmatprep.subr.mxu0 0.0
  %2810 = vmatpush1.msra.mxu0 0.0
  %2811 = vmatprep.subr.mxu0 0.0
  %2812 = vmatpush1.msra.mxu0 0.0
  %2813 = vmatprep.subr.mxu0 0.0
  %2814 = vmatpush1.msra.mxu0 0.0
  %2815 = vmatprep.subr.mxu0 0.0
  %2816 = vmatpush1.msra.mxu0 0.0
  %2817 = vmatprep.subr.mxu0 0.0
  %2818 = vmatpush1.msra.mxu0 0.0
  %2819 = vmatprep.subr.mxu0 0.0
  %2820 = vmatpush1.msra.mxu0 0.0
  %2821 = vmatprep.subr.mxu0 0.0
  %2822 = vmatpush1.msra.mxu0 0.0
  %2823 = vmatprep.subr.mxu0 0.0
  %2824 = vmatpush1.msra.mxu0 0.0
  %2825 = vmatprep.subr.mxu0 0.0
  %2826 = vmatpush1.msra.mxu0 0.0
  %2827 = vmatprep.subr.mxu0 0.0
  %2828 = vmatpush1.msra.mxu0 0.0
  %2829 = vmatprep.subr.mxu0 0.0
  %2830 = vmatpush1.msra.mxu0 0.0
  %2831 = vmatprep.subr.mxu0 0.0
  %2832 = vmatpush1.msra.mxu0 0.0
  %2833 = vmatprep.subr.mxu0 0.0
  %2834 = vmatpush1.msra.mxu0 0.0
  %2835 = vmatprep.subr.mxu0 0.0
  %2836 = vmatpush1.msra.mxu0 0.0
  %2837 = vmatprep.subr.mxu0 0.0
  %2838 = vmatpush1.msra.mxu0 0.0
  %2839 = vmatprep.subr.mxu0 0.0
  %2840 = vmatpush1.msra.mxu0 0.0
  %2841 = vmatprep.subr.mxu0 0.0
  %2842 = vmatpush1.msra.mxu0 0.0
  %2843 = vmatprep.subr.mxu0 0.0
  %2844 = vmatpush1.msra.mxu0 0.0
  %2845 = vmatprep.mubr.f32.mxu0 0.0
  %2846 = vmatmul.mubr.f32.gmra.mrb[0].mxu0 %v2694
  %v2847 = vpop.f32.mrb[0].mxu0
  %v2848 = vadd.f32 0.0, %v2847
  %v2849 = vpop.f32.mrb[0].mxu0
  %2850 = vdwg.mxu0
  %v2852 = vsel %vm85, %v2780, 0
  %2854 = vmatprep.subr.mxu0 0.0
  %2855 = vmatpush1.msra.mxu0 %v45
  %2856 = vmatprep.subr.mxu0 0.0
  %2857 = vmatpush1.msra.mxu0 %v46
  %2858 = vmatprep.subr.mxu0 0.0
  %2859 = vmatpush1.msra.mxu0 %v47
  %2860 = vmatprep.subr.mxu0 0.0
  %2861 = vmatpush1.msra.mxu0 %v48
  %2862 = vmatprep.subr.mxu0 0.0
  %2863 = vmatpush1.msra.mxu0 0.0
  %2864 = vmatprep.subr.mxu0 0.0
  %2865 = vmatpush1.msra.mxu0 0.0
  %2866 = vmatprep.subr.mxu0 0.0
  %2867 = vmatpush1.msra.mxu0 0.0
  %2868 = vmatprep.subr.mxu0 0.0
  %2869 = vmatpush1.msra.mxu0 0.0
  %2870 = vmatprep.subr.mxu0 0.0
  %2871 = vmatpush1.msra.mxu0 0.0
  %2872 = vmatprep.subr.mxu0 0.0
  %2873 = vmatpush1.msra.mxu0 0.0
  %2874 = vmatprep.subr.mxu0 0.0
  %2875 = vmatpush1.msra.mxu0 0.0
  %2876 = vmatprep.subr.mxu0 0.0
  %2877 = vmatpush1.msra.mxu0 0.0
  %2878 = vmatprep.subr.mxu0 0.0
  %2879 = vmatpush1.msra.mxu0 0.0
  %2880 = vmatprep.subr.mxu0 0.0
  %2881 = vmatpush1.msra.mxu0 0.0
  %2882 = vmatprep.subr.mxu0 0.0
  %2883 = vmatpush1.msra.mxu0 0.0
  %2884 = vmatprep.subr.mxu0 0.0
  %2885 = vmatpush1.msra.mxu0 0.0
  %2886 = vmatprep.subr.mxu0 0.0
  %2887 = vmatpush1.msra.mxu0 0.0
  %2888 = vmatprep.subr.mxu0 0.0
  %2889 = vmatpush1.msra.mxu0 0.0
  %2890 = vmatprep.subr.mxu0 0.0
  %2891 = vmatpush1.msra.mxu0 0.0
  %2892 = vmatprep.subr.mxu0 0.0
  %2893 = vmatpush1.msra.mxu0 0.0
  %2894 = vmatprep.subr.mxu0 0.0
  %2895 = vmatpush1.msra.mxu0 0.0
  %2896 = vmatprep.subr.mxu0 0.0
  %2897 = vmatpush1.msra.mxu0 0.0
  %2898 = vmatprep.subr.mxu0 0.0
  %2899 = vmatpush1.msra.mxu0 0.0
  %2900 = vmatprep.subr.mxu0 0.0
  %2901 = vmatpush1.msra.mxu0 0.0
  %2902 = vmatprep.subr.mxu0 0.0
  %2903 = vmatpush1.msra.mxu0 0.0
  %2904 = vmatprep.subr.mxu0 0.0
  %2905 = vmatpush1.msra.mxu0 0.0
  %2906 = vmatprep.subr.mxu0 0.0
  %2907 = vmatpush1.msra.mxu0 0.0
  %2908 = vmatprep.subr.mxu0 0.0
  %2909 = vmatpush1.msra.mxu0 0.0
  %2910 = vmatprep.subr.mxu0 0.0
  %2911 = vmatpush1.msra.mxu0 0.0
  %2912 = vmatprep.subr.mxu0 0.0
  %2913 = vmatpush1.msra.mxu0 0.0
  %2914 = vmatprep.subr.mxu0 0.0
  %2915 = vmatpush1.msra.mxu0 0.0
  %2916 = vmatprep.subr.mxu0 0.0
  %2917 = vmatpush1.msra.mxu0 0.0
  %2918 = vmatprep.mubr.f32.mxu0 0.0
  %2919 = vmatmul.mubr.f32.gmra.mrb[0].mxu0 %v2852
  %v2920 = vpop.f32.mrb[0].mxu0
  %v2921 = vadd.f32 %v2848, %v2920
  %v2922 = vpop.f32.mrb[0].mxu0
  %2923 = vdwg.mxu0
  %v2924 = vadd.f32 %v2921, %v73
  %v2925 = vxor.u32 %v2924, 2147483648
  %v2926 = vmul.f32 %v2925, 1.442695
  %v2927 = vpow.pop %v2926
  %v2928 = vadd.f32 %v2927, 1.0
  %v2929 = vrcp.pop %v2928
  %v2930 = vmul.f32 1.0, %v2929
  %v2931 = vtanh.pop %v2924
  %v2932 = vmul.f32 %v2930, %v2684
  %2934 = vrot.lane.b32.xlu0 %v2931, 64
  %v2935 = vpop.permute.xlu0 %2934
  %v2937 = vmul.f32 %v2930, %v2935
  %2939 = vrot.lane.b32.xlu0 %v2937, 32
  %v2940 = vpop.permute.xlu0 %2939
  %v2942 = vadd.f32 %v2932, %v2940
  %v2943 = vtanh.pop %v2942
  %2945 = vrot.lane.b32.xlu0 %v2943, 64
  %v2946 = vpop.permute.xlu0 %2945
  %v2948 = vmul.f32 %v2930, %v2946
  %2950 = vrot.lane.b32.xlu0 %v2948, 32
  %v2951 = vpop.permute.xlu0 %2950
  %v2952 = vsel %vm85, %v2951, 0
  %2954 = vmatprep.subr.mxu0 0.0
  %2955 = vmatpush1.msra.mxu0 %v57
  %2956 = vmatprep.subr.mxu0 0.0
  %2957 = vmatpush1.msra.mxu0 %v58
  %2958 = vmatprep.subr.mxu0 0.0
  %2959 = vmatpush1.msra.mxu0 %v59
  %2960 = vmatprep.subr.mxu0 0.0
  %2961 = vmatpush1.msra.mxu0 %v60
  %2962 = vmatprep.subr.mxu0 0.0
  %2963 = vmatpush1.msra.mxu0 0.0
  %2964 = vmatprep.subr.mxu0 0.0
  %2965 = vmatpush1.msra.mxu0 0.0
  %2966 = vmatprep.subr.mxu0 0.0
  %2967 = vmatpush1.msra.mxu0 0.0
  %2968 = vmatprep.subr.mxu0 0.0
  %2969 = vmatpush1.msra.mxu0 0.0
  %2970 = vmatprep.subr.mxu0 0.0
  %2971 = vmatpush1.msra.mxu0 0.0
  %2972 = vmatprep.subr.mxu0 0.0
  %2973 = vmatpush1.msra.mxu0 0.0
  %2974 = vmatprep.subr.mxu0 0.0
  %2975 = vmatpush1.msra.mxu0 0.0
  %2976 = vmatprep.subr.mxu0 0.0
  %2977 = vmatpush1.msra.mxu0 0.0
  %2978 = vmatprep.subr.mxu0 0.0
  %2979 = vmatpush1.msra.mxu0 0.0
  %2980 = vmatprep.subr.mxu0 0.0
  %2981 = vmatpush1.msra.mxu0 0.0
  %2982 = vmatprep.subr.mxu0 0.0
  %2983 = vmatpush1.msra.mxu0 0.0
  %2984 = vmatprep.subr.mxu0 0.0
  %2985 = vmatpush1.msra.mxu0 0.0
  %2986 = vmatprep.subr.mxu0 0.0
  %2987 = vmatpush1.msra.mxu0 0.0
  %2988 = vmatprep.subr.mxu0 0.0
  %2989 = vmatpush1.msra.mxu0 0.0
  %2990 = vmatprep.subr.mxu0 0.0
  %2991 = vmatpush1.msra.mxu0 0.0
  %2992 = vmatprep.subr.mxu0 0.0
  %2993 = vmatpush1.msra.mxu0 0.0
  %2994 = vmatprep.subr.mxu0 0.0
  %2995 = vmatpush1.msra.mxu0 0.0
  %2996 = vmatprep.subr.mxu0 0.0
  %2997 = vmatpush1.msra.mxu0 0.0
  %2998 = vmatprep.subr.mxu0 0.0
  %2999 = vmatpush1.msra.mxu0 0.0
  %3000 = vmatprep.subr.mxu0 0.0
  %3001 = vmatpush1.msra.mxu0 0.0
  %3002 = vmatprep.subr.mxu0 0.0
  %3003 = vmatpush1.msra.mxu0 0.0
  %3004 = vmatprep.subr.mxu0 0.0
  %3005 = vmatpush1.msra.mxu0 0.0
  %3006 = vmatprep.subr.mxu0 0.0
  %3007 = vmatpush1.msra.mxu0 0.0
  %3008 = vmatprep.subr.mxu0 0.0
  %3009 = vmatpush1.msra.mxu0 0.0
  %3010 = vmatprep.subr.mxu0 0.0
  %3011 = vmatpush1.msra.mxu0 0.0
  %3012 = vmatprep.subr.mxu0 0.0
  %3013 = vmatpush1.msra.mxu0 0.0
  %3014 = vmatprep.subr.mxu0 0.0
  %3015 = vmatpush1.msra.mxu0 0.0
  %3016 = vmatprep.subr.mxu0 0.0
  %3017 = vmatpush1.msra.mxu0 0.0
  %3018 = vmatprep.mubr.f32.mxu0 0.0
  %3019 = vmatmul.mubr.f32.gmra.mrb[0].mxu0 %v2952
  %v3020 = vpop.f32.mrb[0].mxu0
  %v3021 = vadd.f32 %v80, %v3020
  %v3022 = vpop.f32.mrb[0].mxu0
  %3023 = vdwg.mxu0
  %3024 = vmax.xlane.f32.xlu0 %v3021
  %v3025 = vpop.xlane.xlu0 %3024
  %v3026 = vsub.f32 %v3021, %v3025
  %v3027 = vmul.f32 %v3026, 1.442695
  %v3028 = vpow.pop %v3027
  %3029 = vadd.xlane.f32.xlu0 %v3028
  %v3030 = vpop.xlane.xlu0 %3029
  %v3031 = vlog2.pop %v3030
  %v3032 = vmul.f32 %v3031, 0.6931472
  %v3033 = vadd.f32 %v3025, %v3032
  %v3034 = vsub.f32 %v3021, %v3033
  %s3035 = scalar_lea.vmem %s12, 40
  %3036 = vst [vmem:[%s3035] sm:$0xff] %v3034
  %s3037 = scalar_lea.vmem %s6, 48
  %v3038 = vld [vmem:[%s3037] sm:$0xff]
  %3039 = vmatprep.subr.mxu0 0.0
  %3040 = vmatpush1.msra.mxu0 %v53
  %3041 = vmatprep.subr.mxu0 0.0
  %3042 = vmatpush1.msra.mxu0 %v54
  %3043 = vmatprep.subr.mxu0 0.0
  %3044 = vmatpush1.msra.mxu0 %v55
  %3045 = vmatprep.subr.mxu0 0.0
  %3046 = vmatpush1.msra.mxu0 %v56
  %3047 = vmatprep.subr.mxu0 0.0
  %3048 = vmatpush1.msra.mxu0 0.0
  %3049 = vmatprep.subr.mxu0 0.0
  %3050 = vmatpush1.msra.mxu0 0.0
  %3051 = vmatprep.subr.mxu0 0.0
  %3052 = vmatpush1.msra.mxu0 0.0
  %3053 = vmatprep.subr.mxu0 0.0
  %3054 = vmatpush1.msra.mxu0 0.0
  %3055 = vmatprep.subr.mxu0 0.0
  %3056 = vmatpush1.msra.mxu0 0.0
  %3057 = vmatprep.subr.mxu0 0.0
  %3058 = vmatpush1.msra.mxu0 0.0
  %3059 = vmatprep.subr.mxu0 0.0
  %3060 = vmatpush1.msra.mxu0 0.0
  %3061 = vmatprep.subr.mxu0 0.0
  %3062 = vmatpush1.msra.mxu0 0.0
  %3063 = vmatprep.subr.mxu0 0.0
  %3064 = vmatpush1.msra.mxu0 0.0
  %3065 = vmatprep.subr.mxu0 0.0
  %3066 = vmatpush1.msra.mxu0 0.0
  %3067 = vmatprep.subr.mxu0 0.0
  %3068 = vmatpush1.msra.mxu0 0.0
  %3069 = vmatprep.subr.mxu0 0.0
  %3070 = vmatpush1.msra.mxu0 0.0
  %3071 = vmatprep.subr.mxu0 0.0
  %3072 = vmatpush1.msra.mxu0 0.0
  %3073 = vmatprep.subr.mxu0 0.0
  %3074 = vmatpush1.msra.mxu0 0.0
  %3075 = vmatprep.subr.mxu0 0.0
  %3076 = vmatpush1.msra.mxu0 0.0
  %3077 = vmatprep.subr.mxu0 0.0
  %3078 = vmatpush1.msra.mxu0 0.0
  %3079 = vmatprep.subr.mxu0 0.0
  %3080 = vmatpush1.msra.mxu0 0.0
  %3081 = vmatprep.subr.mxu0 0.0
  %3082 = vmatpush1.msra.mxu0 0.0
  %3083 = vmatprep.subr.mxu0 0.0
  %3084 = vmatpush1.msra.mxu0 0.0
  %3085 = vmatprep.subr.mxu0 0.0
  %3086 = vmatpush1.msra.mxu0 0.0
  %3087 = vmatprep.subr.mxu0 0.0
  %3088 = vmatpush1.msra.mxu0 0.0
  %3089 = vmatprep.subr.mxu0 0.0
  %3090 = vmatpush1.msra.mxu0 0.0
  %3091 = vmatprep.subr.mxu0 0.0
  %3092 = vmatpush1.msra.mxu0 0.0
  %3093 = vmatprep.subr.mxu0 0.0
  %3094 = vmatpush1.msra.mxu0 0.0
  %3095 = vmatprep.subr.mxu0 0.0
  %3096 = vmatpush1.msra.mxu0 0.0
  %3097 = vmatprep.subr.mxu0 0.0
  %3098 = vmatpush1.msra.mxu0 0.0
  %3099 = vmatprep.subr.mxu0 0.0
  %3100 = vmatpush1.msra.mxu0 0.0
  %3101 = vmatprep.subr.mxu0 0.0
  %3102 = vmatpush1.msra.mxu0 0.0
  %3103 = vmatprep.mubr.f32.mxu0 0.0
  %3104 = vmatmul.mubr.f32.gmra.mrb[0].mxu0 %v2952
  %v3105 = vpop.f32.mrb[0].mxu0
  %v3106 = vadd.f32 0.0, %v3105
  %v3107 = vpop.f32.mrb[0].mxu0
  %3108 = vdwg.mxu0
  %v3110 = vsel %vm85, %v3038, 0
  %3112 = vmatprep.subr.mxu0 0.0
  %3113 = vmatpush1.msra.mxu0 %v45
  %3114 = vmatprep.subr.mxu0 0.0
  %3115 = vmatpush1.msra.mxu0 %v46
  %3116 = vmatprep.subr.mxu0 0.0
  %3117 = vmatpush1.msra.mxu0 %v47
  %3118 = vmatprep.subr.mxu0 0.0
  %3119 = vmatpush1.msra.mxu0 %v48
  %3120 = vmatprep.subr.mxu0 0.0
  %3121 = vmatpush1.msra.mxu0 0.0
  %3122 = vmatprep.subr.mxu0 0.0
  %3123 = vmatpush1.msra.mxu0 0.0
  %3124 = vmatprep.subr.mxu0 0.0
  %3125 = vmatpush1.msra.mxu0 0.0
  %3126 = vmatprep.subr.mxu0 0.0
  %3127 = vmatpush1.msra.mxu0 0.0
  %3128 = vmatprep.subr.mxu0 0.0
  %3129 = vmatpush1.msra.mxu0 0.0
  %3130 = vmatprep.subr.mxu0 0.0
  %3131 = vmatpush1.msra.mxu0 0.0
  %3132 = vmatprep.subr.mxu0 0.0
  %3133 = vmatpush1.msra.mxu0 0.0
  %3134 = vmatprep.subr.mxu0 0.0
  %3135 = vmatpush1.msra.mxu0 0.0
  %3136 = vmatprep.subr.mxu0 0.0
  %3137 = vmatpush1.msra.mxu0 0.0
  %3138 = vmatprep.subr.mxu0 0.0
  %3139 = vmatpush1.msra.mxu0 0.0
  %3140 = vmatprep.subr.mxu0 0.0
  %3141 = vmatpush1.msra.mxu0 0.0
  %3142 = vmatprep.subr.mxu0 0.0
  %3143 = vmatpush1.msra.mxu0 0.0
  %3144 = vmatprep.subr.mxu0 0.0
  %3145 = vmatpush1.msra.mxu0 0.0
  %3146 = vmatprep.subr.mxu0 0.0
  %3147 = vmatpush1.msra.mxu0 0.0
  %3148 = vmatprep.subr.mxu0 0.0
  %3149 = vmatpush1.msra.mxu0 0.0
  %3150 = vmatprep.subr.mxu0 0.0
  %3151 = vmatpush1.msra.mxu0 0.0
  %3152 = vmatprep.subr.mxu0 0.0
  %3153 = vmatpush1.msra.mxu0 0.0
  %3154 = vmatprep.subr.mxu0 0.0
  %3155 = vmatpush1.msra.mxu0 0.0
  %3156 = vmatprep.subr.mxu0 0.0
  %3157 = vmatpush1.msra.mxu0 0.0
  %3158 = vmatprep.subr.mxu0 0.0
  %3159 = vmatpush1.msra.mxu0 0.0
  %3160 = vmatprep.subr.mxu0 0.0
  %3161 = vmatpush1.msra.mxu0 0.0
  %3162 = vmatprep.subr.mxu0 0.0
  %3163 = vmatpush1.msra.mxu0 0.0
  %3164 = vmatprep.subr.mxu0 0.0
  %3165 = vmatpush1.msra.mxu0 0.0
  %3166 = vmatprep.subr.mxu0 0.0
  %3167 = vmatpush1.msra.mxu0 0.0
  %3168 = vmatprep.subr.mxu0 0.0
  %3169 = vmatpush1.msra.mxu0 0.0
  %3170 = vmatprep.subr.mxu0 0.0
  %3171 = vmatpush1.msra.mxu0 0.0
  %3172 = vmatprep.subr.mxu0 0.0
  %3173 = vmatpush1.msra.mxu0 0.0
  %3174 = vmatprep.subr.mxu0 0.0
  %3175 = vmatpush1.msra.mxu0 0.0
  %3176 = vmatprep.mubr.f32.mxu0 0.0
  %3177 = vmatmul.mubr.f32.gmra.mrb[0].mxu0 %v3110
  %v3178 = vpop.f32.mrb[0].mxu0
  %v3179 = vadd.f32 %v3106, %v3178
  %v3180 = vpop.f32.mrb[0].mxu0
  %3181 = vdwg.mxu0
  %v3182 = vadd.f32 %v3179, %v73
  %v3183 = vxor.u32 %v3182, 2147483648
  %v3184 = vmul.f32 %v3183, 1.442695
  %v3185 = vpow.pop %v3184
  %v3186 = vadd.f32 %v3185, 1.0
  %v3187 = vrcp.pop %v3186
  %v3188 = vmul.f32 1.0, %v3187
  %v3189 = vtanh.pop %v3182
  %v3190 = vmul.f32 %v3188, %v2942
  %3192 = vrot.lane.b32.xlu0 %v3189, 64
  %v3193 = vpop.permute.xlu0 %3192
  %v3195 = vmul.f32 %v3188, %v3193
  %3197 = vrot.lane.b32.xlu0 %v3195, 32
  %v3198 = vpop.permute.xlu0 %3197
  %v3200 = vadd.f32 %v3190, %v3198
  %v3201 = vtanh.pop %v3200
  %3203 = vrot.lane.b32.xlu0 %v3201, 64
  %v3204 = vpop.permute.xlu0 %3203
  %v3206 = vmul.f32 %v3188, %v3204
  %3208 = vrot.lane.b32.xlu0 %v3206, 32
  %v3209 = vpop.permute.xlu0 %3208
  %v3210 = vsel %vm85, %v3209, 0
  %3212 = vmatprep.subr.mxu0 0.0
  %3213 = vmatpush1.msra.mxu0 %v57
  %3214 = vmatprep.subr.mxu0 0.0
  %3215 = vmatpush1.msra.mxu0 %v58
  %3216 = vmatprep.subr.mxu0 0.0
  %3217 = vmatpush1.msra.mxu0 %v59
  %3218 = vmatprep.subr.mxu0 0.0
  %3219 = vmatpush1.msra.mxu0 %v60
  %3220 = vmatprep.subr.mxu0 0.0
  %3221 = vmatpush1.msra.mxu0 0.0
  %3222 = vmatprep.subr.mxu0 0.0
  %3223 = vmatpush1.msra.mxu0 0.0
  %3224 = vmatprep.subr.mxu0 0.0
  %3225 = vmatpush1.msra.mxu0 0.0
  %3226 = vmatprep.subr.mxu0 0.0
  %3227 = vmatpush1.msra.mxu0 0.0
  %3228 = vmatprep.subr.mxu0 0.0
  %3229 = vmatpush1.msra.mxu0 0.0
  %3230 = vmatprep.subr.mxu0 0.0
  %3231 = vmatpush1.msra.mxu0 0.0
  %3232 = vmatprep.subr.mxu0 0.0
  %3233 = vmatpush1.msra.mxu0 0.0
  %3234 = vmatprep.subr.mxu0 0.0
  %3235 = vmatpush1.msra.mxu0 0.0
  %3236 = vmatprep.subr.mxu0 0.0
  %3237 = vmatpush1.msra.mxu0 0.0
  %3238 = vmatprep.subr.mxu0 0.0
  %3239 = vmatpush1.msra.mxu0 0.0
  %3240 = vmatprep.subr.mxu0 0.0
  %3241 = vmatpush1.msra.mxu0 0.0
  %3242 = vmatprep.subr.mxu0 0.0
  %3243 = vmatpush1.msra.mxu0 0.0
  %3244 = vmatprep.subr.mxu0 0.0
  %3245 = vmatpush1.msra.mxu0 0.0
  %3246 = vmatprep.subr.mxu0 0.0
  %3247 = vmatpush1.msra.mxu0 0.0
  %3248 = vmatprep.subr.mxu0 0.0
  %3249 = vmatpush1.msra.mxu0 0.0
  %3250 = vmatprep.subr.mxu0 0.0
  %3251 = vmatpush1.msra.mxu0 0.0
  %3252 = vmatprep.subr.mxu0 0.0
  %3253 = vmatpush1.msra.mxu0 0.0
  %3254 = vmatprep.subr.mxu0 0.0
  %3255 = vmatpush1.msra.mxu0 0.0
  %3256 = vmatprep.subr.mxu0 0.0
  %3257 = vmatpush1.msra.mxu0 0.0
  %3258 = vmatprep.subr.mxu0 0.0
  %3259 = vmatpush1.msra.mxu0 0.0
  %3260 = vmatprep.subr.mxu0 0.0
  %3261 = vmatpush1.msra.mxu0 0.0
  %3262 = vmatprep.subr.mxu0 0.0
  %3263 = vmatpush1.msra.mxu0 0.0
  %3264 = vmatprep.subr.mxu0 0.0
  %3265 = vmatpush1.msra.mxu0 0.0
  %3266 = vmatprep.subr.mxu0 0.0
  %3267 = vmatpush1.msra.mxu0 0.0
  %3268 = vmatprep.subr.mxu0 0.0
  %3269 = vmatpush1.msra.mxu0 0.0
  %3270 = vmatprep.subr.mxu0 0.0
  %3271 = vmatpush1.msra.mxu0 0.0
  %3272 = vmatprep.subr.mxu0 0.0
  %3273 = vmatpush1.msra.mxu0 0.0
  %3274 = vmatprep.subr.mxu0 0.0
  %3275 = vmatpush1.msra.mxu0 0.0
  %3276 = vmatprep.mubr.f32.mxu0 0.0
  %3277 = vmatmul.mubr.f32.gmra.mrb[0].mxu0 %v3210
  %v3278 = vpop.f32.mrb[0].mxu0
  %v3279 = vadd.f32 %v80, %v3278
  %v3280 = vpop.f32.mrb[0].mxu0
  %3281 = vdwg.mxu0
  %3282 = vmax.xlane.f32.xlu0 %v3279
  %v3283 = vpop.xlane.xlu0 %3282
  %v3284 = vsub.f32 %v3279, %v3283
  %v3285 = vmul.f32 %v3284, 1.442695
  %v3286 = vpow.pop %v3285
  %3287 = vadd.xlane.f32.xlu0 %v3286
  %v3288 = vpop.xlane.xlu0 %3287
  %v3289 = vlog2.pop %v3288
  %v3290 = vmul.f32 %v3289, 0.6931472
  %v3291 = vadd.f32 %v3283, %v3290
  %v3292 = vsub.f32 %v3279, %v3291
  %s3293 = scalar_lea.vmem %s12, 48
  %3294 = vst [vmem:[%s3293] sm:$0xff] %v3292
  %s3295 = scalar_lea.vmem %s6, 56
  %v3296 = vld [vmem:[%s3295] sm:$0xff]
  %3297 = vmatprep.subr.mxu0 0.0
  %3298 = vmatpush1.msra.mxu0 %v53
  %3299 = vmatprep.subr.mxu0 0.0
  %3300 = vmatpush1.msra.mxu0 %v54
  %3301 = vmatprep.subr.mxu0 0.0
  %3302 = vmatpush1.msra.mxu0 %v55
  %3303 = vmatprep.subr.mxu0 0.0
  %3304 = vmatpush1.msra.mxu0 %v56
  %3305 = vmatprep.subr.mxu0 0.0
  %3306 = vmatpush1.msra.mxu0 0.0
  %3307 = vmatprep.subr.mxu0 0.0
  %3308 = vmatpush1.msra.mxu0 0.0
  %3309 = vmatprep.subr.mxu0 0.0
  %3310 = vmatpush1.msra.mxu0 0.0
  %3311 = vmatprep.subr.mxu0 0.0
  %3312 = vmatpush1.msra.mxu0 0.0
  %3313 = vmatprep.subr.mxu0 0.0
  %3314 = vmatpush1.msra.mxu0 0.0
  %3315 = vmatprep.subr.mxu0 0.0
  %3316 = vmatpush1.msra.mxu0 0.0
  %3317 = vmatprep.subr.mxu0 0.0
  %3318 = vmatpush1.msra.mxu0 0.0
  %3319 = vmatprep.subr.mxu0 0.0
  %3320 = vmatpush1.msra.mxu0 0.0
  %3321 = vmatprep.subr.mxu0 0.0
  %3322 = vmatpush1.msra.mxu0 0.0
  %3323 = vmatprep.subr.mxu0 0.0
  %3324 = vmatpush1.msra.mxu0 0.0
  %3325 = vmatprep.subr.mxu0 0.0
  %3326 = vmatpush1.msra.mxu0 0.0
  %3327 = vmatprep.subr.mxu0 0.0
  %3328 = vmatpush1.msra.mxu0 0.0
  %3329 = vmatprep.subr.mxu0 0.0
  %3330 = vmatpush1.msra.mxu0 0.0
  %3331 = vmatprep.subr.mxu0 0.0
  %3332 = vmatpush1.msra.mxu0 0.0
  %3333 = vmatprep.subr.mxu0 0.0
  %3334 = vmatpush1.msra.mxu0 0.0
  %3335 = vmatprep.subr.mxu0 0.0
  %3336 = vmatpush1.msra.mxu0 0.0
  %3337 = vmatprep.subr.mxu0 0.0
  %3338 = vmatpush1.msra.mxu0 0.0
  %3339 = vmatprep.subr.mxu0 0.0
  %3340 = vmatpush1.msra.mxu0 0.0
  %3341 = vmatprep.subr.mxu0 0.0
  %3342 = vmatpush1.msra.mxu0 0.0
  %3343 = vmatprep.subr.mxu0 0.0
  %3344 = vmatpush1.msra.mxu0 0.0
  %3345 = vmatprep.subr.mxu0 0.0
  %3346 = vmatpush1.msra.mxu0 0.0
  %3347 = vmatprep.subr.mxu0 0.0
  %3348 = vmatpush1.msra.mxu0 0.0
  %3349 = vmatprep.subr.mxu0 0.0
  %3350 = vmatpush1.msra.mxu0 0.0
  %3351 = vmatprep.subr.mxu0 0.0
  %3352 = vmatpush1.msra.mxu0 0.0
  %3353 = vmatprep.subr.mxu0 0.0
  %3354 = vmatpush1.msra.mxu0 0.0
  %3355 = vmatprep.subr.mxu0 0.0
  %3356 = vmatpush1.msra.mxu0 0.0
  %3357 = vmatprep.subr.mxu0 0.0
  %3358 = vmatpush1.msra.mxu0 0.0
  %3359 = vmatprep.subr.mxu0 0.0
  %3360 = vmatpush1.msra.mxu0 0.0
  %3361 = vmatprep.mubr.f32.mxu0 0.0
  %3362 = vmatmul.mubr.f32.gmra.mrb[0].mxu0 %v3210
  %v3363 = vpop.f32.mrb[0].mxu0
  %v3364 = vadd.f32 0.0, %v3363
  %v3365 = vpop.f32.mrb[0].mxu0
  %3366 = vdwg.mxu0
  %v3368 = vsel %vm85, %v3296, 0
  %3370 = vmatprep.subr.mxu0 0.0
  %3371 = vmatpush1.msra.mxu0 %v45
  %3372 = vmatprep.subr.mxu0 0.0
  %3373 = vmatpush1.msra.mxu0 %v46
  %3374 = vmatprep.subr.mxu0 0.0
  %3375 = vmatpush1.msra.mxu0 %v47
  %3376 = vmatprep.subr.mxu0 0.0
  %3377 = vmatpush1.msra.mxu0 %v48
  %3378 = vmatprep.subr.mxu0 0.0
  %3379 = vmatpush1.msra.mxu0 0.0
  %3380 = vmatprep.subr.mxu0 0.0
  %3381 = vmatpush1.msra.mxu0 0.0
  %3382 = vmatprep.subr.mxu0 0.0
  %3383 = vmatpush1.msra.mxu0 0.0
  %3384 = vmatprep.subr.mxu0 0.0
  %3385 = vmatpush1.msra.mxu0 0.0
  %3386 = vmatprep.subr.mxu0 0.0
  %3387 = vmatpush1.msra.mxu0 0.0
  %3388 = vmatprep.subr.mxu0 0.0
  %3389 = vmatpush1.msra.mxu0 0.0
  %3390 = vmatprep.subr.mxu0 0.0
  %3391 = vmatpush1.msra.mxu0 0.0
  %3392 = vmatprep.subr.mxu0 0.0
  %3393 = vmatpush1.msra.mxu0 0.0
  %3394 = vmatprep.subr.mxu0 0.0
  %3395 = vmatpush1.msra.mxu0 0.0
  %3396 = vmatprep.subr.mxu0 0.0
  %3397 = vmatpush1.msra.mxu0 0.0
  %3398 = vmatprep.subr.mxu0 0.0
  %3399 = vmatpush1.msra.mxu0 0.0
  %3400 = vmatprep.subr.mxu0 0.0
  %3401 = vmatpush1.msra.mxu0 0.0
  %3402 = vmatprep.subr.mxu0 0.0
  %3403 = vmatpush1.msra.mxu0 0.0
  %3404 = vmatprep.subr.mxu0 0.0
  %3405 = vmatpush1.msra.mxu0 0.0
  %3406 = vmatprep.subr.mxu0 0.0
  %3407 = vmatpush1.msra.mxu0 0.0
  %3408 = vmatprep.subr.mxu0 0.0
  %3409 = vmatpush1.msra.mxu0 0.0
  %3410 = vmatprep.subr.mxu0 0.0
  %3411 = vmatpush1.msra.mxu0 0.0
  %3412 = vmatprep.subr.mxu0 0.0
  %3413 = vmatpush1.msra.mxu0 0.0
  %3414 = vmatprep.subr.mxu0 0.0
  %3415 = vmatpush1.msra.mxu0 0.0
  %3416 = vmatprep.subr.mxu0 0.0
  %3417 = vmatpush1.msra.mxu0 0.0
  %3418 = vmatprep.subr.mxu0 0.0
  %3419 = vmatpush1.msra.mxu0 0.0
  %3420 = vmatprep.subr.mxu0 0.0
  %3421 = vmatpush1.msra.mxu0 0.0
  %3422 = vmatprep.subr.mxu0 0.0
  %3423 = vmatpush1.msra.mxu0 0.0
  %3424 = vmatprep.subr.mxu0 0.0
  %3425 = vmatpush1.msra.mxu0 0.0
  %3426 = vmatprep.subr.mxu0 0.0
  %3427 = vmatpush1.msra.mxu0 0.0
  %3428 = vmatprep.subr.mxu0 0.0
  %3429 = vmatpush1.msra.mxu0 0.0
  %3430 = vmatprep.subr.mxu0 0.0
  %3431 = vmatpush1.msra.mxu0 0.0
  %3432 = vmatprep.subr.mxu0 0.0
  %3433 = vmatpush1.msra.mxu0 0.0
  %3434 = vmatprep.mubr.f32.mxu0 0.0
  %3435 = vmatmul.mubr.f32.gmra.mrb[0].mxu0 %v3368
  %v3436 = vpop.f32.mrb[0].mxu0
  %v3437 = vadd.f32 %v3364, %v3436
  %v3438 = vpop.f32.mrb[0].mxu0
  %3439 = vdwg.mxu0
  %v3440 = vadd.f32 %v3437, %v73
  %v3441 = vxor.u32 %v3440, 2147483648
  %v3442 = vmul.f32 %v3441, 1.442695
  %v3443 = vpow.pop %v3442
  %v3444 = vadd.f32 %v3443, 1.0
  %v3445 = vrcp.pop %v3444
  %v3446 = vmul.f32 1.0, %v3445
  %v3447 = vtanh.pop %v3440
  %v3448 = vmul.f32 %v3446, %v3200
  %3450 = vrot.lane.b32.xlu0 %v3447, 64
  %v3451 = vpop.permute.xlu0 %3450
  %v3453 = vmul.f32 %v3446, %v3451
  %3455 = vrot.lane.b32.xlu0 %v3453, 32
  %v3456 = vpop.permute.xlu0 %3455
  %v3458 = vadd.f32 %v3448, %v3456
  %v3459 = vtanh.pop %v3458
  %3461 = vrot.lane.b32.xlu0 %v3459, 64
  %v3462 = vpop.permute.xlu0 %3461
  %v3464 = vmul.f32 %v3446, %v3462
  %3466 = vrot.lane.b32.xlu0 %v3464, 32
  %v3467 = vpop.permute.xlu0 %3466
  %v3468 = vsel %vm85, %v3467, 0
  %3470 = vmatprep.subr.mxu0 0.0
  %3471 = vmatpush1.msra.mxu0 %v57
  %3472 = vmatprep.subr.mxu0 0.0
  %3473 = vmatpush1.msra.mxu0 %v58
  %3474 = vmatprep.subr.mxu0 0.0
  %3475 = vmatpush1.msra.mxu0 %v59
  %3476 = vmatprep.subr.mxu0 0.0
  %3477 = vmatpush1.msra.mxu0 %v60
  %3478 = vmatprep.subr.mxu0 0.0
  %3479 = vmatpush1.msra.mxu0 0.0
  %3480 = vmatprep.subr.mxu0 0.0
  %3481 = vmatpush1.msra.mxu0 0.0
  %3482 = vmatprep.subr.mxu0 0.0
  %3483 = vmatpush1.msra.mxu0 0.0
  %3484 = vmatprep.subr.mxu0 0.0
  %3485 = vmatpush1.msra.mxu0 0.0
  %3486 = vmatprep.subr.mxu0 0.0
  %3487 = vmatpush1.msra.mxu0 0.0
  %3488 = vmatprep.subr.mxu0 0.0
  %3489 = vmatpush1.msra.mxu0 0.0
  %3490 = vmatprep.subr.mxu0 0.0
  %3491 = vmatpush1.msra.mxu0 0.0
  %3492 = vmatprep.subr.mxu0 0.0
  %3493 = vmatpush1.msra.mxu0 0.0
  %3494 = vmatprep.subr.mxu0 0.0
  %3495 = vmatpush1.msra.mxu0 0.0
  %3496 = vmatprep.subr.mxu0 0.0
  %3497 = vmatpush1.msra.mxu0 0.0
  %3498 = vmatprep.subr.mxu0 0.0
  %3499 = vmatpush1.msra.mxu0 0.0
  %3500 = vmatprep.subr.mxu0 0.0
  %3501 = vmatpush1.msra.mxu0 0.0
  %3502 = vmatprep.subr.mxu0 0.0
  %3503 = vmatpush1.msra.mxu0 0.0
  %3504 = vmatprep.subr.mxu0 0.0
  %3505 = vmatpush1.msra.mxu0 0.0
  %3506 = vmatprep.subr.mxu0 0.0
  %3507 = vmatpush1.msra.mxu0 0.0
  %3508 = vmatprep.subr.mxu0 0.0
  %3509 = vmatpush1.msra.mxu0 0.0
  %3510 = vmatprep.subr.mxu0 0.0
  %3511 = vmatpush1.msra.mxu0 0.0
  %3512 = vmatprep.subr.mxu0 0.0
  %3513 = vmatpush1.msra.mxu0 0.0
  %3514 = vmatprep.subr.mxu0 0.0
  %3515 = vmatpush1.msra.mxu0 0.0
  %3516 = vmatprep.subr.mxu0 0.0
  %3517 = vmatpush1.msra.mxu0 0.0
  %3518 = vmatprep.subr.mxu0 0.0
  %3519 = vmatpush1.msra.mxu0 0.0
  %3520 = vmatprep.subr.mxu0 0.0
  %3521 = vmatpush1.msra.mxu0 0.0
  %3522 = vmatprep.subr.mxu0 0.0
  %3523 = vmatpush1.msra.mxu0 0.0
  %3524 = vmatprep.subr.mxu0 0.0
  %3525 = vmatpush1.msra.mxu0 0.0
  %3526 = vmatprep.subr.mxu0 0.0
  %3527 = vmatpush1.msra.mxu0 0.0
  %3528 = vmatprep.subr.mxu0 0.0
  %3529 = vmatpush1.msra.mxu0 0.0
  %3530 = vmatprep.subr.mxu0 0.0
  %3531 = vmatpush1.msra.mxu0 0.0
  %3532 = vmatprep.subr.mxu0 0.0
  %3533 = vmatpush1.msra.mxu0 0.0
  %3534 = vmatprep.mubr.f32.mxu0 0.0
  %3535 = vmatmul.mubr.f32.gmra.mrb[0].mxu0 %v3468
  %v3536 = vpop.f32.mrb[0].mxu0
  %v3537 = vadd.f32 %v80, %v3536
  %v3538 = vpop.f32.mrb[0].mxu0
  %3539 = vdwg.mxu0
  %3540 = vmax.xlane.f32.xlu0 %v3537
  %v3541 = vpop.xlane.xlu0 %3540
  %v3542 = vsub.f32 %v3537, %v3541
  %v3543 = vmul.f32 %v3542, 1.442695
  %v3544 = vpow.pop %v3543
  %3545 = vadd.xlane.f32.xlu0 %v3544
  %v3546 = vpop.xlane.xlu0 %3545
  %v3547 = vlog2.pop %v3546
  %v3548 = vmul.f32 %v3547, 0.6931472
  %v3549 = vadd.f32 %v3541, %v3548
  %v3550 = vsub.f32 %v3537, %v3549
  %s3551 = scalar_lea.vmem %s12, 56
  %3552 = vst [vmem:[%s3551] sm:$0xff] %v3550
  // Predicated region
  $region50: #{pitg_forward_train.1} parent=0 // pred_check
    _
  $region51: #{pitg_forward_train.1} parent=0 // pred_check_branch
    %3554 = sbr.rel (0) target = $region53
  $region52: #{pitg_forward_train.1} parent=0 // pred_region
    _
  $region53: #{pitg_forward_train.1} parent=0 // pred_fallthru
    _
  // Predicated region
  $region54: #{pitg_forward_train.1} parent=0 // pred_check
    _
  $region55: #{pitg_forward_train.1} parent=0 // pred_check_branch
    %3556 = sbr.rel (0) target = $region57
  $region56: #{pitg_forward_train.1} parent=0 // pred_region
    _
  $region57: #{pitg_forward_train.1} parent=0 // pred_fallthru
    _

</llo_original>
